<compile_context>
chip_gen: v5e
topology: v5e:2x2
jax: 0.10.0
libtpu: 0.0.40
codegen_flags: <defaults>
</compile_context>

<pallas_src>
import math

import jax
import jax.numpy as jnp
from jax.experimental import pallas as pl
from jax.experimental.pallas import tpu as pltpu


_VMEM_LIMIT = 32 * 1024 * 1024          # fits default scoped VMEM on v5e/v6e/v7x
_PARITIES = ((0, 0), (0, 1), (1, 0), (1, 1))   # (dr, dc) parity of upsampled pixel
_TAPS = ((0, 0), (0, 1), (1, 0), (1, 1))       # (a, b) taps of the folded 2x2 conv


# ------------------------------ Pallas kernels ------------------------------

def _up_conv_kernel(x_ref, w1_ref, b1_ref, wf_ref, b3_ref,
                    z_ref, ssum_ref, ssq_ref, yp_ref):
    """Fused: 1x1 conv (pre-upsample) -> implicit 2x nearest upsample + 3x3
    conv (pad 1) as four folded 2x2 convs -> + bias, plus per-image channel
    sum / sum-of-squares for the BatchNorm batch-statistics reduction.

      x_ref    : (1, H, W, Cin)   one input image (NHWC)
      w1_ref   : (Cin, C)         1x1 conv weight (resident across the grid)
      b1_ref   : (1, C)           1x1 conv bias
      wf_ref   : (16, C, C)       folded 3x3 weights, index = parity*4 + tap
      b3_ref   : (1, C)           3x3 conv bias
      z_ref    : (1, 4*H, W, C)   pre-BN conv output, parity-major rows
      ssum_ref : (1, 1, C)        per-image sum(z) per channel
      ssq_ref  : (1, 1, C)        per-image sum(z*z) per channel
      yp_ref   : VMEM scratch (H+2, W+2, C): zero-padded 1x1-conv output
    """
    H, W, Cin = x_ref.shape[1], x_ref.shape[2], x_ref.shape[3]
    C = w1_ref.shape[1]

    # 1x1 conv commutes with nearest upsampling -> run it at H x W resolution.
    y = jnp.dot(x_ref[0].reshape(H * W, Cin), w1_ref[...],
                preferred_element_type=jnp.float32) + b1_ref[...]

    # Zero-padded copy in VMEM: the border zeros implement the conv padding of
    # the (virtual) upsampled image, which itself is never materialized.
    yp_ref[...] = jnp.zeros(yp_ref.shape, jnp.float32)
    yp_ref[pl.ds(1, H), pl.ds(1, W), :] = y.reshape(H, W, C)

    s = jnp.zeros((1, C), jnp.float32)
    sq = jnp.zeros((1, C), jnp.float32)
    for p, (dr, dc) in enumerate(_PARITIES):
        # out[2h+dr, 2w+dc, :] = b3 + sum_{a,b} yp[h+dr+a, w+dc+b, :] @ wf[p, a*2+b]
        acc = jnp.zeros((H * W, C), jnp.float32)
        for t, (a, b) in enumerate(_TAPS):
            win = yp_ref[pl.ds(dr + a, H), pl.ds(dc + b, W), :]
            acc = acc + jnp.dot(win.reshape(H * W, C), wf_ref[p * 4 + t],
                                preferred_element_type=jnp.float32)
        acc = acc + b3_ref[...]
        z_ref[0, pl.ds(p * H, H), :, :] = acc.reshape(H, W, C)
        s = s + jnp.sum(acc, axis=0, keepdims=True)
        sq = sq + jnp.sum(acc * acc, axis=0, keepdims=True)

    ssum_ref[...] = s.reshape(1, 1, C)
    ssq_ref[...] = sq.reshape(1, 1, C)


def _bn_lrelu_kernel(z_ref, mean_ref, var_ref, gamma_ref, beta_ref, o_ref):
    """BatchNorm (batch statistics) + LeakyReLU(0.1) on a lane-dense row tile."""
    scale = gamma_ref[...] * jax.lax.rsqrt(var_ref[...] + 1e-5)    # EUP rsqrt
    shift = beta_ref[...] - mean_ref[...] * scale
    t = z_ref[...] * scale + shift
    o_ref[...] = jnp.maximum(t, 0.1 * t)                           # LeakyReLU(0.1)


# ------------------------------ wrapper (glue) -------------------------------

def _fold_upsample_into_3x3(w3):
    """Fold nearest-2x upsample + 3x3/pad-1 conv into four 2x2 convs on the
    small map (one per output parity).  w3: (Cout, Cin, 3, 3), PyTorch OIHW.
    Returns (16, Cin, Cout) with index = (dr*2 + dc)*4 + (a*2 + b)."""
    w = jnp.transpose(w3, (2, 3, 1, 0))            # (kh, kw, Cin, Cout)
    sel = (((0,), (1, 2)), ((0, 1), (2,)))         # which 3x3 taps hit each 2x2 tap
    taps = []
    for dr in (0, 1):
        for dc in (0, 1):
            for a in (0, 1):
                for b in (0, 1):
                    acc = None
                    for kh in sel[dr][a]:
                        for kw in sel[dc][b]:
                            acc = w[kh, kw] if acc is None else acc + w[kh, kw]
                    taps.append(acc)
    return jnp.stack(taps)                          # (16, Cin, Cout)


def _row_tile(rows, target=1024):
    """Largest multiple-of-8 divisor of `rows` that is <= target (else rows)."""
    best = rows
    t = 8
    while t <= min(rows, target):
        if rows % t == 0:
            best = t
        t += 8
    return best


def up_forward(x_nchw, params):
    w1, b1, w3, b3, gamma, beta = (params[k] for k in
                                   ("w1", "b1", "w3", "b3", "gamma", "beta"))
    N, Cin, H, W = x_nchw.shape
    C = w1.shape[0]
    H2, W2 = 2 * H, 2 * W

    # glue: NCHW -> NHWC (layout only; no upsample materialization anywhere)
    x = jnp.transpose(x_nchw, (0, 2, 3, 1))
    wf = _fold_upsample_into_3x3(w3)               # tiny weight folding

    # --- kernel 1: fused 1x1 conv + implicit upsample + 3x3 conv, BN pass 1 ---
    z, ssum, ssq = pl.pallas_call(
        _up_conv_kernel,
        out_shape=(
            jax.ShapeDtypeStruct((N, 4 * H, W, C), jnp.float32),   # parity-major
            jax.ShapeDtypeStruct((N, 1, C), jnp.float32),
            jax.ShapeDtypeStruct((N, 1, C), jnp.float32),
        ),
        grid_spec=pltpu.PrefetchScalarGridSpec(
            num_scalar_prefetch=0,
            grid=(N,),
            in_specs=[
                pl.BlockSpec((1, H, W, Cin), lambda n: (n, 0, 0, 0)),
                pl.BlockSpec((Cin, C), lambda n: (0, 0)),        # resident weights
                pl.BlockSpec((1, C), lambda n: (0, 0)),
                pl.BlockSpec((16, C, C), lambda n: (0, 0, 0)),
                pl.BlockSpec((1, C), lambda n: (0, 0)),
            ],
            out_specs=[
                pl.BlockSpec((1, 4 * H, W, C), lambda n: (n, 0, 0, 0)),
                pl.BlockSpec((1, 1, C), lambda n: (n, 0, 0)),
                pl.BlockSpec((1, 1, C), lambda n: (n, 0, 0)),
            ],
            scratch_shapes=[pltpu.VMEM((H + 2, W + 2, C), jnp.float32)],
        ),
        compiler_params=pltpu.CompilerParams(
            dimension_semantics=("parallel",),       # feeds both TCs on v7x
            vmem_limit_bytes=_VMEM_LIMIT),
    )(x, jnp.transpose(w1), b1.reshape(1, C), wf, b3.reshape(1, C))

    # --- tiny glue: reduce per-image sums -> global biased batch statistics ---
    cnt = jnp.float32(N * H2 * W2)
    mean = jnp.sum(ssum, axis=0) / cnt                              # (1, C)
    var = jnp.maximum(jnp.sum(ssq, axis=0) / cnt - mean * mean, 0.0)

    # --- kernel 2: BN apply + LeakyReLU on a lane-dense (rows, pack*C) view ---
    m_rows = N * 4 * H * W                          # == N * H2 * W2
    pack = 128 // math.gcd(C, 128)                  # pack*C is a multiple of 128
    if m_rows % pack:
        pack = 1                                    # fallback: channel-last lanes
    rows, cols = m_rows // pack, C * pack
    tile_r = _row_tile(rows)
    rep = (1, pack)
    out2 = pl.pallas_call(
        _bn_lrelu_kernel,
        out_shape=jax.ShapeDtypeStruct((rows, cols), jnp.float32),
        grid_spec=pltpu.PrefetchScalarGridSpec(
            num_scalar_prefetch=0,
            grid=(rows // tile_r,),
            in_specs=[
                pl.BlockSpec((tile_r, cols), lambda i: (i, 0)),
                pl.BlockSpec((1, cols), lambda i: (0, 0)),
                pl.BlockSpec((1, cols), lambda i: (0, 0)),
                pl.BlockSpec((1, cols), lambda i: (0, 0)),
                pl.BlockSpec((1, cols), lambda i: (0, 0)),
            ],
            out_specs=pl.BlockSpec((tile_r, cols), lambda i: (i, 0)),
        ),
        compiler_params=pltpu.CompilerParams(
            dimension_semantics=("parallel",),
            vmem_limit_bytes=_VMEM_LIMIT),
    )(z.reshape(rows, cols), jnp.tile(mean, rep), jnp.tile(var, rep),
      jnp.tile(gamma.reshape(1, C), rep), jnp.tile(beta.reshape(1, C), rep))

    # --- glue: parity-major (N,2,2,H,W,C) -> NCHW (pure layout reassembly) ---
    out6 = out2.reshape(N, 2, 2, H, W, C)
    return jnp.transpose(out6, (0, 5, 3, 1, 4, 2)).reshape(N, C, H2, W2)


# ---------------------------- pure-JAX reference -----------------------------

def reference(x_nchw, params):
    w1, b1, w3, b3, gamma, beta = (params[k] for k in
                                   ("w1", "b1", "w3", "b3", "gamma", "beta"))
    x = jnp.transpose(x_nchw, (0, 2, 3, 1))
    x = jnp.repeat(jnp.repeat(x, 2, axis=1), 2, axis=2)
    y = jnp.einsum("nhwc,oc->nhwo", x, w1) + b1
    N, H, W, _ = y.shape
    yp = jnp.pad(y, ((0, 0), (1, 1), (1, 1), (0, 0)))
    z = jnp.zeros((N, H, W, w3.shape[0]), jnp.float32)
    for kh in range(3):
        for kw in range(3):
            z = z + jnp.einsum(
                "nhwc,oc->nhwo", yp[:, kh:kh + H, kw:kw + W, :], w3[:, :, kh, kw]
            )
    z = z + b3
    mean = z.mean((0, 1, 2))
    var = ((z - mean) ** 2).mean((0, 1, 2))
    zn = (z - mean) / jnp.sqrt(var + 1e-5) * gamma + beta
    zn = jnp.where(zn >= 0, zn, 0.1 * zn)
    return jnp.transpose(zn, (0, 3, 1, 2))


# ----------------------------------- main ------------------------------------

if __name__ == "__main__":
    key = jax.random.PRNGKey(0)
    kx, k1, kb1, k3, kb3 = jax.random.split(key, 5)

    N, Cin, Cout, H, W = 2, 4, 8, 16, 16
    x = jax.random.normal(kx, (N, Cin, H, W), dtype=jnp.float32)

    # deterministic synthetic parameters (shapes follow nn.Conv2d / BatchNorm2d)
    params = dict(
        w1=0.2 * jax.random.normal(k1, (Cout, Cin), dtype=jnp.float32),
        b1=0.1 * jax.random.normal(kb1, (Cout,), dtype=jnp.float32),
        w3=0.1 * jax.random.normal(k3, (Cout, Cout, 3, 3), dtype=jnp.float32),
        b3=0.1 * jax.random.normal(kb3, (Cout,), dtype=jnp.float32),
        gamma=jnp.ones((Cout,), jnp.float32),   # BatchNorm2d default weight
        beta=jnp.zeros((Cout,), jnp.float32),   # BatchNorm2d default bias
    )

    out = jax.jit(up_forward)(x, params)
    out = jax.block_until_ready(out)

    ref = reference(x, params)
    assert out.shape == (N, Cout, 2 * H, 2 * W), out.shape
    max_err = float(jnp.max(jnp.abs(out - ref)))
    assert jnp.allclose(out, ref, atol=1e-2, rtol=1e-2), max_err

    print("KERNEL_OK")
</pallas_src>

<mosaic_0001>
module attributes {stable_mosaic.version = 11 : i64} {
  func.func @_up_conv_kernel(%arg0: i32, %arg1: memref<1x16x16x4xf32, #tpu.memory_space<vmem>>, %arg2: memref<4x8xf32, #tpu.memory_space<vmem>>, %arg3: memref<1x8xf32, #tpu.memory_space<vmem>>, %arg4: memref<16x8x8xf32, #tpu.memory_space<vmem>>, %arg5: memref<1x8xf32, #tpu.memory_space<vmem>>, %arg6: memref<1x64x16x8xf32, #tpu.memory_space<vmem>>, %arg7: memref<1x1x8xf32, #tpu.memory_space<vmem>>, %arg8: memref<1x1x8xf32, #tpu.memory_space<vmem>>, %arg9: memref<18x18x8xf32, #tpu.memory_space<vmem>>) attributes {dimension_semantics = [#tpu.dimension_semantics<parallel>], iteration_bounds = array<i64: 2>, scalar_prefetch = 0 : i64, scratch_operands = 1 : i64, tpu.core_type = #tpu.core_type<tc>, window_params = [{transform_indices = @transform_0, window_bounds = array<i64: 1, 16, 16, 4>}, {pipeline_mode = #tpu.pipeline_mode<synchronous>, transform_indices = @transform_1, window_bounds = array<i64: 4, 8>}, {pipeline_mode = #tpu.pipeline_mode<synchronous>, transform_indices = @transform_2, window_bounds = array<i64: 1, 8>}, {pipeline_mode = #tpu.pipeline_mode<synchronous>, transform_indices = @transform_3, window_bounds = array<i64: 16, 8, 8>}, {pipeline_mode = #tpu.pipeline_mode<synchronous>, transform_indices = @transform_4, window_bounds = array<i64: 1, 8>}, {transform_indices = @transform_5, window_bounds = array<i64: 1, 64, 16, 8>}, {transform_indices = @transform_6, window_bounds = array<i64: 1, 1, 8>}, {transform_indices = @transform_7, window_bounds = array<i64: 1, 1, 8>}]} {
    %c0 = arith.constant 0 : index
    %c0_0 = arith.constant 0 : index
    %c0_1 = arith.constant 0 : index
    %c0_2 = arith.constant 0 : index
    %0 = vector.load %arg1[%c0, %c0_0, %c0_1, %c0_2] : memref<1x16x16x4xf32, #tpu.memory_space<vmem>>, vector<1x16x16x4xf32>
    %1 = vector.shape_cast %0 : vector<1x16x16x4xf32> to vector<16x16x4xf32>
    %2 = vector.shape_cast %1 : vector<16x16x4xf32> to vector<256x4xf32>
    %c0_3 = arith.constant 0 : index
    %c0_4 = arith.constant 0 : index
    %3 = vector.load %arg2[%c0_3, %c0_4] : memref<4x8xf32, #tpu.memory_space<vmem>>, vector<4x8xf32>
    %cst = arith.constant dense<0.000000e+00> : vector<256x8xf32>
    %4 = tpu.matmul %2, %3, %cst {dimension_numbers = #tpu.dot_dimension_numbers<[1], [0], [0], [1], [0, 0, 1, 1], [], []>} : vector<256x4xf32>, vector<4x8xf32>, vector<256x8xf32> -> vector<256x8xf32>
    %c0_5 = arith.constant 0 : index
    %c0_6 = arith.constant 0 : index
    %5 = vector.load %arg3[%c0_5, %c0_6] : memref<1x8xf32, #tpu.memory_space<vmem>>, vector<1x8xf32>
    %6 = vector.broadcast %5 : vector<1x8xf32> to vector<256x8xf32>
    %7 = arith.addf %4, %6 : vector<256x8xf32>
    %cst_7 = arith.constant 0.000000e+00 : f32
    %8 = vector.broadcast %cst_7 : f32 to vector<18x18x8xf32>
    %c0_8 = arith.constant 0 : index
    %c0_9 = arith.constant 0 : index
    %c0_10 = arith.constant 0 : index
    %9 = vector.load %arg9[%c0_8, %c0_9, %c0_10] : memref<18x18x8xf32, #tpu.memory_space<vmem>>, vector<18x18x8xf32>
    tpu.vector_store %arg9[%c0_8, %c0_9, %c0_10], %8 {strides = array<i32>} : memref<18x18x8xf32, #tpu.memory_space<vmem>>, vector<18x18x8xf32>,
    %10 = vector.shape_cast %7 : vector<256x8xf32> to vector<16x16x8xf32>
    %c1 = arith.constant 1 : index
    %c1_11 = arith.constant 1 : index
    %c0_12 = arith.constant 0 : index
    %11 = vector.load %arg9[%c1, %c1_11, %c0_12] : memref<18x18x8xf32, #tpu.memory_space<vmem>>, vector<16x16x8xf32>
    tpu.vector_store %arg9[%c1, %c1_11, %c0_12], %10 {strides = array<i32>} : memref<18x18x8xf32, #tpu.memory_space<vmem>>, vector<16x16x8xf32>,
    %cst_13 = arith.constant 0.000000e+00 : f32
    %12 = vector.broadcast %cst_13 : f32 to vector<1x8xf32>
    %cst_14 = arith.constant 0.000000e+00 : f32
    %13 = vector.broadcast %cst_14 : f32 to vector<1x8xf32>
    %cst_15 = arith.constant 0.000000e+00 : f32
    %14 = vector.broadcast %cst_15 : f32 to vector<256x8xf32>
    %c0_16 = arith.constant 0 : index
    %c0_17 = arith.constant 0 : index
    %c0_18 = arith.constant 0 : index
    %15 = vector.load %arg9[%c0_16, %c0_17, %c0_18] : memref<18x18x8xf32, #tpu.memory_space<vmem>>, vector<16x16x8xf32>
    %16 = vector.shape_cast %15 : vector<16x16x8xf32> to vector<256x8xf32>
    %c0_19 = arith.constant 0 : index
    %c0_20 = arith.constant 0 : index
    %c0_21 = arith.constant 0 : index
    %17 = vector.load %arg4[%c0_19, %c0_20, %c0_21] : memref<16x8x8xf32, #tpu.memory_space<vmem>>, vector<1x8x8xf32>
    %18 = vector.shape_cast %17 : vector<1x8x8xf32> to vector<8x8xf32>
    %cst_22 = arith.constant dense<0.000000e+00> : vector<256x8xf32>
    %19 = tpu.matmul %16, %18, %cst_22 {dimension_numbers = #tpu.dot_dimension_numbers<[1], [0], [0], [1], [0, 0, 1, 1], [], []>} : vector<256x8xf32>, vector<8x8xf32>, vector<256x8xf32> -> vector<256x8xf32>
    %20 = arith.addf %14, %19 : vector<256x8xf32>
    %c0_23 = arith.constant 0 : index
    %c1_24 = arith.constant 1 : index
    %c0_25 = arith.constant 0 : index
    %21 = vector.load %arg9[%c0_23, %c1_24, %c0_25] : memref<18x18x8xf32, #tpu.memory_space<vmem>>, vector<16x16x8xf32>
    %22 = vector.shape_cast %21 : vector<16x16x8xf32> to vector<256x8xf32>
    %c1_26 = arith.constant 1 : index
    %c0_27 = arith.constant 0 : index
    %c0_28 = arith.constant 0 : index
    %23 = vector.load %arg4[%c1_26, %c0_27, %c0_28] : memref<16x8x8xf32, #tpu.memory_space<vmem>>, vector<1x8x8xf32>
    %24 = vector.shape_cast %23 : vector<1x8x8xf32> to vector<8x8xf32>
    %cst_29 = arith.constant dense<0.000000e+00> : vector<256x8xf32>
    %25 = tpu.matmul %22, %24, %cst_29 {dimension_numbers = #tpu.dot_dimension_numbers<[1], [0], [0], [1], [0, 0, 1, 1], [], []>} : vector<256x8xf32>, vector<8x8xf32>, vector<256x8xf32> -> vector<256x8xf32>
    %26 = arith.addf %20, %25 : vector<256x8xf32>
    %c1_30 = arith.constant 1 : index
    %c0_31 = arith.constant 0 : index
    %c0_32 = arith.constant 0 : index
    %27 = vector.load %arg9[%c1_30, %c0_31, %c0_32] : memref<18x18x8xf32, #tpu.memory_space<vmem>>, vector<16x16x8xf32>
    %28 = vector.shape_cast %27 : vector<16x16x8xf32> to vector<256x8xf32>
    %c2 = arith.constant 2 : index
    %c0_33 = arith.constant 0 : index
    %c0_34 = arith.constant 0 : index
    %29 = vector.load %arg4[%c2, %c0_33, %c0_34] : memref<16x8x8xf32, #tpu.memory_space<vmem>>, vector<1x8x8xf32>
    %30 = vector.shape_cast %29 : vector<1x8x8xf32> to vector<8x8xf32>
    %cst_35 = arith.constant dense<0.000000e+00> : vector<256x8xf32>
    %31 = tpu.matmul %28, %30, %cst_35 {dimension_numbers = #tpu.dot_dimension_numbers<[1], [0], [0], [1], [0, 0, 1, 1], [], []>} : vector<256x8xf32>, vector<8x8xf32>, vector<256x8xf32> -> vector<256x8xf32>
    %32 = arith.addf %26, %31 : vector<256x8xf32>
    %c1_36 = arith.constant 1 : index
    %c1_37 = arith.constant 1 : index
    %c0_38 = arith.constant 0 : index
    %33 = vector.load %arg9[%c1_36, %c1_37, %c0_38] : memref<18x18x8xf32, #tpu.memory_space<vmem>>, vector<16x16x8xf32>
    %34 = vector.shape_cast %33 : vector<16x16x8xf32> to vector<256x8xf32>
    %c3 = arith.constant 3 : index
    %c0_39 = arith.constant 0 : index
    %c0_40 = arith.constant 0 : index
    %35 = vector.load %arg4[%c3, %c0_39, %c0_40] : memref<16x8x8xf32, #tpu.memory_space<vmem>>, vector<1x8x8xf32>
    %36 = vector.shape_cast %35 : vector<1x8x8xf32> to vector<8x8xf32>
    %cst_41 = arith.constant dense<0.000000e+00> : vector<256x8xf32>
    %37 = tpu.matmul %34, %36, %cst_41 {dimension_numbers = #tpu.dot_dimension_numbers<[1], [0], [0], [1], [0, 0, 1, 1], [], []>} : vector<256x8xf32>, vector<8x8xf32>, vector<256x8xf32> -> vector<256x8xf32>
    %38 = arith.addf %32, %37 : vector<256x8xf32>
    %c0_42 = arith.constant 0 : index
    %c0_43 = arith.constant 0 : index
    %39 = vector.load %arg5[%c0_42, %c0_43] : memref<1x8xf32, #tpu.memory_space<vmem>>, vector<1x8xf32>
    %40 = vector.broadcast %39 : vector<1x8xf32> to vector<256x8xf32>
    %41 = arith.addf %38, %40 : vector<256x8xf32>
    %42 = vector.shape_cast %41 : vector<256x8xf32> to vector<16x16x8xf32>
    %c0_44 = arith.constant 0 : index
    %c0_45 = arith.constant 0 : index
    %c0_46 = arith.constant 0 : index
    %c0_47 = arith.constant 0 : index
    %43 = vector.load %arg6[%c0_44, %c0_45, %c0_46, %c0_47] : memref<1x64x16x8xf32, #tpu.memory_space<vmem>>, vector<1x16x16x8xf32>
    %44 = vector.shape_cast %43 : vector<1x16x16x8xf32> to vector<16x16x8xf32>
    %45 = vector.shape_cast %42 : vector<16x16x8xf32> to vector<1x16x16x8xf32>
    tpu.vector_store %arg6[%c0_44, %c0_45, %c0_46, %c0_47], %45 {strides = array<i32>} : memref<1x64x16x8xf32, #tpu.memory_space<vmem>>, vector<1x16x16x8xf32>,
    %cst_48 = arith.constant dense<0.000000e+00> : vector<8xf32>
    %46 = vector.multi_reduction <add>, %41, %cst_48 [0] : vector<256x8xf32> to vector<8xf32>
    %47 = vector.shape_cast %46 : vector<8xf32> to vector<1x8xf32>
    %48 = arith.addf %12, %47 : vector<1x8xf32>
    %49 = arith.mulf %41, %41 : vector<256x8xf32>
    %cst_49 = arith.constant dense<0.000000e+00> : vector<8xf32>
    %50 = vector.multi_reduction <add>, %49, %cst_49 [0] : vector<256x8xf32> to vector<8xf32>
    %51 = vector.shape_cast %50 : vector<8xf32> to vector<1x8xf32>
    %52 = arith.addf %13, %51 : vector<1x8xf32>
    %cst_50 = arith.constant 0.000000e+00 : f32
    %53 = vector.broadcast %cst_50 : f32 to vector<256x8xf32>
    %c0_51 = arith.constant 0 : index
    %c1_52 = arith.constant 1 : index
    %c0_53 = arith.constant 0 : index
    %54 = vector.load %arg9[%c0_51, %c1_52, %c0_53] : memref<18x18x8xf32, #tpu.memory_space<vmem>>, vector<16x16x8xf32>
    %55 = vector.shape_cast %54 : vector<16x16x8xf32> to vector<256x8xf32>
    %c4 = arith.constant 4 : index
    %c0_54 = arith.constant 0 : index
    %c0_55 = arith.constant 0 : index
    %56 = vector.load %arg4[%c4, %c0_54, %c0_55] : memref<16x8x8xf32, #tpu.memory_space<vmem>>, vector<1x8x8xf32>
    %57 = vector.shape_cast %56 : vector<1x8x8xf32> to vector<8x8xf32>
    %cst_56 = arith.constant dense<0.000000e+00> : vector<256x8xf32>
    %58 = tpu.matmul %55, %57, %cst_56 {dimension_numbers = #tpu.dot_dimension_numbers<[1], [0], [0], [1], [0, 0, 1, 1], [], []>} : vector<256x8xf32>, vector<8x8xf32>, vector<256x8xf32> -> vector<256x8xf32>
    %59 = arith.addf %53, %58 : vector<256x8xf32>
    %c0_57 = arith.constant 0 : index
    %c2_58 = arith.constant 2 : index
    %c0_59 = arith.constant 0 : index
    %60 = vector.load %arg9[%c0_57, %c2_58, %c0_59] : memref<18x18x8xf32, #tpu.memory_space<vmem>>, vector<16x16x8xf32>
    %61 = vector.shape_cast %60 : vector<16x16x8xf32> to vector<256x8xf32>
    %c5 = arith.constant 5 : index
    %c0_60 = arith.constant 0 : index
    %c0_61 = arith.constant 0 : index
    %62 = vector.load %arg4[%c5, %c0_60, %c0_61] : memref<16x8x8xf32, #tpu.memory_space<vmem>>, vector<1x8x8xf32>
    %63 = vector.shape_cast %62 : vector<1x8x8xf32> to vector<8x8xf32>
    %cst_62 = arith.constant dense<0.000000e+00> : vector<256x8xf32>
    %64 = tpu.matmul %61, %63, %cst_62 {dimension_numbers = #tpu.dot_dimension_numbers<[1], [0], [0], [1], [0, 0, 1, 1], [], []>} : vector<256x8xf32>, vector<8x8xf32>, vector<256x8xf32> -> vector<256x8xf32>
    %65 = arith.addf %59, %64 : vector<256x8xf32>
    %c1_63 = arith.constant 1 : index
    %c1_64 = arith.constant 1 : index
    %c0_65 = arith.constant 0 : index
    %66 = vector.load %arg9[%c1_63, %c1_64, %c0_65] : memref<18x18x8xf32, #tpu.memory_space<vmem>>, vector<16x16x8xf32>
    %67 = vector.shape_cast %66 : vector<16x16x8xf32> to vector<256x8xf32>
    %c6 = arith.constant 6 : index
    %c0_66 = arith.constant 0 : index
    %c0_67 = arith.constant 0 : index
    %68 = vector.load %arg4[%c6, %c0_66, %c0_67] : memref<16x8x8xf32, #tpu.memory_space<vmem>>, vector<1x8x8xf32>
    %69 = vector.shape_cast %68 : vector<1x8x8xf32> to vector<8x8xf32>
    %cst_68 = arith.constant dense<0.000000e+00> : vector<256x8xf32>
    %70 = tpu.matmul %67, %69, %cst_68 {dimension_numbers = #tpu.dot_dimension_numbers<[1], [0], [0], [1], [0, 0, 1, 1], [], []>} : vector<256x8xf32>, vector<8x8xf32>, vector<256x8xf32> -> vector<256x8xf32>
    %71 = arith.addf %65, %70 : vector<256x8xf32>
    %c1_69 = arith.constant 1 : index
    %c2_70 = arith.constant 2 : index
    %c0_71 = arith.constant 0 : index
    %72 = vector.load %arg9[%c1_69, %c2_70, %c0_71] : memref<18x18x8xf32, #tpu.memory_space<vmem>>, vector<16x16x8xf32>
    %73 = vector.shape_cast %72 : vector<16x16x8xf32> to vector<256x8xf32>
    %c7 = arith.constant 7 : index
    %c0_72 = arith.constant 0 : index
    %c0_73 = arith.constant 0 : index
    %74 = vector.load %arg4[%c7, %c0_72, %c0_73] : memref<16x8x8xf32, #tpu.memory_space<vmem>>, vector<1x8x8xf32>
    %75 = vector.shape_cast %74 : vector<1x8x8xf32> to vector<8x8xf32>
    %cst_74 = arith.constant dense<0.000000e+00> : vector<256x8xf32>
    %76 = tpu.matmul %73, %75, %cst_74 {dimension_numbers = #tpu.dot_dimension_numbers<[1], [0], [0], [1], [0, 0, 1, 1], [], []>} : vector<256x8xf32>, vector<8x8xf32>, vector<256x8xf32> -> vector<256x8xf32>
    %77 = arith.addf %71, %76 : vector<256x8xf32>
    %c0_75 = arith.constant 0 : index
    %c0_76 = arith.constant 0 : index
    %78 = vector.load %arg5[%c0_75, %c0_76] : memref<1x8xf32, #tpu.memory_space<vmem>>, vector<1x8xf32>
    %79 = vector.broadcast %78 : vector<1x8xf32> to vector<256x8xf32>
    %80 = arith.addf %77, %79 : vector<256x8xf32>
    %81 = vector.shape_cast %80 : vector<256x8xf32> to vector<16x16x8xf32>
    %c0_77 = arith.constant 0 : index
    %c16 = arith.constant 16 : index
    %c0_78 = arith.constant 0 : index
    %c0_79 = arith.constant 0 : index
    %82 = vector.load %arg6[%c0_77, %c16, %c0_78, %c0_79] : memref<1x64x16x8xf32, #tpu.memory_space<vmem>>, vector<1x16x16x8xf32>
    %83 = vector.shape_cast %82 : vector<1x16x16x8xf32> to vector<16x16x8xf32>
    %84 = vector.shape_cast %81 : vector<16x16x8xf32> to vector<1x16x16x8xf32>
    tpu.vector_store %arg6[%c0_77, %c16, %c0_78, %c0_79], %84 {strides = array<i32>} : memref<1x64x16x8xf32, #tpu.memory_space<vmem>>, vector<1x16x16x8xf32>,
    %cst_80 = arith.constant dense<0.000000e+00> : vector<8xf32>
    %85 = vector.multi_reduction <add>, %80, %cst_80 [0] : vector<256x8xf32> to vector<8xf32>
    %86 = vector.shape_cast %85 : vector<8xf32> to vector<1x8xf32>
    %87 = arith.addf %48, %86 : vector<1x8xf32>
    %88 = arith.mulf %80, %80 : vector<256x8xf32>
    %cst_81 = arith.constant dense<0.000000e+00> : vector<8xf32>
    %89 = vector.multi_reduction <add>, %88, %cst_81 [0] : vector<256x8xf32> to vector<8xf32>
    %90 = vector.shape_cast %89 : vector<8xf32> to vector<1x8xf32>
    %91 = arith.addf %52, %90 : vector<1x8xf32>
    %cst_82 = arith.constant 0.000000e+00 : f32
    %92 = vector.broadcast %cst_82 : f32 to vector<256x8xf32>
    %c1_83 = arith.constant 1 : index
    %c0_84 = arith.constant 0 : index
    %c0_85 = arith.constant 0 : index
    %93 = vector.load %arg9[%c1_83, %c0_84, %c0_85] : memref<18x18x8xf32, #tpu.memory_space<vmem>>, vector<16x16x8xf32>
    %94 = vector.shape_cast %93 : vector<16x16x8xf32> to vector<256x8xf32>
    %c8 = arith.constant 8 : index
    %c0_86 = arith.constant 0 : index
    %c0_87 = arith.constant 0 : index
    %95 = vector.load %arg4[%c8, %c0_86, %c0_87] : memref<16x8x8xf32, #tpu.memory_space<vmem>>, vector<1x8x8xf32>
    %96 = vector.shape_cast %95 : vector<1x8x8xf32> to vector<8x8xf32>
    %cst_88 = arith.constant dense<0.000000e+00> : vector<256x8xf32>
    %97 = tpu.matmul %94, %96, %cst_88 {dimension_numbers = #tpu.dot_dimension_numbers<[1], [0], [0], [1], [0, 0, 1, 1], [], []>} : vector<256x8xf32>, vector<8x8xf32>, vector<256x8xf32> -> vector<256x8xf32>
    %98 = arith.addf %92, %97 : vector<256x8xf32>
    %c1_89 = arith.constant 1 : index
    %c1_90 = arith.constant 1 : index
    %c0_91 = arith.constant 0 : index
    %99 = vector.load %arg9[%c1_89, %c1_90, %c0_91] : memref<18x18x8xf32, #tpu.memory_space<vmem>>, vector<16x16x8xf32>
    %100 = vector.shape_cast %99 : vector<16x16x8xf32> to vector<256x8xf32>
    %c9 = arith.constant 9 : index
    %c0_92 = arith.constant 0 : index
    %c0_93 = arith.constant 0 : index
    %101 = vector.load %arg4[%c9, %c0_92, %c0_93] : memref<16x8x8xf32, #tpu.memory_space<vmem>>, vector<1x8x8xf32>
    %102 = vector.shape_cast %101 : vector<1x8x8xf32> to vector<8x8xf32>
    %cst_94 = arith.constant dense<0.000000e+00> : vector<256x8xf32>
    %103 = tpu.matmul %100, %102, %cst_94 {dimension_numbers = #tpu.dot_dimension_numbers<[1], [0], [0], [1], [0, 0, 1, 1], [], []>} : vector<256x8xf32>, vector<8x8xf32>, vector<256x8xf32> -> vector<256x8xf32>
    %104 = arith.addf %98, %103 : vector<256x8xf32>
    %c2_95 = arith.constant 2 : index
    %c0_96 = arith.constant 0 : index
    %c0_97 = arith.constant 0 : index
    %105 = vector.load %arg9[%c2_95, %c0_96, %c0_97] : memref<18x18x8xf32, #tpu.memory_space<vmem>>, vector<16x16x8xf32>
    %106 = vector.shape_cast %105 : vector<16x16x8xf32> to vector<256x8xf32>
    %c10 = arith.constant 10 : index
    %c0_98 = arith.constant 0 : index
    %c0_99 = arith.constant 0 : index
    %107 = vector.load %arg4[%c10, %c0_98, %c0_99] : memref<16x8x8xf32, #tpu.memory_space<vmem>>, vector<1x8x8xf32>
    %108 = vector.shape_cast %107 : vector<1x8x8xf32> to vector<8x8xf32>
    %cst_100 = arith.constant dense<0.000000e+00> : vector<256x8xf32>
    %109 = tpu.matmul %106, %108, %cst_100 {dimension_numbers = #tpu.dot_dimension_numbers<[1], [0], [0], [1], [0, 0, 1, 1], [], []>} : vector<256x8xf32>, vector<8x8xf32>, vector<256x8xf32> -> vector<256x8xf32>
    %110 = arith.addf %104, %109 : vector<256x8xf32>
    %c2_101 = arith.constant 2 : index
    %c1_102 = arith.constant 1 : index
    %c0_103 = arith.constant 0 : index
    %111 = vector.load %arg9[%c2_101, %c1_102, %c0_103] : memref<18x18x8xf32, #tpu.memory_space<vmem>>, vector<16x16x8xf32>
    %112 = vector.shape_cast %111 : vector<16x16x8xf32> to vector<256x8xf32>
    %c11 = arith.constant 11 : index
    %c0_104 = arith.constant 0 : index
    %c0_105 = arith.constant 0 : index
    %113 = vector.load %arg4[%c11, %c0_104, %c0_105] : memref<16x8x8xf32, #tpu.memory_space<vmem>>, vector<1x8x8xf32>
    %114 = vector.shape_cast %113 : vector<1x8x8xf32> to vector<8x8xf32>
    %cst_106 = arith.constant dense<0.000000e+00> : vector<256x8xf32>
    %115 = tpu.matmul %112, %114, %cst_106 {dimension_numbers = #tpu.dot_dimension_numbers<[1], [0], [0], [1], [0, 0, 1, 1], [], []>} : vector<256x8xf32>, vector<8x8xf32>, vector<256x8xf32> -> vector<256x8xf32>
    %116 = arith.addf %110, %115 : vector<256x8xf32>
    %c0_107 = arith.constant 0 : index
    %c0_108 = arith.constant 0 : index
    %117 = vector.load %arg5[%c0_107, %c0_108] : memref<1x8xf32, #tpu.memory_space<vmem>>, vector<1x8xf32>
    %118 = vector.broadcast %117 : vector<1x8xf32> to vector<256x8xf32>
    %119 = arith.addf %116, %118 : vector<256x8xf32>
    %120 = vector.shape_cast %119 : vector<256x8xf32> to vector<16x16x8xf32>
    %c0_109 = arith.constant 0 : index
    %c32 = arith.constant 32 : index
    %c0_110 = arith.constant 0 : index
    %c0_111 = arith.constant 0 : index
    %121 = vector.load %arg6[%c0_109, %c32, %c0_110, %c0_111] : memref<1x64x16x8xf32, #tpu.memory_space<vmem>>, vector<1x16x16x8xf32>
    %122 = vector.shape_cast %121 : vector<1x16x16x8xf32> to vector<16x16x8xf32>
    %123 = vector.shape_cast %120 : vector<16x16x8xf32> to vector<1x16x16x8xf32>
    tpu.vector_store %arg6[%c0_109, %c32, %c0_110, %c0_111], %123 {strides = array<i32>} : memref<1x64x16x8xf32, #tpu.memory_space<vmem>>, vector<1x16x16x8xf32>,
    %cst_112 = arith.constant dense<0.000000e+00> : vector<8xf32>
    %124 = vector.multi_reduction <add>, %119, %cst_112 [0] : vector<256x8xf32> to vector<8xf32>
    %125 = vector.shape_cast %124 : vector<8xf32> to vector<1x8xf32>
    %126 = arith.addf %87, %125 : vector<1x8xf32>
    %127 = arith.mulf %119, %119 : vector<256x8xf32>
    %cst_113 = arith.constant dense<0.000000e+00> : vector<8xf32>
    %128 = vector.multi_reduction <add>, %127, %cst_113 [0] : vector<256x8xf32> to vector<8xf32>
    %129 = vector.shape_cast %128 : vector<8xf32> to vector<1x8xf32>
    %130 = arith.addf %91, %129 : vector<1x8xf32>
    %cst_114 = arith.constant 0.000000e+00 : f32
    %131 = vector.broadcast %cst_114 : f32 to vector<256x8xf32>
    %c1_115 = arith.constant 1 : index
    %c1_116 = arith.constant 1 : index
    %c0_117 = arith.constant 0 : index
    %132 = vector.load %arg9[%c1_115, %c1_116, %c0_117] : memref<18x18x8xf32, #tpu.memory_space<vmem>>, vector<16x16x8xf32>
    %133 = vector.shape_cast %132 : vector<16x16x8xf32> to vector<256x8xf32>
    %c12 = arith.constant 12 : index
    %c0_118 = arith.constant 0 : index
    %c0_119 = arith.constant 0 : index
    %134 = vector.load %arg4[%c12, %c0_118, %c0_119] : memref<16x8x8xf32, #tpu.memory_space<vmem>>, vector<1x8x8xf32>
    %135 = vector.shape_cast %134 : vector<1x8x8xf32> to vector<8x8xf32>
    %cst_120 = arith.constant dense<0.000000e+00> : vector<256x8xf32>
    %136 = tpu.matmul %133, %135, %cst_120 {dimension_numbers = #tpu.dot_dimension_numbers<[1], [0], [0], [1], [0, 0, 1, 1], [], []>} : vector<256x8xf32>, vector<8x8xf32>, vector<256x8xf32> -> vector<256x8xf32>
    %137 = arith.addf %131, %136 : vector<256x8xf32>
    %c1_121 = arith.constant 1 : index
    %c2_122 = arith.constant 2 : index
    %c0_123 = arith.constant 0 : index
    %138 = vector.load %arg9[%c1_121, %c2_122, %c0_123] : memref<18x18x8xf32, #tpu.memory_space<vmem>>, vector<16x16x8xf32>
    %139 = vector.shape_cast %138 : vector<16x16x8xf32> to vector<256x8xf32>
    %c13 = arith.constant 13 : index
    %c0_124 = arith.constant 0 : index
    %c0_125 = arith.constant 0 : index
    %140 = vector.load %arg4[%c13, %c0_124, %c0_125] : memref<16x8x8xf32, #tpu.memory_space<vmem>>, vector<1x8x8xf32>
    %141 = vector.shape_cast %140 : vector<1x8x8xf32> to vector<8x8xf32>
    %cst_126 = arith.constant dense<0.000000e+00> : vector<256x8xf32>
    %142 = tpu.matmul %139, %141, %cst_126 {dimension_numbers = #tpu.dot_dimension_numbers<[1], [0], [0], [1], [0, 0, 1, 1], [], []>} : vector<256x8xf32>, vector<8x8xf32>, vector<256x8xf32> -> vector<256x8xf32>
    %143 = arith.addf %137, %142 : vector<256x8xf32>
    %c2_127 = arith.constant 2 : index
    %c1_128 = arith.constant 1 : index
    %c0_129 = arith.constant 0 : index
    %144 = vector.load %arg9[%c2_127, %c1_128, %c0_129] : memref<18x18x8xf32, #tpu.memory_space<vmem>>, vector<16x16x8xf32>
    %145 = vector.shape_cast %144 : vector<16x16x8xf32> to vector<256x8xf32>
    %c14 = arith.constant 14 : index
    %c0_130 = arith.constant 0 : index
    %c0_131 = arith.constant 0 : index
    %146 = vector.load %arg4[%c14, %c0_130, %c0_131] : memref<16x8x8xf32, #tpu.memory_space<vmem>>, vector<1x8x8xf32>
    %147 = vector.shape_cast %146 : vector<1x8x8xf32> to vector<8x8xf32>
    %cst_132 = arith.constant dense<0.000000e+00> : vector<256x8xf32>
    %148 = tpu.matmul %145, %147, %cst_132 {dimension_numbers = #tpu.dot_dimension_numbers<[1], [0], [0], [1], [0, 0, 1, 1], [], []>} : vector<256x8xf32>, vector<8x8xf32>, vector<256x8xf32> -> vector<256x8xf32>
    %149 = arith.addf %143, %148 : vector<256x8xf32>
    %c2_133 = arith.constant 2 : index
    %c2_134 = arith.constant 2 : index
    %c0_135 = arith.constant 0 : index
    %150 = vector.load %arg9[%c2_133, %c2_134, %c0_135] : memref<18x18x8xf32, #tpu.memory_space<vmem>>, vector<16x16x8xf32>
    %151 = vector.shape_cast %150 : vector<16x16x8xf32> to vector<256x8xf32>
    %c15 = arith.constant 15 : index
    %c0_136 = arith.constant 0 : index
    %c0_137 = arith.constant 0 : index
    %152 = vector.load %arg4[%c15, %c0_136, %c0_137] : memref<16x8x8xf32, #tpu.memory_space<vmem>>, vector<1x8x8xf32>
    %153 = vector.shape_cast %152 : vector<1x8x8xf32> to vector<8x8xf32>
    %cst_138 = arith.constant dense<0.000000e+00> : vector<256x8xf32>
    %154 = tpu.matmul %151, %153, %cst_138 {dimension_numbers = #tpu.dot_dimension_numbers<[1], [0], [0], [1], [0, 0, 1, 1], [], []>} : vector<256x8xf32>, vector<8x8xf32>, vector<256x8xf32> -> vector<256x8xf32>
    %155 = arith.addf %149, %154 : vector<256x8xf32>
    %c0_139 = arith.constant 0 : index
    %c0_140 = arith.constant 0 : index
    %156 = vector.load %arg5[%c0_139, %c0_140] : memref<1x8xf32, #tpu.memory_space<vmem>>, vector<1x8xf32>
    %157 = vector.broadcast %156 : vector<1x8xf32> to vector<256x8xf32>
    %158 = arith.addf %155, %157 : vector<256x8xf32>
    %159 = vector.shape_cast %158 : vector<256x8xf32> to vector<16x16x8xf32>
    %c0_141 = arith.constant 0 : index
    %c48 = arith.constant 48 : index
    %c0_142 = arith.constant 0 : index
    %c0_143 = arith.constant 0 : index
    %160 = vector.load %arg6[%c0_141, %c48, %c0_142, %c0_143] : memref<1x64x16x8xf32, #tpu.memory_space<vmem>>, vector<1x16x16x8xf32>
    %161 = vector.shape_cast %160 : vector<1x16x16x8xf32> to vector<16x16x8xf32>
    %162 = vector.shape_cast %159 : vector<16x16x8xf32> to vector<1x16x16x8xf32>
    tpu.vector_store %arg6[%c0_141, %c48, %c0_142, %c0_143], %162 {strides = array<i32>} : memref<1x64x16x8xf32, #tpu.memory_space<vmem>>, vector<1x16x16x8xf32>,
    %cst_144 = arith.constant dense<0.000000e+00> : vector<8xf32>
    %163 = vector.multi_reduction <add>, %158, %cst_144 [0] : vector<256x8xf32> to vector<8xf32>
    %164 = vector.shape_cast %163 : vector<8xf32> to vector<1x8xf32>
    %165 = arith.addf %126, %164 : vector<1x8xf32>
    %166 = arith.mulf %158, %158 : vector<256x8xf32>
    %cst_145 = arith.constant dense<0.000000e+00> : vector<8xf32>
    %167 = vector.multi_reduction <add>, %166, %cst_145 [0] : vector<256x8xf32> to vector<8xf32>
    %168 = vector.shape_cast %167 : vector<8xf32> to vector<1x8xf32>
    %169 = arith.addf %130, %168 : vector<1x8xf32>
    %170 = vector.shape_cast %165 : vector<1x8xf32> to vector<1x1x8xf32>
    %c0_146 = arith.constant 0 : index
    %c0_147 = arith.constant 0 : index
    %c0_148 = arith.constant 0 : index
    %171 = vector.load %arg7[%c0_146, %c0_147, %c0_148] : memref<1x1x8xf32, #tpu.memory_space<vmem>>, vector<1x1x8xf32>
    tpu.vector_store %arg7[%c0_146, %c0_147, %c0_148], %170 {strides = array<i32>} : memref<1x1x8xf32, #tpu.memory_space<vmem>>, vector<1x1x8xf32>,
    %172 = vector.shape_cast %169 : vector<1x8xf32> to vector<1x1x8xf32>
    %c0_149 = arith.constant 0 : index
    %c0_150 = arith.constant 0 : index
    %c0_151 = arith.constant 0 : index
    %173 = vector.load %arg8[%c0_149, %c0_150, %c0_151] : memref<1x1x8xf32, #tpu.memory_space<vmem>>, vector<1x1x8xf32>
    tpu.vector_store %arg8[%c0_149, %c0_150, %c0_151], %172 {strides = array<i32>} : memref<1x1x8xf32, #tpu.memory_space<vmem>>, vector<1x1x8xf32>,
    return
  }
  func.func @transform_0(%arg0: i32) -> (i32, i32, i32, i32) {
    %c0_i32 = arith.constant 0 : i32
    %c0_i32_0 = arith.constant 0 : i32
    %c0_i32_1 = arith.constant 0 : i32
    %c0_i32_2 = arith.constant 0 : i32
    return %arg0, %c0_i32, %c0_i32_0, %c0_i32_1 : i32, i32, i32, i32
  }
  func.func @transform_1(%arg0: i32) -> (i32, i32) {
    %c0_i32 = arith.constant 0 : i32
    %c0_i32_0 = arith.constant 0 : i32
    %c0_i32_1 = arith.constant 0 : i32
    return %c0_i32, %c0_i32_0 : i32, i32
  }
  func.func @transform_2(%arg0: i32) -> (i32, i32) {
    %c0_i32 = arith.constant 0 : i32
    %c0_i32_0 = arith.constant 0 : i32
    %c0_i32_1 = arith.constant 0 : i32
    return %c0_i32, %c0_i32_0 : i32, i32
  }
  func.func @transform_3(%arg0: i32) -> (i32, i32, i32) {
    %c0_i32 = arith.constant 0 : i32
    %c0_i32_0 = arith.constant 0 : i32
    %c0_i32_1 = arith.constant 0 : i32
    %c0_i32_2 = arith.constant 0 : i32
    return %c0_i32, %c0_i32_0, %c0_i32_1 : i32, i32, i32
  }
  func.func @transform_4(%arg0: i32) -> (i32, i32) {
    %c0_i32 = arith.constant 0 : i32
    %c0_i32_0 = arith.constant 0 : i32
    %c0_i32_1 = arith.constant 0 : i32
    return %c0_i32, %c0_i32_0 : i32, i32
  }
  func.func @transform_5(%arg0: i32) -> (i32, i32, i32, i32) {
    %c0_i32 = arith.constant 0 : i32
    %c0_i32_0 = arith.constant 0 : i32
    %c0_i32_1 = arith.constant 0 : i32
    %c0_i32_2 = arith.constant 0 : i32
    return %arg0, %c0_i32, %c0_i32_0, %c0_i32_1 : i32, i32, i32, i32
  }
  func.func @transform_6(%arg0: i32) -> (i32, i32, i32) {
    %c0_i32 = arith.constant 0 : i32
    %c0_i32_0 = arith.constant 0 : i32
    %c0_i32_1 = arith.constant 0 : i32
    return %arg0, %c0_i32, %c0_i32_0 : i32, i32, i32
  }
  func.func @transform_7(%arg0: i32) -> (i32, i32, i32) {
    %c0_i32 = arith.constant 0 : i32
    %c0_i32_0 = arith.constant 0 : i32
    %c0_i32_1 = arith.constant 0 : i32
    return %arg0, %c0_i32, %c0_i32_0 : i32, i32, i32
  }
}

module attributes {stable_mosaic.version = 11 : i64} {
  func.func @_bn_lrelu_kernel(%arg0: i32, %arg1: memref<128x128xf32, #tpu.memory_space<vmem>>, %arg2: memref<1x128xf32, #tpu.memory_space<vmem>>, %arg3: memref<1x128xf32, #tpu.memory_space<vmem>>, %arg4: memref<1x128xf32, #tpu.memory_space<vmem>>, %arg5: memref<1x128xf32, #tpu.memory_space<vmem>>, %arg6: memref<128x128xf32, #tpu.memory_space<vmem>>) attributes {dimension_semantics = [#tpu.dimension_semantics<parallel>], iteration_bounds = array<i64: 1>, scalar_prefetch = 0 : i64, scratch_operands = 0 : i64, tpu.core_type = #tpu.core_type<tc>, window_params = [{transform_indices = @transform_0, window_bounds = array<i64: 128, 128>}, {pipeline_mode = #tpu.pipeline_mode<synchronous>, transform_indices = @transform_1, window_bounds = array<i64: 1, 128>}, {pipeline_mode = #tpu.pipeline_mode<synchronous>, transform_indices = @transform_2, window_bounds = array<i64: 1, 128>}, {pipeline_mode = #tpu.pipeline_mode<synchronous>, transform_indices = @transform_3, window_bounds = array<i64: 1, 128>}, {pipeline_mode = #tpu.pipeline_mode<synchronous>, transform_indices = @transform_4, window_bounds = array<i64: 1, 128>}, {transform_indices = @transform_5, window_bounds = array<i64: 128, 128>}]} {
    %c0 = arith.constant 0 : index
    %c0_0 = arith.constant 0 : index
    %0 = vector.load %arg4[%c0, %c0_0] : memref<1x128xf32, #tpu.memory_space<vmem>>, vector<1x128xf32>
    %c0_1 = arith.constant 0 : index
    %c0_2 = arith.constant 0 : index
    %1 = vector.load %arg3[%c0_1, %c0_2] : memref<1x128xf32, #tpu.memory_space<vmem>>, vector<1x128xf32>
    %cst = arith.constant 9.99999974E-6 : f32
    %2 = vector.broadcast %cst : f32 to vector<1x128xf32>
    %3 = arith.addf %1, %2 : vector<1x128xf32>
    %4 = math.rsqrt %3 : vector<1x128xf32>
    %5 = arith.mulf %0, %4 : vector<1x128xf32>
    %c0_3 = arith.constant 0 : index
    %c0_4 = arith.constant 0 : index
    %6 = vector.load %arg5[%c0_3, %c0_4] : memref<1x128xf32, #tpu.memory_space<vmem>>, vector<1x128xf32>
    %c0_5 = arith.constant 0 : index
    %c0_6 = arith.constant 0 : index
    %7 = vector.load %arg2[%c0_5, %c0_6] : memref<1x128xf32, #tpu.memory_space<vmem>>, vector<1x128xf32>
    %8 = arith.mulf %7, %5 : vector<1x128xf32>
    %9 = arith.subf %6, %8 : vector<1x128xf32>
    %c0_7 = arith.constant 0 : index
    %c0_8 = arith.constant 0 : index
    %10 = vector.load %arg1[%c0_7, %c0_8] : memref<128x128xf32, #tpu.memory_space<vmem>>, vector<128x128xf32>
    %11 = vector.broadcast %5 : vector<1x128xf32> to vector<128x128xf32>
    %12 = arith.mulf %10, %11 : vector<128x128xf32>
    %13 = vector.broadcast %9 : vector<1x128xf32> to vector<128x128xf32>
    %14 = arith.addf %12, %13 : vector<128x128xf32>
    %cst_9 = arith.constant 1.000000e-01 : f32
    %15 = vector.broadcast %cst_9 : f32 to vector<128x128xf32>
    %16 = arith.mulf %15, %14 : vector<128x128xf32>
    %17 = arith.maximumf %14, %16 : vector<128x128xf32>
    %c0_10 = arith.constant 0 : index
    %c0_11 = arith.constant 0 : index
    %18 = vector.load %arg6[%c0_10, %c0_11] : memref<128x128xf32, #tpu.memory_space<vmem>>, vector<128x128xf32>
    tpu.vector_store %arg6[%c0_10, %c0_11], %17 {strides = array<i32>} : memref<128x128xf32, #tpu.memory_space<vmem>>, vector<128x128xf32>,
    return
  }
  func.func @transform_0(%arg0: i32) -> (i32, i32) {
    %c0_i32 = arith.constant 0 : i32
    %c0_i32_0 = arith.constant 0 : i32
    return %arg0, %c0_i32 : i32, i32
  }
  func.func @transform_1(%arg0: i32) -> (i32, i32) {
    %c0_i32 = arith.constant 0 : i32
    %c0_i32_0 = arith.constant 0 : i32
    %c0_i32_1 = arith.constant 0 : i32
    return %c0_i32, %c0_i32_0 : i32, i32
  }
  func.func @transform_2(%arg0: i32) -> (i32, i32) {
    %c0_i32 = arith.constant 0 : i32
    %c0_i32_0 = arith.constant 0 : i32
    %c0_i32_1 = arith.constant 0 : i32
    return %c0_i32, %c0_i32_0 : i32, i32
  }
  func.func @transform_3(%arg0: i32) -> (i32, i32) {
    %c0_i32 = arith.constant 0 : i32
    %c0_i32_0 = arith.constant 0 : i32
    %c0_i32_1 = arith.constant 0 : i32
    return %c0_i32, %c0_i32_0 : i32, i32
  }
  func.func @transform_4(%arg0: i32) -> (i32, i32) {
    %c0_i32 = arith.constant 0 : i32
    %c0_i32_0 = arith.constant 0 : i32
    %c0_i32_1 = arith.constant 0 : i32
    return %c0_i32, %c0_i32_0 : i32, i32
  }
  func.func @transform_5(%arg0: i32) -> (i32, i32) {
    %c0_i32 = arith.constant 0 : i32
    %c0_i32_0 = arith.constant 0 : i32
    return %arg0, %c0_i32 : i32, i32
  }
}

</mosaic_0001>

<llo_original>
// kernel: up_forward.3
$region0: #{up_forward.3}
  #allocation0 [shape = 'u32[]', space=smem, size = 0x4, offset = 0x4, fixed_abs, tag = 'smem constant byte address 0x4 - core index']
  #allocation1 [shape = 'u32[72,128]{1,0:T(1,128)}', space=vmem, size = 0x9000, scoped, tag = 'internal scratch']
  %s0 = inlined_call_operand.vmem [shape: f32[128,128], index: 0, kind: input, shape index: {}]
  %s1 = inlined_call_operand.vmem [shape: f32[1,128], index: 1, kind: input, shape index: {}]
  %s2 = inlined_call_operand.vmem [shape: f32[1,128], index: 2, kind: input, shape index: {}]
  %s3 = inlined_call_operand.vmem [shape: f32[1,128], index: 3, kind: input, shape index: {}]
  %s4 = inlined_call_operand.vmem [shape: f32[1,128], index: 4, kind: input, shape index: {}]
  %s5 = inlined_call_operand.vmem [shape: f32[128,128], index: 5, kind: output, shape index: {}]
  %s6 = sld [smem:[#allocation0]]
  $region30: #{up_forward.3} parent=0
    _
  %s8 = ssub.s32 1, %s6
  %s9 = scalar_select 0, %s8, %s6
  // Predicated region
  $region2: #{up_forward.3} parent=0 // pred_check
    _
  $region3: #{up_forward.3} parent=0 // pred_check_branch
    %11 = sbr.rel (0) target = $region5
  $region4: #{up_forward.3} parent=0 // pred_region
    _
  $region5: #{up_forward.3} parent=0 // pred_fallthru
    _
  // Predicated region
  $region6: #{up_forward.3} parent=0 // pred_check
    _
  $region7: #{up_forward.3} parent=0 // pred_check_branch
    %13 = sbr.rel (0) target = $region9
  $region8: #{up_forward.3} parent=0 // pred_region
    _
  $region9: #{up_forward.3} parent=0 // pred_fallthru
    _
  // Predicated region
  $region10: #{up_forward.3} parent=0 // pred_check
    _
  $region11: #{up_forward.3} parent=0 // pred_check_branch
    %15 = sbr.rel (0) target = $region13
  $region12: #{up_forward.3} parent=0 // pred_region
    _
  $region13: #{up_forward.3} parent=0 // pred_fallthru
    _
  // Predicated region
  $region14: #{up_forward.3} parent=0 // pred_check
    _
  $region15: #{up_forward.3} parent=0 // pred_check_branch
    %17 = sbr.rel (0) target = $region17
  $region16: #{up_forward.3} parent=0 // pred_region
    _
  $region17: #{up_forward.3} parent=0 // pred_fallthru
    _
  // Predicated region
  $region18: #{up_forward.3} parent=0 // pred_check
    _
  $region19: #{up_forward.3} parent=0 // pred_check_branch
    %19 = sbr.rel (0) target = $region21
  $region20: #{up_forward.3} parent=0 // pred_region
    _
  $region21: #{up_forward.3} parent=0 // pred_fallthru
    _
  %v20 = vld [vmem:[%s3] sm:$0x1]
  %v21 = vld [vmem:[%s2] sm:$0x1]
  %v22 = vadd.f32 %v21, 1e-05
  %v23 = vrsqrt.pop %v22
  %v24 = vmul.f32 %v23, %v22
  %v25 = vmul.f32 %v24, %v23
  %v26 = vmul.f32 0.5, %v25
  %v27 = vsub.f32 1.5, %v26
  %v28 = vmul.f32 %v23, %v27
  %vm29 = vweird.f32 %v22
  %vm30 = vweird.f32 %v23
  %vm31 = vmor %vm29, %vm30
  %v32 = vsel %vm31, %v23, %v28
  %v33 = vmul.f32 %v20, %v32
  %v34 = vld [vmem:[%s4] sm:$0x1]
  %v35 = vld [vmem:[%s1] sm:$0x1]
  %v36 = vmul.f32 %v35, %v33
  %v37 = vsub.f32 %v34, %v36
  %v38 = vld [vmem:[%s0] sm:$0xff]
  %v39 = vld [vmem:[%s0 + $0x8] sm:$0xff]
  %v40 = vld [vmem:[%s0 + $0x10] sm:$0xff]
  %v41 = vld [vmem:[%s0 + $0x18] sm:$0xff]
  %v42 = vld [vmem:[%s0 + $0x20] sm:$0xff]
  %v43 = vld [vmem:[%s0 + $0x28] sm:$0xff]
  %v44 = vld [vmem:[%s0 + $0x30] sm:$0xff]
  %v45 = vld [vmem:[%s0 + $0x38] sm:$0xff]
  %v46 = vld [vmem:[%s0 + $0x40] sm:$0xff]
  %v47 = vld [vmem:[%s0 + $0x48] sm:$0xff]
  %v48 = vld [vmem:[%s0 + $0x50] sm:$0xff]
  %v49 = vld [vmem:[%s0 + $0x58] sm:$0xff]
  %v50 = vld [vmem:[%s0 + $0x60] sm:$0xff]
  %v51 = vld [vmem:[%s0 + $0x68] sm:$0xff]
  %v52 = vld [vmem:[%s0 + $0x70] sm:$0xff]
  %v53 = vld [vmem:[%s0 + $0x78] sm:$0xff]
  %v55 = vperm.slane %v33, 0
  %v57 = vmul.f32 %v38, %v55
  %v58 = vmul.f32 %v39, %v55
  %v59 = vmul.f32 %v40, %v55
  %v60 = vmul.f32 %v41, %v55
  %v61 = vmul.f32 %v42, %v55
  %v62 = vmul.f32 %v43, %v55
  %v63 = vmul.f32 %v44, %v55
  %v64 = vmul.f32 %v45, %v55
  %v65 = vmul.f32 %v46, %v55
  %v66 = vmul.f32 %v47, %v55
  %v67 = vmul.f32 %v48, %v55
  %v68 = vmul.f32 %v49, %v55
  %v69 = vmul.f32 %v50, %v55
  %v70 = vmul.f32 %v51, %v55
  %v71 = vmul.f32 %v52, %v55
  %v72 = vmul.f32 %v53, %v55
  %v74 = vperm.slane %v37, 0
  %v76 = vadd.f32 %v57, %v74
  %v77 = vadd.f32 %v58, %v74
  %v78 = vadd.f32 %v59, %v74
  %v79 = vadd.f32 %v60, %v74
  %v80 = vadd.f32 %v61, %v74
  %v81 = vadd.f32 %v62, %v74
  %v82 = vadd.f32 %v63, %v74
  %v83 = vadd.f32 %v64, %v74
  %v84 = vadd.f32 %v65, %v74
  %v85 = vadd.f32 %v66, %v74
  %v86 = vadd.f32 %v67, %v74
  %v87 = vadd.f32 %v68, %v74
  %v88 = vadd.f32 %v69, %v74
  %v89 = vadd.f32 %v70, %v74
  %v90 = vadd.f32 %v71, %v74
  %v91 = vadd.f32 %v72, %v74
  %v92 = vmul.f32 %v76, 0.1
  %v93 = vmul.f32 %v77, 0.1
  %v94 = vmul.f32 %v78, 0.1
  %v95 = vmul.f32 %v79, 0.1
  %v96 = vmul.f32 %v80, 0.1
  %v97 = vmul.f32 %v81, 0.1
  %v98 = vmul.f32 %v82, 0.1
  %v99 = vmul.f32 %v83, 0.1
  %v100 = vmul.f32 %v84, 0.1
  %v101 = vmul.f32 %v85, 0.1
  %v102 = vmul.f32 %v86, 0.1
  %v103 = vmul.f32 %v87, 0.1
  %v104 = vmul.f32 %v88, 0.1
  %v105 = vmul.f32 %v89, 0.1
  %v106 = vmul.f32 %v90, 0.1
  %v107 = vmul.f32 %v91, 0.1
  %v108 = vmax.f32 %v76, %v92
  %v109 = vmax.f32 %v77, %v93
  %v110 = vmax.f32 %v78, %v94
  %v111 = vmax.f32 %v79, %v95
  %v112 = vmax.f32 %v80, %v96
  %v113 = vmax.f32 %v81, %v97
  %v114 = vmax.f32 %v82, %v98
  %v115 = vmax.f32 %v83, %v99
  %v116 = vmax.f32 %v84, %v100
  %v117 = vmax.f32 %v85, %v101
  %v118 = vmax.f32 %v86, %v102
  %v119 = vmax.f32 %v87, %v103
  %v120 = vmax.f32 %v88, %v104
  %v121 = vmax.f32 %v89, %v105
  %v122 = vmax.f32 %v90, %v106
  %v123 = vmax.f32 %v91, %v107
  %124 = vst [vmem:[%s5] sm:$0xff] %v108
  %125 = vst [vmem:[%s5 + $0x8] sm:$0xff] %v109
  %126 = vst [vmem:[%s5 + $0x10] sm:$0xff] %v110
  %127 = vst [vmem:[%s5 + $0x18] sm:$0xff] %v111
  %128 = vst [vmem:[%s5 + $0x20] sm:$0xff] %v112
  %129 = vst [vmem:[%s5 + $0x28] sm:$0xff] %v113
  %130 = vst [vmem:[%s5 + $0x30] sm:$0xff] %v114
  %131 = vst [vmem:[%s5 + $0x38] sm:$0xff] %v115
  %132 = vst [vmem:[%s5 + $0x40] sm:$0xff] %v116
  %133 = vst [vmem:[%s5 + $0x48] sm:$0xff] %v117
  %134 = vst [vmem:[%s5 + $0x50] sm:$0xff] %v118
  %135 = vst [vmem:[%s5 + $0x58] sm:$0xff] %v119
  %136 = vst [vmem:[%s5 + $0x60] sm:$0xff] %v120
  %137 = vst [vmem:[%s5 + $0x68] sm:$0xff] %v121
  %138 = vst [vmem:[%s5 + $0x70] sm:$0xff] %v122
  %139 = vst [vmem:[%s5 + $0x78] sm:$0xff] %v123
  // Predicated region
  $region22: #{up_forward.3} parent=0 // pred_check
    _
  $region23: #{up_forward.3} parent=0 // pred_check_branch
    %141 = sbr.rel (0) target = $region25
  $region24: #{up_forward.3} parent=0 // pred_region
    _
  $region25: #{up_forward.3} parent=0 // pred_fallthru
    _
  // Predicated region
  $region26: #{up_forward.3} parent=0 // pred_check
    _
  $region27: #{up_forward.3} parent=0 // pred_check_branch
    %143 = sbr.rel (0) target = $region29
  $region28: #{up_forward.3} parent=0 // pred_region
    _
  $region29: #{up_forward.3} parent=0 // pred_fallthru
    _

// kernel: up_forward.2
$region0: #{up_forward.2}
  #allocation0 [shape = 'u32[]', space=smem, size = 0x4, offset = 0x4, fixed_abs, tag = 'smem constant byte address 0x4 - core index']
  #allocation1 [shape = 'u32[72,128]{1,0:T(1,128)}', space=vmem, size = 0x9000, scoped, tag = 'internal scratch']
  #allocation2 [shape = 'f32[18,18,8]{2,1,0:T(8,128)}', space=vmem, size = 0x36000, scoped, tag = 'scratch operand']
  %s0 = inlined_call_operand.vmem [shape: f32[2,16,16,4], index: 0, kind: input, shape index: {}]
  %s1 = inlined_call_operand.vmem [shape: f32[4,8], index: 1, kind: input, shape index: {}]
  %s2 = inlined_call_operand.vmem [shape: f32[1,8], index: 2, kind: input, shape index: {}]
  %s3 = inlined_call_operand.vmem [shape: f32[16,8,8], index: 3, kind: input, shape index: {}]
  %s4 = inlined_call_operand.vmem [shape: f32[1,8], index: 4, kind: input, shape index: {}]
  %s5 = inlined_call_operand.vmem [shape: f32[2,64,16,8], index: 5, kind: output, shape index: {0}]
  %s6 = inlined_call_operand.vmem [shape: f32[2,1,8], index: 6, kind: output, shape index: {1}]
  %s7 = inlined_call_operand.vmem [shape: f32[2,1,8], index: 7, kind: output, shape index: {2}]
  %8 = xla_tuple %s5, %s6, %s7
  %s9 = sld [smem:[#allocation0]]
  $region69: #{up_forward.2} parent=0
    _
  %s11 = ssub.s32 1, %s9
  %s12 = scalar_select 0, %s11, %s9
  loop: start=0, step=1, limit=4
  $region2: #{up_forward.2} parent=0 // loop_pre_header
    _
  $region3: #{up_forward.2} parent=0 // loop_header
    %s14 = sphi 0, %s18
    %p15 = scmp.ge.s32.totalorder %s14, 4
    %s24 = sphi 0, %s26
    %s27 = sphi 0, %s24
    %s28 = sphi 0, %s27
    %s44 = sphi 0, %s28
    %s48 = sphi 0, %s48
    %s50 = sphi 0, %s48
    %s51 = sphi 0, %s50
    %s65 = sphi 0, %s51
    %s69 = sphi 0, %s69
    %s71 = sphi 0, %s69
    %s72 = sphi 0, %s71
    %s86 = sphi 0, %s72
    %s90 = sphi 0, %s90
    %s92 = sphi 0, %s90
    %s93 = sphi 0, %s92
    %s107 = sphi 0, %s93
    %s111 = sphi 0, %s111
    %s113 = sphi 0, %s111
    %s114 = sphi 0, %s113
    %s128 = sphi 0, %s114
    %s134 = sphi 0, %s136
    %s137 = sphi 0, %s134
    %s138 = sphi 0, %s137
    %s154 = sphi 0, %s138
    %s160 = sphi 0, %s162
    %s163 = sphi 0, %s160
    %s164 = sphi 0, %s163
    %s180 = sphi 0, %s164
    %s186 = sphi 0, %s188
    %s189 = sphi 0, %s186
    %s190 = sphi 0, %s189
    %s206 = sphi 0, %s190
  $region4: #{up_forward.2} parent=0 // loop_header_branch
    %17 = sbr.rel (%p15) target = $region8
  $region5: #{up_forward.2} parent=0 // loop_body
    %s19 = ssub.s32 %s14, 1
    %s20 = ssub.s32 %s14, 2
    %s21 = sadd.s32 %s14, 1
    %s22 = ssub.s32 %s14, %s21
    %p23 = scmp.eq.s32.totalorder %s22, 0
    %s25 = sadd.s32 %s24, 1
    %s26 = scalar_select %p23, %s24, %s25
    %p29 = pneg %p23
    %p30 = scmp.eq.s32.totalorder %s14, 1
    %p31 = por %p29, %p30
    %p32 = scmp.ne.s32.totalorder %s24, %s27
    %p33 = scmp.eq.s32.totalorder %s14, 0
    %p34 = por %p32, %p33
    %p35 = scmp.ne.s32.totalorder %s24, %s27
    %p36 = scmp.eq.s32.totalorder %s19, 1
    %p37 = por %p35, %p36
    %p38 = scmp.ne.s32.totalorder %s27, %s28
    %p39 = scmp.eq.s32.totalorder %s19, 0
    %p40 = por %p38, %p39
    %p41 = scmp.ne.s32.totalorder %s27, %s28
    %p42 = scmp.eq.s32.totalorder %s20, 1
    %p43 = por %p41, %p42
    %p45 = scmp.ne.s32.totalorder %s28, %s44
    %p46 = scmp.eq.s32.totalorder %s20, 0
    %p47 = por %p45, %p46
    %s49 = sadd.s32 %s48, 1
    %p52 = scmp.eq.s32.totalorder %s14, 1
    %p53 = scmp.ne.s32.totalorder %s48, %s50
    %p54 = scmp.eq.s32.totalorder %s14, 0
    %p55 = por %p53, %p54
    %p56 = scmp.ne.s32.totalorder %s48, %s50
    %p57 = scmp.eq.s32.totalorder %s19, 1
    %p58 = por %p56, %p57
    %p59 = scmp.ne.s32.totalorder %s50, %s51
    %p60 = scmp.eq.s32.totalorder %s19, 0
    %p61 = por %p59, %p60
    %p62 = scmp.ne.s32.totalorder %s50, %s51
    %p63 = scmp.eq.s32.totalorder %s20, 1
    %p64 = por %p62, %p63
    %p66 = scmp.ne.s32.totalorder %s51, %s65
    %p67 = scmp.eq.s32.totalorder %s20, 0
    %p68 = por %p66, %p67
    %s70 = sadd.s32 %s69, 1
    %p73 = scmp.eq.s32.totalorder %s14, 1
    %p74 = scmp.ne.s32.totalorder %s69, %s71
    %p75 = scmp.eq.s32.totalorder %s14, 0
    %p76 = por %p74, %p75
    %p77 = scmp.ne.s32.totalorder %s69, %s71
    %p78 = scmp.eq.s32.totalorder %s19, 1
    %p79 = por %p77, %p78
    %p80 = scmp.ne.s32.totalorder %s71, %s72
    %p81 = scmp.eq.s32.totalorder %s19, 0
    %p82 = por %p80, %p81
    %p83 = scmp.ne.s32.totalorder %s71, %s72
    %p84 = scmp.eq.s32.totalorder %s20, 1
    %p85 = por %p83, %p84
    %p87 = scmp.ne.s32.totalorder %s72, %s86
    %p88 = scmp.eq.s32.totalorder %s20, 0
    %p89 = por %p87, %p88
    %s91 = sadd.s32 %s90, 1
    %p94 = scmp.eq.s32.totalorder %s14, 1
    %p95 = scmp.ne.s32.totalorder %s90, %s92
    %p96 = scmp.eq.s32.totalorder %s14, 0
    %p97 = por %p95, %p96
    %p98 = scmp.ne.s32.totalorder %s90, %s92
    %p99 = scmp.eq.s32.totalorder %s19, 1
    %p100 = por %p98, %p99
    %p101 = scmp.ne.s32.totalorder %s92, %s93
    %p102 = scmp.eq.s32.totalorder %s19, 0
    %p103 = por %p101, %p102
    %p104 = scmp.ne.s32.totalorder %s92, %s93
    %p105 = scmp.eq.s32.totalorder %s20, 1
    %p106 = por %p104, %p105
    %p108 = scmp.ne.s32.totalorder %s93, %s107
    %p109 = scmp.eq.s32.totalorder %s20, 0
    %p110 = por %p108, %p109
    %s112 = sadd.s32 %s111, 1
    %p115 = scmp.eq.s32.totalorder %s14, 1
    %p116 = scmp.ne.s32.totalorder %s111, %s113
    %p117 = scmp.eq.s32.totalorder %s14, 0
    %p118 = por %p116, %p117
    %p119 = scmp.ne.s32.totalorder %s111, %s113
    %p120 = scmp.eq.s32.totalorder %s19, 1
    %p121 = por %p119, %p120
    %p122 = scmp.ne.s32.totalorder %s113, %s114
    %p123 = scmp.eq.s32.totalorder %s19, 0
    %p124 = por %p122, %p123
    %p125 = scmp.ne.s32.totalorder %s113, %s114
    %p126 = scmp.eq.s32.totalorder %s20, 1
    %p127 = por %p125, %p126
    %p129 = scmp.ne.s32.totalorder %s114, %s128
    %p130 = scmp.eq.s32.totalorder %s20, 0
    %p131 = por %p129, %p130
    %s132 = ssub.s32 %s14, %s21
    %p133 = scmp.eq.s32.totalorder %s132, 0
    %s135 = sadd.s32 %s134, 1
    %s136 = scalar_select %p133, %s134, %s135
    %p139 = pneg %p133
    %p140 = scmp.eq.s32.totalorder %s14, 1
    %p141 = por %p139, %p140
    %p142 = scmp.ne.s32.totalorder %s134, %s137
    %p143 = scmp.eq.s32.totalorder %s14, 0
    %p144 = por %p142, %p143
    %p145 = scmp.ne.s32.totalorder %s134, %s137
    %p146 = scmp.eq.s32.totalorder %s19, 1
    %p147 = por %p145, %p146
    %p148 = scmp.ne.s32.totalorder %s137, %s138
    %p149 = scmp.eq.s32.totalorder %s19, 0
    %p150 = por %p148, %p149
    %p151 = scmp.ne.s32.totalorder %s137, %s138
    %p152 = scmp.eq.s32.totalorder %s20, 1
    %p153 = por %p151, %p152
    %p155 = scmp.ne.s32.totalorder %s138, %s154
    %p156 = scmp.eq.s32.totalorder %s20, 0
    %p157 = por %p155, %p156
    %s158 = ssub.s32 %s14, %s21
    %p159 = scmp.eq.s32.totalorder %s158, 0
    %s161 = sadd.s32 %s160, 1
    %s162 = scalar_select %p159, %s160, %s161
    %p165 = pneg %p159
    %p166 = scmp.eq.s32.totalorder %s14, 1
    %p167 = por %p165, %p166
    %p168 = scmp.ne.s32.totalorder %s160, %s163
    %p169 = scmp.eq.s32.totalorder %s14, 0
    %p170 = por %p168, %p169
    %p171 = scmp.ne.s32.totalorder %s160, %s163
    %p172 = scmp.eq.s32.totalorder %s19, 1
    %p173 = por %p171, %p172
    %p174 = scmp.ne.s32.totalorder %s163, %s164
    %p175 = scmp.eq.s32.totalorder %s19, 0
    %p176 = por %p174, %p175
    %p177 = scmp.ne.s32.totalorder %s163, %s164
    %p178 = scmp.eq.s32.totalorder %s20, 1
    %p179 = por %p177, %p178
    %p181 = scmp.ne.s32.totalorder %s164, %s180
    %p182 = scmp.eq.s32.totalorder %s20, 0
    %p183 = por %p181, %p182
    %s184 = ssub.s32 %s14, %s21
    %p185 = scmp.eq.s32.totalorder %s184, 0
    %s187 = sadd.s32 %s186, 1
    %s188 = scalar_select %p185, %s186, %s187
    %p191 = pneg %p185
    %p192 = scmp.eq.s32.totalorder %s14, 1
    %p193 = por %p191, %p192
    %p194 = scmp.ne.s32.totalorder %s186, %s189
    %p195 = scmp.eq.s32.totalorder %s14, 0
    %p196 = por %p194, %p195
    %p197 = scmp.ne.s32.totalorder %s186, %s189
    %p198 = scmp.eq.s32.totalorder %s19, 1
    %p199 = por %p197, %p198
    %p200 = scmp.ne.s32.totalorder %s189, %s190
    %p201 = scmp.eq.s32.totalorder %s19, 0
    %p202 = por %p200, %p201
    %p203 = scmp.ne.s32.totalorder %s189, %s190
    %p204 = scmp.eq.s32.totalorder %s20, 1
    %p205 = por %p203, %p204
    %p207 = scmp.ne.s32.totalorder %s190, %s206
    %p208 = scmp.eq.s32.totalorder %s20, 0
    %p209 = por %p207, %p208
    %p210 = scmp.le.s32.totalorder 1, %s14
    %p211 = scmp.lt.s32.totalorder %s14, 3
    %p212 = pnand %p210, %p211
    %p213 = pneg %p212
    // Predicated region
    $region9: #{up_forward.2} parent=5 // pred_check
      _
    $region10: #{up_forward.2} parent=5 // pred_check_branch
      %215 = sbr.rel (%p212) target = $region12
    $region11: #{up_forward.2} parent=5 // pred_region
      %s216 = ssub.s32 %s14, 1
      // Predicated region
      $region13: #{up_forward.2} parent=11 // pred_check
        %p217 = pneg %p61
      $region14: #{up_forward.2} parent=11 // pred_check_branch
        %219 = sbr.rel (%p217) target = $region16
      $region15: #{up_forward.2} parent=11 // pred_region
        _
      $region16: #{up_forward.2} parent=11 // pred_fallthru
        _
      // Predicated region
      $region17: #{up_forward.2} parent=11 // pred_check
        %p220 = pneg %p82
      $region18: #{up_forward.2} parent=11 // pred_check_branch
        %222 = sbr.rel (%p220) target = $region20
      $region19: #{up_forward.2} parent=11 // pred_region
        _
      $region20: #{up_forward.2} parent=11 // pred_fallthru
        _
      // Predicated region
      $region21: #{up_forward.2} parent=11 // pred_check
        %p223 = pneg %p103
      $region22: #{up_forward.2} parent=11 // pred_check_branch
        %225 = sbr.rel (%p223) target = $region24
      $region23: #{up_forward.2} parent=11 // pred_region
        _
      $region24: #{up_forward.2} parent=11 // pred_fallthru
        _
      // Predicated region
      $region25: #{up_forward.2} parent=11 // pred_check
        %p226 = pneg %p124
      $region26: #{up_forward.2} parent=11 // pred_check_branch
        %228 = sbr.rel (%p226) target = $region28
      $region27: #{up_forward.2} parent=11 // pred_region
        _
      $region28: #{up_forward.2} parent=11 // pred_fallthru
        _
    $region12: #{up_forward.2} parent=5 // pred_fallthru
      _
    %p229 = scmp.lt.s32.totalorder %s14, 2
    // Predicated region
    $region29: #{up_forward.2} parent=5 // pred_check
      %p230 = pneg %p229
    $region30: #{up_forward.2} parent=5 // pred_check_branch
      %232 = sbr.rel (%p230) target = $region32
    $region31: #{up_forward.2} parent=5 // pred_region
      // Predicated region
      $region33: #{up_forward.2} parent=31 // pred_check
        %p233 = pneg %p34
      $region34: #{up_forward.2} parent=31 // pred_check_branch
        %235 = sbr.rel (%p233) target = $region36
      $region35: #{up_forward.2} parent=31 // pred_region
        %p236 = scmp.lt.s32.totalorder %s14, 1
        %s237 = scalar_select %p236, %s14, 1
        %s238 = smul.addr %s237, 32
        %s239 = smul.addr %s238, 8
        %s240 = scalar_lea.vmem %s0, %s239
      $region36: #{up_forward.2} parent=31 // pred_fallthru
        _
    $region32: #{up_forward.2} parent=5 // pred_fallthru
      _
    %p241 = scmp.le.s32.totalorder 1, %s14
    %p242 = scmp.lt.s32.totalorder %s14, 3
    %p243 = pnand %p241, %p242
    %p244 = pneg %p243
    // Predicated region
    $region37: #{up_forward.2} parent=5 // pred_check
      _
    $region38: #{up_forward.2} parent=5 // pred_check_branch
      %246 = sbr.rel (%p243) target = $region40
    $region39: #{up_forward.2} parent=5 // pred_region
      %s247 = ssub.s32 %s14, 1
      %p248 = scmp.lt.s32.totalorder %s19, 1
      %s249 = scalar_select %p248, %s19, 1
      %s250 = smul.addr %s249, 32
      %s251 = smul.addr %s250, 8
      %s252 = scalar_lea.vmem %s0, %s251
      %p253 = pneg %p40
      %p254 = pneg %p37
      %p255 = pneg %p61
      %p256 = pneg %p58
      %p257 = pneg %p82
      %p258 = pneg %p79
      %p259 = pneg %p103
      %p260 = pneg %p100
      %p261 = pneg %p124
      %p262 = pneg %p121
      %p263 = pneg %p150
      %p264 = pneg %p147
      %p265 = scmp.lt.s32.totalorder %s19, 1
      %s266 = scalar_select %p265, %s19, 1
      %s267 = smul.addr %s266, 128
      %s268 = smul.addr %s267, 8
      %s269 = scalar_lea.vmem %s5, %s268
      %p270 = pneg %p176
      %p271 = pneg %p173
      %p272 = scmp.lt.s32.totalorder %s19, 1
      %s273 = scalar_select %p272, %s19, 1
      %s274 = scalar_lea.vmem %s6, %s273
      %p275 = pneg %p202
      %p276 = pneg %p199
      %p277 = scmp.lt.s32.totalorder %s19, 1
      %s278 = scalar_select %p277, %s19, 1
      %s279 = scalar_lea.vmem %s7, %s278
      %p280 = scmp.lt.s32.totalorder %s19, 1
      %s281 = scalar_select %p280, %s19, 1
      %s282 = smul.addr %s281, 32
      %s283 = smul.addr %s282, 8
      %s284 = scalar_lea.vmem %s0, %s283
      %p285 = scmp.lt.s32.totalorder %s19, 1
      %s286 = scalar_select %p285, %s19, 1
      %s287 = smul.addr %s286, 128
      %s288 = smul.addr %s287, 8
      %s289 = scalar_lea.vmem %s5, %s288
      %p290 = scmp.lt.s32.totalorder %s19, 1
      %s291 = scalar_select %p290, %s19, 1
      %s292 = scalar_lea.vmem %s6, %s291
      %p293 = scmp.lt.s32.totalorder %s19, 1
      %s294 = scalar_select %p293, %s19, 1
      %s295 = scalar_lea.vmem %s7, %s294
      %v296 = vld [vmem:[%s284] sm:$0xff]
      %v297 = vld [vmem:[%s284 + $0x8] sm:$0xff]
      %v298 = vld [vmem:[%s284 + $0x10] sm:$0xff]
      %v299 = vld [vmem:[%s284 + $0x18] sm:$0xff]
      %v300 = vld [vmem:[%s284 + $0x20] sm:$0xff]
      %v301 = vld [vmem:[%s284 + $0x28] sm:$0xff]
      %v302 = vld [vmem:[%s284 + $0x30] sm:$0xff]
      %v303 = vld [vmem:[%s284 + $0x38] sm:$0xff]
      %v304 = vld [vmem:[%s284 + $0x40] sm:$0xff]
      %v305 = vld [vmem:[%s284 + $0x48] sm:$0xff]
      %v306 = vld [vmem:[%s284 + $0x50] sm:$0xff]
      %v307 = vld [vmem:[%s284 + $0x58] sm:$0xff]
      %v308 = vld [vmem:[%s284 + $0x60] sm:$0xff]
      %v309 = vld [vmem:[%s284 + $0x68] sm:$0xff]
      %v310 = vld [vmem:[%s284 + $0x70] sm:$0xff]
      %v311 = vld [vmem:[%s284 + $0x78] sm:$0xff]
      %v312 = vld [vmem:[%s284 + $0x80] sm:$0xff]
      %v313 = vld [vmem:[%s284 + $0x88] sm:$0xff]
      %v314 = vld [vmem:[%s284 + $0x90] sm:$0xff]
      %v315 = vld [vmem:[%s284 + $0x98] sm:$0xff]
      %v316 = vld [vmem:[%s284 + $0xa0] sm:$0xff]
      %v317 = vld [vmem:[%s284 + $0xa8] sm:$0xff]
      %v318 = vld [vmem:[%s284 + $0xb0] sm:$0xff]
      %v319 = vld [vmem:[%s284 + $0xb8] sm:$0xff]
      %v320 = vld [vmem:[%s284 + $0xc0] sm:$0xff]
      %v321 = vld [vmem:[%s284 + $0xc8] sm:$0xff]
      %v322 = vld [vmem:[%s284 + $0xd0] sm:$0xff]
      %v323 = vld [vmem:[%s284 + $0xd8] sm:$0xff]
      %v324 = vld [vmem:[%s284 + $0xe0] sm:$0xff]
      %v325 = vld [vmem:[%s284 + $0xe8] sm:$0xff]
      %v326 = vld [vmem:[%s284 + $0xf0] sm:$0xff]
      %v327 = vld [vmem:[%s284 + $0xf8] sm:$0xff]
      %v328 = vld [vmem:[%s1] sm:$0xf]
      %v329 = vld [vmem:[%s2] sm:$0x1]
      %v331 = vperm.slane %v329, 0
      %vm333 = vcmask 31744
      %v335 = vsel %vm333, %v296, 0
      %v338 = vsel %vm333, %v297, 0
      %v341 = vsel %vm333, %v298, 0
      %v344 = vsel %vm333, %v299, 0
      %v347 = vsel %vm333, %v300, 0
      %v350 = vsel %vm333, %v301, 0
      %v353 = vsel %vm333, %v302, 0
      %v356 = vsel %vm333, %v303, 0
      %v359 = vsel %vm333, %v304, 0
      %v362 = vsel %vm333, %v305, 0
      %v365 = vsel %vm333, %v306, 0
      %v368 = vsel %vm333, %v307, 0
      %v371 = vsel %vm333, %v308, 0
      %v374 = vsel %vm333, %v309, 0
      %v377 = vsel %vm333, %v310, 0
      %v380 = vsel %vm333, %v311, 0
      %v383 = vsel %vm333, %v312, 0
      %v386 = vsel %vm333, %v313, 0
      %v389 = vsel %vm333, %v314, 0
      %v392 = vsel %vm333, %v315, 0
      %v395 = vsel %vm333, %v316, 0
      %v398 = vsel %vm333, %v317, 0
      %v401 = vsel %vm333, %v318, 0
      %v404 = vsel %vm333, %v319, 0
      %v407 = vsel %vm333, %v320, 0
      %v410 = vsel %vm333, %v321, 0
      %v413 = vsel %vm333, %v322, 0
      %v416 = vsel %vm333, %v323, 0
      %v419 = vsel %vm333, %v324, 0
      %v422 = vsel %vm333, %v325, 0
      %v425 = vsel %vm333, %v326, 0
      %v428 = vsel %vm333, %v327, 0
      %vm430 = vcmask 1043456
      %v432 = vsel %vm430, %v328, 0
      %434 = vmatpush.msra.mxu0 0.0
      %435 = vmatpush.msra.mxu0 0.0
      %436 = vmatpush.msra.mxu0 0.0
      %437 = vmatpush.msra.mxu0 0.0
      %438 = vmatpush.msra.mxu0 0.0
      %439 = vmatpush.msra.mxu0 0.0
      %440 = vmatpush.msra.mxu0 0.0
      %441 = vmatpush.msra.mxu0 0.0
      %442 = vmatpush.msra.mxu0 0.0
      %443 = vmatpush.msra.mxu0 0.0
      %444 = vmatpush.msra.mxu0 0.0
      %445 = vmatpush.msra.mxu0 0.0
      %446 = vmatpush.msra.mxu0 0.0
      %447 = vmatpush.msra.mxu0 0.0
      %448 = vmatpush.msra.mxu0 0.0
      %449 = vmatpush.msra.mxu0 %v432
      %450 = vmatmul.f32.gmra.mxu0 %v335
      %v451 = vpop.f32.mrf.mxu0
      %v452 = vadd.f32 %v331, %v451
      %453 = vmatmul.f32.gmra.mxu0 %v338
      %v454 = vpop.f32.mrf.mxu0
      %v455 = vadd.f32 %v331, %v454
      %456 = vmatmul.f32.gmra.mxu0 %v341
      %v457 = vpop.f32.mrf.mxu0
      %v458 = vadd.f32 %v331, %v457
      %459 = vmatmul.f32.gmra.mxu0 %v344
      %v460 = vpop.f32.mrf.mxu0
      %v461 = vadd.f32 %v331, %v460
      %462 = vmatmul.f32.gmra.mxu0 %v347
      %v463 = vpop.f32.mrf.mxu0
      %v464 = vadd.f32 %v331, %v463
      %465 = vmatmul.f32.gmra.mxu0 %v350
      %v466 = vpop.f32.mrf.mxu0
      %v467 = vadd.f32 %v331, %v466
      %468 = vmatmul.f32.gmra.mxu0 %v353
      %v469 = vpop.f32.mrf.mxu0
      %v470 = vadd.f32 %v331, %v469
      %471 = vmatmul.f32.gmra.mxu0 %v356
      %v472 = vpop.f32.mrf.mxu0
      %v473 = vadd.f32 %v331, %v472
      %474 = vmatmul.f32.gmra.mxu0 %v359
      %v475 = vpop.f32.mrf.mxu0
      %v476 = vadd.f32 %v331, %v475
      %477 = vmatmul.f32.gmra.mxu0 %v362
      %v478 = vpop.f32.mrf.mxu0
      %v479 = vadd.f32 %v331, %v478
      %480 = vmatmul.f32.gmra.mxu0 %v365
      %v481 = vpop.f32.mrf.mxu0
      %v482 = vadd.f32 %v331, %v481
      %483 = vmatmul.f32.gmra.mxu0 %v368
      %v484 = vpop.f32.mrf.mxu0
      %v485 = vadd.f32 %v331, %v484
      %486 = vmatmul.f32.gmra.mxu0 %v371
      %v487 = vpop.f32.mrf.mxu0
      %v488 = vadd.f32 %v331, %v487
      %489 = vmatmul.f32.gmra.mxu0 %v374
      %v490 = vpop.f32.mrf.mxu0
      %v491 = vadd.f32 %v331, %v490
      %492 = vmatmul.f32.gmra.mxu0 %v377
      %v493 = vpop.f32.mrf.mxu0
      %v494 = vadd.f32 %v331, %v493
      %495 = vmatmul.f32.gmra.mxu0 %v380
      %v496 = vpop.f32.mrf.mxu0
      %v497 = vadd.f32 %v331, %v496
      %498 = vmatmul.f32.gmra.mxu0 %v383
      %v499 = vpop.f32.mrf.mxu0
      %v500 = vadd.f32 %v331, %v499
      %501 = vmatmul.f32.gmra.mxu0 %v386
      %v502 = vpop.f32.mrf.mxu0
      %v503 = vadd.f32 %v331, %v502
      %504 = vmatmul.f32.gmra.mxu0 %v389
      %v505 = vpop.f32.mrf.mxu0
      %v506 = vadd.f32 %v331, %v505
      %507 = vmatmul.f32.gmra.mxu0 %v392
      %v508 = vpop.f32.mrf.mxu0
      %v509 = vadd.f32 %v331, %v508
      %510 = vmatmul.f32.gmra.mxu0 %v395
      %v511 = vpop.f32.mrf.mxu0
      %v512 = vadd.f32 %v331, %v511
      %513 = vmatmul.f32.gmra.mxu0 %v398
      %v514 = vpop.f32.mrf.mxu0
      %v515 = vadd.f32 %v331, %v514
      %516 = vmatmul.f32.gmra.mxu0 %v401
      %v517 = vpop.f32.mrf.mxu0
      %v518 = vadd.f32 %v331, %v517
      %519 = vmatmul.f32.gmra.mxu0 %v404
      %v520 = vpop.f32.mrf.mxu0
      %v521 = vadd.f32 %v331, %v520
      %522 = vmatmul.f32.gmra.mxu0 %v407
      %v523 = vpop.f32.mrf.mxu0
      %v524 = vadd.f32 %v331, %v523
      %525 = vmatmul.f32.gmra.mxu0 %v410
      %v526 = vpop.f32.mrf.mxu0
      %v527 = vadd.f32 %v331, %v526
      %528 = vmatmul.f32.gmra.mxu0 %v413
      %v529 = vpop.f32.mrf.mxu0
      %v530 = vadd.f32 %v331, %v529
      %531 = vmatmul.f32.gmra.mxu0 %v416
      %v532 = vpop.f32.mrf.mxu0
      %v533 = vadd.f32 %v331, %v532
      %534 = vmatmul.f32.gmra.mxu0 %v419
      %v535 = vpop.f32.mrf.mxu0
      %v536 = vadd.f32 %v331, %v535
      %537 = vmatmul.f32.gmra.mxu0 %v422
      %v538 = vpop.f32.mrf.mxu0
      %v539 = vadd.f32 %v331, %v538
      %540 = vmatmul.f32.gmra.mxu0 %v425
      %v541 = vpop.f32.mrf.mxu0
      %v542 = vadd.f32 %v331, %v541
      %543 = vmatmul.f32.gmra.mxu0 %v428
      %v544 = vpop.f32.mrf.mxu0
      %v545 = vadd.f32 %v331, %v544
      %546 = vdwg.mxu0
      %vm547 = vcmask 64512
      %548 = vst.msk [vmem:[#allocation2] sm:$0xff] %vm547, 0.0
      %549 = vst.msk [vmem:[#allocation2 + $0x8] sm:$0xff] %vm547, 0.0
      %vm550 = vcmask 58368
      %551 = vst.msk [vmem:[#allocation2 + $0x10] sm:$0x3] %vm550, 0.0
      %552 = vst.msk [vmem:[#allocation2 + $0x18] sm:$0xff] %vm547, 0.0
      %553 = vst.msk [vmem:[#allocation2 + $0x20] sm:$0xff] %vm547, 0.0
      %554 = vst.msk [vmem:[#allocation2 + $0x28] sm:$0x3] %vm550, 0.0
      %555 = vst.msk [vmem:[#allocation2 + $0x30] sm:$0xff] %vm547, 0.0
      %556 = vst.msk [vmem:[#allocation2 + $0x38] sm:$0xff] %vm547, 0.0
      %557 = vst.msk [vmem:[#allocation2 + $0x40] sm:$0x3] %vm550, 0.0
      %558 = vst.msk [vmem:[#allocation2 + $0x48] sm:$0xff] %vm547, 0.0
      %559 = vst.msk [vmem:[#allocation2 + $0x50] sm:$0xff] %vm547, 0.0
      %560 = vst.msk [vmem:[#allocation2 + $0x58] sm:$0x3] %vm550, 0.0
      %561 = vst.msk [vmem:[#allocation2 + $0x60] sm:$0xff] %vm547, 0.0
      %562 = vst.msk [vmem:[#allocation2 + $0x68] sm:$0xff] %vm547, 0.0
      %563 = vst.msk [vmem:[#allocation2 + $0x70] sm:$0x3] %vm550, 0.0
      %564 = vst.msk [vmem:[#allocation2 + $0x78] sm:$0xff] %vm547, 0.0
      %565 = vst.msk [vmem:[#allocation2 + $0x80] sm:$0xff] %vm547, 0.0
      %566 = vst.msk [vmem:[#allocation2 + $0x88] sm:$0x3] %vm550, 0.0
      %567 = vst.msk [vmem:[#allocation2 + $0x90] sm:$0xff] %vm547, 0.0
      %568 = vst.msk [vmem:[#allocation2 + $0x98] sm:$0xff] %vm547, 0.0
      %569 = vst.msk [vmem:[#allocation2 + $0xa0] sm:$0x3] %vm550, 0.0
      %570 = vst.msk [vmem:[#allocation2 + $0xa8] sm:$0xff] %vm547, 0.0
      %571 = vst.msk [vmem:[#allocation2 + $0xb0] sm:$0xff] %vm547, 0.0
      %572 = vst.msk [vmem:[#allocation2 + $0xb8] sm:$0x3] %vm550, 0.0
      %573 = vst.msk [vmem:[#allocation2 + $0xc0] sm:$0xff] %vm547, 0.0
      %574 = vst.msk [vmem:[#allocation2 + $0xc8] sm:$0xff] %vm547, 0.0
      %575 = vst.msk [vmem:[#allocation2 + $0xd0] sm:$0x3] %vm550, 0.0
      %576 = vst.msk [vmem:[#allocation2 + $0xd8] sm:$0xff] %vm547, 0.0
      %577 = vst.msk [vmem:[#allocation2 + $0xe0] sm:$0xff] %vm547, 0.0
      %578 = vst.msk [vmem:[#allocation2 + $0xe8] sm:$0x3] %vm550, 0.0
      %579 = vst.msk [vmem:[#allocation2 + $0xf0] sm:$0xff] %vm547, 0.0
      %580 = vst.msk [vmem:[#allocation2 + $0xf8] sm:$0xff] %vm547, 0.0
      %581 = vst.msk [vmem:[#allocation2 + $0x100] sm:$0x3] %vm550, 0.0
      %582 = vst.msk [vmem:[#allocation2 + $0x108] sm:$0xff] %vm547, 0.0
      %583 = vst.msk [vmem:[#allocation2 + $0x110] sm:$0xff] %vm547, 0.0
      %584 = vst.msk [vmem:[#allocation2 + $0x118] sm:$0x3] %vm550, 0.0
      %585 = vst.msk [vmem:[#allocation2 + $0x120] sm:$0xff] %vm547, 0.0
      %586 = vst.msk [vmem:[#allocation2 + $0x128] sm:$0xff] %vm547, 0.0
      %587 = vst.msk [vmem:[#allocation2 + $0x130] sm:$0x3] %vm550, 0.0
      %588 = vst.msk [vmem:[#allocation2 + $0x138] sm:$0xff] %vm547, 0.0
      %589 = vst.msk [vmem:[#allocation2 + $0x140] sm:$0xff] %vm547, 0.0
      %590 = vst.msk [vmem:[#allocation2 + $0x148] sm:$0x3] %vm550, 0.0
      %591 = vst.msk [vmem:[#allocation2 + $0x150] sm:$0xff] %vm547, 0.0
      %592 = vst.msk [vmem:[#allocation2 + $0x158] sm:$0xff] %vm547, 0.0
      %593 = vst.msk [vmem:[#allocation2 + $0x160] sm:$0x3] %vm550, 0.0
      %594 = vst.msk [vmem:[#allocation2 + $0x168] sm:$0xff] %vm547, 0.0
      %595 = vst.msk [vmem:[#allocation2 + $0x170] sm:$0xff] %vm547, 0.0
      %596 = vst.msk [vmem:[#allocation2 + $0x178] sm:$0x3] %vm550, 0.0
      %597 = vst.msk [vmem:[#allocation2 + $0x180] sm:$0xff] %vm547, 0.0
      %598 = vst.msk [vmem:[#allocation2 + $0x188] sm:$0xff] %vm547, 0.0
      %599 = vst.msk [vmem:[#allocation2 + $0x190] sm:$0x3] %vm550, 0.0
      %600 = vst.msk [vmem:[#allocation2 + $0x198] sm:$0xff] %vm547, 0.0
      %601 = vst.msk [vmem:[#allocation2 + $0x1a0] sm:$0xff] %vm547, 0.0
      %602 = vst.msk [vmem:[#allocation2 + $0x1a8] sm:$0x3] %vm550, 0.0
      %s603 = scalar_lea.vmem [#allocation2], 24
      %604 = vst.msk [vmem:[%s603 + $0x1] sm:$0xff] %vm547, %v452
      %605 = vst.msk [vmem:[%s603 + $0x9] sm:$0xff] %vm547, %v455
      %606 = vst.msk [vmem:[%s603 + $0x19] sm:$0xff] %vm547, %v458
      %607 = vst.msk [vmem:[%s603 + $0x21] sm:$0xff] %vm547, %v461
      %608 = vst.msk [vmem:[%s603 + $0x31] sm:$0xff] %vm547, %v464
      %609 = vst.msk [vmem:[%s603 + $0x39] sm:$0xff] %vm547, %v467
      %610 = vst.msk [vmem:[%s603 + $0x49] sm:$0xff] %vm547, %v470
      %611 = vst.msk [vmem:[%s603 + $0x51] sm:$0xff] %vm547, %v473
      %612 = vst.msk [vmem:[%s603 + $0x61] sm:$0xff] %vm547, %v476
      %613 = vst.msk [vmem:[%s603 + $0x69] sm:$0xff] %vm547, %v479
      %614 = vst.msk [vmem:[%s603 + $0x79] sm:$0xff] %vm547, %v482
      %615 = vst.msk [vmem:[%s603 + $0x81] sm:$0xff] %vm547, %v485
      %616 = vst.msk [vmem:[%s603 + $0x91] sm:$0xff] %vm547, %v488
      %617 = vst.msk [vmem:[%s603 + $0x99] sm:$0xff] %vm547, %v491
      %618 = vst.msk [vmem:[%s603 + $0xa9] sm:$0xff] %vm547, %v494
      %619 = vst.msk [vmem:[%s603 + $0xb1] sm:$0xff] %vm547, %v497
      %620 = vst.msk [vmem:[%s603 + $0xc1] sm:$0xff] %vm547, %v500
      %621 = vst.msk [vmem:[%s603 + $0xc9] sm:$0xff] %vm547, %v503
      %622 = vst.msk [vmem:[%s603 + $0xd9] sm:$0xff] %vm547, %v506
      %623 = vst.msk [vmem:[%s603 + $0xe1] sm:$0xff] %vm547, %v509
      %624 = vst.msk [vmem:[%s603 + $0xf1] sm:$0xff] %vm547, %v512
      %625 = vst.msk [vmem:[%s603 + $0xf9] sm:$0xff] %vm547, %v515
      %626 = vst.msk [vmem:[%s603 + $0x109] sm:$0xff] %vm547, %v518
      %627 = vst.msk [vmem:[%s603 + $0x111] sm:$0xff] %vm547, %v521
      %628 = vst.msk [vmem:[%s603 + $0x121] sm:$0xff] %vm547, %v524
      %629 = vst.msk [vmem:[%s603 + $0x129] sm:$0xff] %vm547, %v527
      %630 = vst.msk [vmem:[%s603 + $0x139] sm:$0xff] %vm547, %v530
      %631 = vst.msk [vmem:[%s603 + $0x141] sm:$0xff] %vm547, %v533
      %632 = vst.msk [vmem:[%s603 + $0x151] sm:$0xff] %vm547, %v536
      %633 = vst.msk [vmem:[%s603 + $0x159] sm:$0xff] %vm547, %v539
      %634 = vst.msk [vmem:[%s603 + $0x169] sm:$0xff] %vm547, %v542
      %635 = vst.msk [vmem:[%s603 + $0x171] sm:$0xff] %vm547, %v545
      %v636 = vld [vmem:[#allocation2] sm:$0xff]
      %v637 = vld [vmem:[#allocation2 + $0x8] sm:$0xff]
      %v638 = vld [vmem:[#allocation2 + $0x18] sm:$0xff]
      %v639 = vld [vmem:[#allocation2 + $0x20] sm:$0xff]
      %v640 = vld [vmem:[#allocation2 + $0x30] sm:$0xff]
      %v641 = vld [vmem:[#allocation2 + $0x38] sm:$0xff]
      %v642 = vld [vmem:[#allocation2 + $0x48] sm:$0xff]
      %v643 = vld [vmem:[#allocation2 + $0x50] sm:$0xff]
      %v644 = vld [vmem:[#allocation2 + $0x60] sm:$0xff]
      %v645 = vld [vmem:[#allocation2 + $0x68] sm:$0xff]
      %v646 = vld [vmem:[#allocation2 + $0x78] sm:$0xff]
      %v647 = vld [vmem:[#allocation2 + $0x80] sm:$0xff]
      %v648 = vld [vmem:[#allocation2 + $0x90] sm:$0xff]
      %v649 = vld [vmem:[#allocation2 + $0x98] sm:$0xff]
      %v650 = vld [vmem:[#allocation2 + $0xa8] sm:$0xff]
      %v651 = vld [vmem:[#allocation2 + $0xb0] sm:$0xff]
      %v652 = vld [vmem:[#allocation2 + $0xc0] sm:$0xff]
      %v653 = vld [vmem:[#allocation2 + $0xc8] sm:$0xff]
      %v654 = vld [vmem:[#allocation2 + $0xd8] sm:$0xff]
      %v655 = vld [vmem:[#allocation2 + $0xe0] sm:$0xff]
      %v656 = vld [vmem:[#allocation2 + $0xf0] sm:$0xff]
      %v657 = vld [vmem:[#allocation2 + $0xf8] sm:$0xff]
      %v658 = vld [vmem:[#allocation2 + $0x108] sm:$0xff]
      %v659 = vld [vmem:[#allocation2 + $0x110] sm:$0xff]
      %v660 = vld [vmem:[#allocation2 + $0x120] sm:$0xff]
      %v661 = vld [vmem:[#allocation2 + $0x128] sm:$0xff]
      %v662 = vld [vmem:[#allocation2 + $0x138] sm:$0xff]
      %v663 = vld [vmem:[#allocation2 + $0x140] sm:$0xff]
      %v664 = vld [vmem:[#allocation2 + $0x150] sm:$0xff]
      %v665 = vld [vmem:[#allocation2 + $0x158] sm:$0xff]
      %v666 = vld [vmem:[#allocation2 + $0x168] sm:$0xff]
      %v667 = vld [vmem:[#allocation2 + $0x170] sm:$0xff]
      %v668 = vld [vmem:[%s3] sm:$0xff]
      %v669 = vld [vmem:[#allocation2 + $0x1] sm:$0xff]
      %v670 = vld [vmem:[#allocation2 + $0x9] sm:$0xff]
      %v671 = vld [vmem:[#allocation2 + $0x19] sm:$0xff]
      %v672 = vld [vmem:[#allocation2 + $0x21] sm:$0xff]
      %v673 = vld [vmem:[#allocation2 + $0x31] sm:$0xff]
      %v674 = vld [vmem:[#allocation2 + $0x39] sm:$0xff]
      %v675 = vld [vmem:[#allocation2 + $0x49] sm:$0xff]
      %v676 = vld [vmem:[#allocation2 + $0x51] sm:$0xff]
      %v677 = vld [vmem:[#allocation2 + $0x61] sm:$0xff]
      %v678 = vld [vmem:[#allocation2 + $0x69] sm:$0xff]
      %v679 = vld [vmem:[#allocation2 + $0x79] sm:$0xff]
      %v680 = vld [vmem:[#allocation2 + $0x81] sm:$0xff]
      %v681 = vld [vmem:[#allocation2 + $0x91] sm:$0xff]
      %v682 = vld [vmem:[#allocation2 + $0x99] sm:$0xff]
      %v683 = vld [vmem:[#allocation2 + $0xa9] sm:$0xff]
      %v684 = vld [vmem:[#allocation2 + $0xb1] sm:$0xff]
      %v685 = vld [vmem:[#allocation2 + $0xc1] sm:$0xff]
      %v686 = vld [vmem:[#allocation2 + $0xc9] sm:$0xff]
      %v687 = vld [vmem:[#allocation2 + $0xd9] sm:$0xff]
      %v688 = vld [vmem:[#allocation2 + $0xe1] sm:$0xff]
      %v689 = vld [vmem:[#allocation2 + $0xf1] sm:$0xff]
      %v690 = vld [vmem:[#allocation2 + $0xf9] sm:$0xff]
      %v691 = vld [vmem:[#allocation2 + $0x109] sm:$0xff]
      %v692 = vld [vmem:[#allocation2 + $0x111] sm:$0xff]
      %v693 = vld [vmem:[#allocation2 + $0x121] sm:$0xff]
      %v694 = vld [vmem:[#allocation2 + $0x129] sm:$0xff]
      %v695 = vld [vmem:[#allocation2 + $0x139] sm:$0xff]
      %v696 = vld [vmem:[#allocation2 + $0x141] sm:$0xff]
      %v697 = vld [vmem:[#allocation2 + $0x151] sm:$0xff]
      %v698 = vld [vmem:[#allocation2 + $0x159] sm:$0xff]
      %v699 = vld [vmem:[#allocation2 + $0x169] sm:$0xff]
      %v700 = vld [vmem:[#allocation2 + $0x171] sm:$0xff]
      %s701 = scalar_lea.vmem %s3, 8
      %v702 = vld [vmem:[%s701] sm:$0xff]
      %v704 = vsel %vm547, %v669, 0
      %v707 = vsel %vm547, %v670, 0
      %v710 = vsel %vm547, %v671, 0
      %v713 = vsel %vm547, %v672, 0
      %v716 = vsel %vm547, %v673, 0
      %v719 = vsel %vm547, %v674, 0
      %v722 = vsel %vm547, %v675, 0
      %v725 = vsel %vm547, %v676, 0
      %v728 = vsel %vm547, %v677, 0
      %v731 = vsel %vm547, %v678, 0
      %v734 = vsel %vm547, %v679, 0
      %v737 = vsel %vm547, %v680, 0
      %v740 = vsel %vm547, %v681, 0
      %v743 = vsel %vm547, %v682, 0
      %v746 = vsel %vm547, %v683, 0
      %v749 = vsel %vm547, %v684, 0
      %v752 = vsel %vm547, %v685, 0
      %v755 = vsel %vm547, %v686, 0
      %v758 = vsel %vm547, %v687, 0
      %v761 = vsel %vm547, %v688, 0
      %v764 = vsel %vm547, %v689, 0
      %v767 = vsel %vm547, %v690, 0
      %v770 = vsel %vm547, %v691, 0
      %v773 = vsel %vm547, %v692, 0
      %v776 = vsel %vm547, %v693, 0
      %v779 = vsel %vm547, %v694, 0
      %v782 = vsel %vm547, %v695, 0
      %v785 = vsel %vm547, %v696, 0
      %v788 = vsel %vm547, %v697, 0
      %v791 = vsel %vm547, %v698, 0
      %v794 = vsel %vm547, %v699, 0
      %v797 = vsel %vm547, %v700, 0
      %799 = vmatpush.msra.mxu0 0.0
      %800 = vmatpush.msra.mxu0 0.0
      %801 = vmatpush.msra.mxu0 0.0
      %802 = vmatpush.msra.mxu0 0.0
      %803 = vmatpush.msra.mxu0 0.0
      %804 = vmatpush.msra.mxu0 0.0
      %805 = vmatpush.msra.mxu0 0.0
      %806 = vmatpush.msra.mxu0 0.0
      %807 = vmatpush.msra.mxu0 0.0
      %808 = vmatpush.msra.mxu0 0.0
      %809 = vmatpush.msra.mxu0 0.0
      %810 = vmatpush.msra.mxu0 0.0
      %811 = vmatpush.msra.mxu0 0.0
      %812 = vmatpush.msra.mxu0 0.0
      %813 = vmatpush.msra.mxu0 0.0
      %814 = vmatpush.msra.mxu0 %v702
      %815 = vmatmul.f32.gmra.mxu0 %v704
      %v816 = vpop.f32.mrf.mxu0
      %v817 = vadd.f32 0.0, %v816
      %818 = vmatmul.f32.gmra.mxu0 %v707
      %v819 = vpop.f32.mrf.mxu0
      %v820 = vadd.f32 0.0, %v819
      %821 = vmatmul.f32.gmra.mxu0 %v710
      %v822 = vpop.f32.mrf.mxu0
      %v823 = vadd.f32 0.0, %v822
      %824 = vmatmul.f32.gmra.mxu0 %v713
      %v825 = vpop.f32.mrf.mxu0
      %v826 = vadd.f32 0.0, %v825
      %827 = vmatmul.f32.gmra.mxu0 %v716
      %v828 = vpop.f32.mrf.mxu0
      %v829 = vadd.f32 0.0, %v828
      %830 = vmatmul.f32.gmra.mxu0 %v719
      %v831 = vpop.f32.mrf.mxu0
      %v832 = vadd.f32 0.0, %v831
      %833 = vmatmul.f32.gmra.mxu0 %v722
      %v834 = vpop.f32.mrf.mxu0
      %v835 = vadd.f32 0.0, %v834
      %836 = vmatmul.f32.gmra.mxu0 %v725
      %v837 = vpop.f32.mrf.mxu0
      %v838 = vadd.f32 0.0, %v837
      %839 = vmatmul.f32.gmra.mxu0 %v728
      %v840 = vpop.f32.mrf.mxu0
      %v841 = vadd.f32 0.0, %v840
      %842 = vmatmul.f32.gmra.mxu0 %v731
      %v843 = vpop.f32.mrf.mxu0
      %v844 = vadd.f32 0.0, %v843
      %845 = vmatmul.f32.gmra.mxu0 %v734
      %v846 = vpop.f32.mrf.mxu0
      %v847 = vadd.f32 0.0, %v846
      %848 = vmatmul.f32.gmra.mxu0 %v737
      %v849 = vpop.f32.mrf.mxu0
      %v850 = vadd.f32 0.0, %v849
      %851 = vmatmul.f32.gmra.mxu0 %v740
      %v852 = vpop.f32.mrf.mxu0
      %v853 = vadd.f32 0.0, %v852
      %854 = vmatmul.f32.gmra.mxu0 %v743
      %v855 = vpop.f32.mrf.mxu0
      %v856 = vadd.f32 0.0, %v855
      %857 = vmatmul.f32.gmra.mxu0 %v746
      %v858 = vpop.f32.mrf.mxu0
      %v859 = vadd.f32 0.0, %v858
      %860 = vmatmul.f32.gmra.mxu0 %v749
      %v861 = vpop.f32.mrf.mxu0
      %v862 = vadd.f32 0.0, %v861
      %863 = vmatmul.f32.gmra.mxu0 %v752
      %v864 = vpop.f32.mrf.mxu0
      %v865 = vadd.f32 0.0, %v864
      %866 = vmatmul.f32.gmra.mxu0 %v755
      %v867 = vpop.f32.mrf.mxu0
      %v868 = vadd.f32 0.0, %v867
      %869 = vmatmul.f32.gmra.mxu0 %v758
      %v870 = vpop.f32.mrf.mxu0
      %v871 = vadd.f32 0.0, %v870
      %872 = vmatmul.f32.gmra.mxu0 %v761
      %v873 = vpop.f32.mrf.mxu0
      %v874 = vadd.f32 0.0, %v873
      %875 = vmatmul.f32.gmra.mxu0 %v764
      %v876 = vpop.f32.mrf.mxu0
      %v877 = vadd.f32 0.0, %v876
      %878 = vmatmul.f32.gmra.mxu0 %v767
      %v879 = vpop.f32.mrf.mxu0
      %v880 = vadd.f32 0.0, %v879
      %881 = vmatmul.f32.gmra.mxu0 %v770
      %v882 = vpop.f32.mrf.mxu0
      %v883 = vadd.f32 0.0, %v882
      %884 = vmatmul.f32.gmra.mxu0 %v773
      %v885 = vpop.f32.mrf.mxu0
      %v886 = vadd.f32 0.0, %v885
      %887 = vmatmul.f32.gmra.mxu0 %v776
      %v888 = vpop.f32.mrf.mxu0
      %v889 = vadd.f32 0.0, %v888
      %890 = vmatmul.f32.gmra.mxu0 %v779
      %v891 = vpop.f32.mrf.mxu0
      %v892 = vadd.f32 0.0, %v891
      %893 = vmatmul.f32.gmra.mxu0 %v782
      %v894 = vpop.f32.mrf.mxu0
      %v895 = vadd.f32 0.0, %v894
      %896 = vmatmul.f32.gmra.mxu0 %v785
      %v897 = vpop.f32.mrf.mxu0
      %v898 = vadd.f32 0.0, %v897
      %899 = vmatmul.f32.gmra.mxu0 %v788
      %v900 = vpop.f32.mrf.mxu0
      %v901 = vadd.f32 0.0, %v900
      %902 = vmatmul.f32.gmra.mxu0 %v791
      %v903 = vpop.f32.mrf.mxu0
      %v904 = vadd.f32 0.0, %v903
      %905 = vmatmul.f32.gmra.mxu0 %v794
      %v906 = vpop.f32.mrf.mxu0
      %v907 = vadd.f32 0.0, %v906
      %908 = vmatmul.f32.gmra.mxu0 %v797
      %v909 = vpop.f32.mrf.mxu0
      %v910 = vadd.f32 0.0, %v909
      %911 = vdwg.mxu0
      %v913 = vsel %vm547, %v636, 0
      %v916 = vsel %vm547, %v637, 0
      %v919 = vsel %vm547, %v638, 0
      %v922 = vsel %vm547, %v639, 0
      %v925 = vsel %vm547, %v640, 0
      %v928 = vsel %vm547, %v641, 0
      %v931 = vsel %vm547, %v642, 0
      %v934 = vsel %vm547, %v643, 0
      %v937 = vsel %vm547, %v644, 0
      %v940 = vsel %vm547, %v645, 0
      %v943 = vsel %vm547, %v646, 0
      %v946 = vsel %vm547, %v647, 0
      %v949 = vsel %vm547, %v648, 0
      %v952 = vsel %vm547, %v649, 0
      %v955 = vsel %vm547, %v650, 0
      %v958 = vsel %vm547, %v651, 0
      %v961 = vsel %vm547, %v652, 0
      %v964 = vsel %vm547, %v653, 0
      %v967 = vsel %vm547, %v654, 0
      %v970 = vsel %vm547, %v655, 0
      %v973 = vsel %vm547, %v656, 0
      %v976 = vsel %vm547, %v657, 0
      %v979 = vsel %vm547, %v658, 0
      %v982 = vsel %vm547, %v659, 0
      %v985 = vsel %vm547, %v660, 0
      %v988 = vsel %vm547, %v661, 0
      %v991 = vsel %vm547, %v662, 0
      %v994 = vsel %vm547, %v663, 0
      %v997 = vsel %vm547, %v664, 0
      %v1000 = vsel %vm547, %v665, 0
      %v1003 = vsel %vm547, %v666, 0
      %v1006 = vsel %vm547, %v667, 0
      %1008 = vmatpush.msra.mxu0 0.0
      %1009 = vmatpush.msra.mxu0 0.0
      %1010 = vmatpush.msra.mxu0 0.0
      %1011 = vmatpush.msra.mxu0 0.0
      %1012 = vmatpush.msra.mxu0 0.0
      %1013 = vmatpush.msra.mxu0 0.0
      %1014 = vmatpush.msra.mxu0 0.0
      %1015 = vmatpush.msra.mxu0 0.0
      %1016 = vmatpush.msra.mxu0 0.0
      %1017 = vmatpush.msra.mxu0 0.0
      %1018 = vmatpush.msra.mxu0 0.0
      %1019 = vmatpush.msra.mxu0 0.0
      %1020 = vmatpush.msra.mxu0 0.0
      %1021 = vmatpush.msra.mxu0 0.0
      %1022 = vmatpush.msra.mxu0 0.0
      %1023 = vmatpush.msra.mxu0 %v668
      %1024 = vmatmul.f32.gmra.mxu0 %v913
      %v1025 = vpop.f32.mrf.mxu0
      %v1026 = vadd.f32 %v817, %v1025
      %1027 = vmatmul.f32.gmra.mxu0 %v916
      %v1028 = vpop.f32.mrf.mxu0
      %v1029 = vadd.f32 %v820, %v1028
      %1030 = vmatmul.f32.gmra.mxu0 %v919
      %v1031 = vpop.f32.mrf.mxu0
      %v1032 = vadd.f32 %v823, %v1031
      %1033 = vmatmul.f32.gmra.mxu0 %v922
      %v1034 = vpop.f32.mrf.mxu0
      %v1035 = vadd.f32 %v826, %v1034
      %1036 = vmatmul.f32.gmra.mxu0 %v925
      %v1037 = vpop.f32.mrf.mxu0
      %v1038 = vadd.f32 %v829, %v1037
      %1039 = vmatmul.f32.gmra.mxu0 %v928
      %v1040 = vpop.f32.mrf.mxu0
      %v1041 = vadd.f32 %v832, %v1040
      %1042 = vmatmul.f32.gmra.mxu0 %v931
      %v1043 = vpop.f32.mrf.mxu0
      %v1044 = vadd.f32 %v835, %v1043
      %1045 = vmatmul.f32.gmra.mxu0 %v934
      %v1046 = vpop.f32.mrf.mxu0
      %v1047 = vadd.f32 %v838, %v1046
      %1048 = vmatmul.f32.gmra.mxu0 %v937
      %v1049 = vpop.f32.mrf.mxu0
      %v1050 = vadd.f32 %v841, %v1049
      %1051 = vmatmul.f32.gmra.mxu0 %v940
      %v1052 = vpop.f32.mrf.mxu0
      %v1053 = vadd.f32 %v844, %v1052
      %1054 = vmatmul.f32.gmra.mxu0 %v943
      %v1055 = vpop.f32.mrf.mxu0
      %v1056 = vadd.f32 %v847, %v1055
      %1057 = vmatmul.f32.gmra.mxu0 %v946
      %v1058 = vpop.f32.mrf.mxu0
      %v1059 = vadd.f32 %v850, %v1058
      %1060 = vmatmul.f32.gmra.mxu0 %v949
      %v1061 = vpop.f32.mrf.mxu0
      %v1062 = vadd.f32 %v853, %v1061
      %1063 = vmatmul.f32.gmra.mxu0 %v952
      %v1064 = vpop.f32.mrf.mxu0
      %v1065 = vadd.f32 %v856, %v1064
      %1066 = vmatmul.f32.gmra.mxu0 %v955
      %v1067 = vpop.f32.mrf.mxu0
      %v1068 = vadd.f32 %v859, %v1067
      %1069 = vmatmul.f32.gmra.mxu0 %v958
      %v1070 = vpop.f32.mrf.mxu0
      %v1071 = vadd.f32 %v862, %v1070
      %1072 = vmatmul.f32.gmra.mxu0 %v961
      %v1073 = vpop.f32.mrf.mxu0
      %v1074 = vadd.f32 %v865, %v1073
      %1075 = vmatmul.f32.gmra.mxu0 %v964
      %v1076 = vpop.f32.mrf.mxu0
      %v1077 = vadd.f32 %v868, %v1076
      %1078 = vmatmul.f32.gmra.mxu0 %v967
      %v1079 = vpop.f32.mrf.mxu0
      %v1080 = vadd.f32 %v871, %v1079
      %1081 = vmatmul.f32.gmra.mxu0 %v970
      %v1082 = vpop.f32.mrf.mxu0
      %v1083 = vadd.f32 %v874, %v1082
      %1084 = vmatmul.f32.gmra.mxu0 %v973
      %v1085 = vpop.f32.mrf.mxu0
      %v1086 = vadd.f32 %v877, %v1085
      %1087 = vmatmul.f32.gmra.mxu0 %v976
      %v1088 = vpop.f32.mrf.mxu0
      %v1089 = vadd.f32 %v880, %v1088
      %1090 = vmatmul.f32.gmra.mxu0 %v979
      %v1091 = vpop.f32.mrf.mxu0
      %v1092 = vadd.f32 %v883, %v1091
      %1093 = vmatmul.f32.gmra.mxu0 %v982
      %v1094 = vpop.f32.mrf.mxu0
      %v1095 = vadd.f32 %v886, %v1094
      %1096 = vmatmul.f32.gmra.mxu0 %v985
      %v1097 = vpop.f32.mrf.mxu0
      %v1098 = vadd.f32 %v889, %v1097
      %1099 = vmatmul.f32.gmra.mxu0 %v988
      %v1100 = vpop.f32.mrf.mxu0
      %v1101 = vadd.f32 %v892, %v1100
      %1102 = vmatmul.f32.gmra.mxu0 %v991
      %v1103 = vpop.f32.mrf.mxu0
      %v1104 = vadd.f32 %v895, %v1103
      %1105 = vmatmul.f32.gmra.mxu0 %v994
      %v1106 = vpop.f32.mrf.mxu0
      %v1107 = vadd.f32 %v898, %v1106
      %1108 = vmatmul.f32.gmra.mxu0 %v997
      %v1109 = vpop.f32.mrf.mxu0
      %v1110 = vadd.f32 %v901, %v1109
      %1111 = vmatmul.f32.gmra.mxu0 %v1000
      %v1112 = vpop.f32.mrf.mxu0
      %v1113 = vadd.f32 %v904, %v1112
      %1114 = vmatmul.f32.gmra.mxu0 %v1003
      %v1115 = vpop.f32.mrf.mxu0
      %v1116 = vadd.f32 %v907, %v1115
      %1117 = vmatmul.f32.gmra.mxu0 %v1006
      %v1118 = vpop.f32.mrf.mxu0
      %v1119 = vadd.f32 %v910, %v1118
      %1120 = vdwg.mxu0
      %v1121 = vld [vmem:[%s603] sm:$0xff]
      %v1122 = vld [vmem:[%s603 + $0x8] sm:$0xff]
      %v1123 = vld [vmem:[%s603 + $0x18] sm:$0xff]
      %v1124 = vld [vmem:[%s603 + $0x20] sm:$0xff]
      %v1125 = vld [vmem:[%s603 + $0x30] sm:$0xff]
      %v1126 = vld [vmem:[%s603 + $0x38] sm:$0xff]
      %v1127 = vld [vmem:[%s603 + $0x48] sm:$0xff]
      %v1128 = vld [vmem:[%s603 + $0x50] sm:$0xff]
      %v1129 = vld [vmem:[%s603 + $0x60] sm:$0xff]
      %v1130 = vld [vmem:[%s603 + $0x68] sm:$0xff]
      %v1131 = vld [vmem:[%s603 + $0x78] sm:$0xff]
      %v1132 = vld [vmem:[%s603 + $0x80] sm:$0xff]
      %v1133 = vld [vmem:[%s603 + $0x90] sm:$0xff]
      %v1134 = vld [vmem:[%s603 + $0x98] sm:$0xff]
      %v1135 = vld [vmem:[%s603 + $0xa8] sm:$0xff]
      %v1136 = vld [vmem:[%s603 + $0xb0] sm:$0xff]
      %v1137 = vld [vmem:[%s603 + $0xc0] sm:$0xff]
      %v1138 = vld [vmem:[%s603 + $0xc8] sm:$0xff]
      %v1139 = vld [vmem:[%s603 + $0xd8] sm:$0xff]
      %v1140 = vld [vmem:[%s603 + $0xe0] sm:$0xff]
      %v1141 = vld [vmem:[%s603 + $0xf0] sm:$0xff]
      %v1142 = vld [vmem:[%s603 + $0xf8] sm:$0xff]
      %v1143 = vld [vmem:[%s603 + $0x108] sm:$0xff]
      %v1144 = vld [vmem:[%s603 + $0x110] sm:$0xff]
      %v1145 = vld [vmem:[%s603 + $0x120] sm:$0xff]
      %v1146 = vld [vmem:[%s603 + $0x128] sm:$0xff]
      %v1147 = vld [vmem:[%s603 + $0x138] sm:$0xff]
      %v1148 = vld [vmem:[%s603 + $0x140] sm:$0xff]
      %v1149 = vld [vmem:[%s603 + $0x150] sm:$0xff]
      %v1150 = vld [vmem:[%s603 + $0x158] sm:$0xff]
      %v1151 = vld [vmem:[%s603 + $0x168] sm:$0xff]
      %v1152 = vld [vmem:[%s603 + $0x170] sm:$0xff]
      %s1153 = scalar_lea.vmem %s3, 16
      %v1154 = vld [vmem:[%s1153] sm:$0xff]
      %v1156 = vsel %vm547, %v1121, 0
      %v1159 = vsel %vm547, %v1122, 0
      %v1162 = vsel %vm547, %v1123, 0
      %v1165 = vsel %vm547, %v1124, 0
      %v1168 = vsel %vm547, %v1125, 0
      %v1171 = vsel %vm547, %v1126, 0
      %v1174 = vsel %vm547, %v1127, 0
      %v1177 = vsel %vm547, %v1128, 0
      %v1180 = vsel %vm547, %v1129, 0
      %v1183 = vsel %vm547, %v1130, 0
      %v1186 = vsel %vm547, %v1131, 0
      %v1189 = vsel %vm547, %v1132, 0
      %v1192 = vsel %vm547, %v1133, 0
      %v1195 = vsel %vm547, %v1134, 0
      %v1198 = vsel %vm547, %v1135, 0
      %v1201 = vsel %vm547, %v1136, 0
      %v1204 = vsel %vm547, %v1137, 0
      %v1207 = vsel %vm547, %v1138, 0
      %v1210 = vsel %vm547, %v1139, 0
      %v1213 = vsel %vm547, %v1140, 0
      %v1216 = vsel %vm547, %v1141, 0
      %v1219 = vsel %vm547, %v1142, 0
      %v1222 = vsel %vm547, %v1143, 0
      %v1225 = vsel %vm547, %v1144, 0
      %v1228 = vsel %vm547, %v1145, 0
      %v1231 = vsel %vm547, %v1146, 0
      %v1234 = vsel %vm547, %v1147, 0
      %v1237 = vsel %vm547, %v1148, 0
      %v1240 = vsel %vm547, %v1149, 0
      %v1243 = vsel %vm547, %v1150, 0
      %v1246 = vsel %vm547, %v1151, 0
      %v1249 = vsel %vm547, %v1152, 0
      %1251 = vmatpush.msra.mxu0 0.0
      %1252 = vmatpush.msra.mxu0 0.0
      %1253 = vmatpush.msra.mxu0 0.0
      %1254 = vmatpush.msra.mxu0 0.0
      %1255 = vmatpush.msra.mxu0 0.0
      %1256 = vmatpush.msra.mxu0 0.0
      %1257 = vmatpush.msra.mxu0 0.0
      %1258 = vmatpush.msra.mxu0 0.0
      %1259 = vmatpush.msra.mxu0 0.0
      %1260 = vmatpush.msra.mxu0 0.0
      %1261 = vmatpush.msra.mxu0 0.0
      %1262 = vmatpush.msra.mxu0 0.0
      %1263 = vmatpush.msra.mxu0 0.0
      %1264 = vmatpush.msra.mxu0 0.0
      %1265 = vmatpush.msra.mxu0 0.0
      %1266 = vmatpush.msra.mxu0 %v1154
      %1267 = vmatmul.f32.gmra.mxu0 %v1156
      %v1268 = vpop.f32.mrf.mxu0
      %v1269 = vadd.f32 0.0, %v1268
      %1270 = vmatmul.f32.gmra.mxu0 %v1159
      %v1271 = vpop.f32.mrf.mxu0
      %v1272 = vadd.f32 0.0, %v1271
      %1273 = vmatmul.f32.gmra.mxu0 %v1162
      %v1274 = vpop.f32.mrf.mxu0
      %v1275 = vadd.f32 0.0, %v1274
      %1276 = vmatmul.f32.gmra.mxu0 %v1165
      %v1277 = vpop.f32.mrf.mxu0
      %v1278 = vadd.f32 0.0, %v1277
      %1279 = vmatmul.f32.gmra.mxu0 %v1168
      %v1280 = vpop.f32.mrf.mxu0
      %v1281 = vadd.f32 0.0, %v1280
      %1282 = vmatmul.f32.gmra.mxu0 %v1171
      %v1283 = vpop.f32.mrf.mxu0
      %v1284 = vadd.f32 0.0, %v1283
      %1285 = vmatmul.f32.gmra.mxu0 %v1174
      %v1286 = vpop.f32.mrf.mxu0
      %v1287 = vadd.f32 0.0, %v1286
      %1288 = vmatmul.f32.gmra.mxu0 %v1177
      %v1289 = vpop.f32.mrf.mxu0
      %v1290 = vadd.f32 0.0, %v1289
      %1291 = vmatmul.f32.gmra.mxu0 %v1180
      %v1292 = vpop.f32.mrf.mxu0
      %v1293 = vadd.f32 0.0, %v1292
      %1294 = vmatmul.f32.gmra.mxu0 %v1183
      %v1295 = vpop.f32.mrf.mxu0
      %v1296 = vadd.f32 0.0, %v1295
      %1297 = vmatmul.f32.gmra.mxu0 %v1186
      %v1298 = vpop.f32.mrf.mxu0
      %v1299 = vadd.f32 0.0, %v1298
      %1300 = vmatmul.f32.gmra.mxu0 %v1189
      %v1301 = vpop.f32.mrf.mxu0
      %v1302 = vadd.f32 0.0, %v1301
      %1303 = vmatmul.f32.gmra.mxu0 %v1192
      %v1304 = vpop.f32.mrf.mxu0
      %v1305 = vadd.f32 0.0, %v1304
      %1306 = vmatmul.f32.gmra.mxu0 %v1195
      %v1307 = vpop.f32.mrf.mxu0
      %v1308 = vadd.f32 0.0, %v1307
      %1309 = vmatmul.f32.gmra.mxu0 %v1198
      %v1310 = vpop.f32.mrf.mxu0
      %v1311 = vadd.f32 0.0, %v1310
      %1312 = vmatmul.f32.gmra.mxu0 %v1201
      %v1313 = vpop.f32.mrf.mxu0
      %v1314 = vadd.f32 0.0, %v1313
      %1315 = vmatmul.f32.gmra.mxu0 %v1204
      %v1316 = vpop.f32.mrf.mxu0
      %v1317 = vadd.f32 0.0, %v1316
      %1318 = vmatmul.f32.gmra.mxu0 %v1207
      %v1319 = vpop.f32.mrf.mxu0
      %v1320 = vadd.f32 0.0, %v1319
      %1321 = vmatmul.f32.gmra.mxu0 %v1210
      %v1322 = vpop.f32.mrf.mxu0
      %v1323 = vadd.f32 0.0, %v1322
      %1324 = vmatmul.f32.gmra.mxu0 %v1213
      %v1325 = vpop.f32.mrf.mxu0
      %v1326 = vadd.f32 0.0, %v1325
      %1327 = vmatmul.f32.gmra.mxu0 %v1216
      %v1328 = vpop.f32.mrf.mxu0
      %v1329 = vadd.f32 0.0, %v1328
      %1330 = vmatmul.f32.gmra.mxu0 %v1219
      %v1331 = vpop.f32.mrf.mxu0
      %v1332 = vadd.f32 0.0, %v1331
      %1333 = vmatmul.f32.gmra.mxu0 %v1222
      %v1334 = vpop.f32.mrf.mxu0
      %v1335 = vadd.f32 0.0, %v1334
      %1336 = vmatmul.f32.gmra.mxu0 %v1225
      %v1337 = vpop.f32.mrf.mxu0
      %v1338 = vadd.f32 0.0, %v1337
      %1339 = vmatmul.f32.gmra.mxu0 %v1228
      %v1340 = vpop.f32.mrf.mxu0
      %v1341 = vadd.f32 0.0, %v1340
      %1342 = vmatmul.f32.gmra.mxu0 %v1231
      %v1343 = vpop.f32.mrf.mxu0
      %v1344 = vadd.f32 0.0, %v1343
      %1345 = vmatmul.f32.gmra.mxu0 %v1234
      %v1346 = vpop.f32.mrf.mxu0
      %v1347 = vadd.f32 0.0, %v1346
      %1348 = vmatmul.f32.gmra.mxu0 %v1237
      %v1349 = vpop.f32.mrf.mxu0
      %v1350 = vadd.f32 0.0, %v1349
      %1351 = vmatmul.f32.gmra.mxu0 %v1240
      %v1352 = vpop.f32.mrf.mxu0
      %v1353 = vadd.f32 0.0, %v1352
      %1354 = vmatmul.f32.gmra.mxu0 %v1243
      %v1355 = vpop.f32.mrf.mxu0
      %v1356 = vadd.f32 0.0, %v1355
      %1357 = vmatmul.f32.gmra.mxu0 %v1246
      %v1358 = vpop.f32.mrf.mxu0
      %v1359 = vadd.f32 0.0, %v1358
      %1360 = vmatmul.f32.gmra.mxu0 %v1249
      %v1361 = vpop.f32.mrf.mxu0
      %v1362 = vadd.f32 0.0, %v1361
      %1363 = vdwg.mxu0
      %v1364 = vadd.f32 %v1026, %v1269
      %v1365 = vadd.f32 %v1029, %v1272
      %v1366 = vadd.f32 %v1032, %v1275
      %v1367 = vadd.f32 %v1035, %v1278
      %v1368 = vadd.f32 %v1038, %v1281
      %v1369 = vadd.f32 %v1041, %v1284
      %v1370 = vadd.f32 %v1044, %v1287
      %v1371 = vadd.f32 %v1047, %v1290
      %v1372 = vadd.f32 %v1050, %v1293
      %v1373 = vadd.f32 %v1053, %v1296
      %v1374 = vadd.f32 %v1056, %v1299
      %v1375 = vadd.f32 %v1059, %v1302
      %v1376 = vadd.f32 %v1062, %v1305
      %v1377 = vadd.f32 %v1065, %v1308
      %v1378 = vadd.f32 %v1068, %v1311
      %v1379 = vadd.f32 %v1071, %v1314
      %v1380 = vadd.f32 %v1074, %v1317
      %v1381 = vadd.f32 %v1077, %v1320
      %v1382 = vadd.f32 %v1080, %v1323
      %v1383 = vadd.f32 %v1083, %v1326
      %v1384 = vadd.f32 %v1086, %v1329
      %v1385 = vadd.f32 %v1089, %v1332
      %v1386 = vadd.f32 %v1092, %v1335
      %v1387 = vadd.f32 %v1095, %v1338
      %v1388 = vadd.f32 %v1098, %v1341
      %v1389 = vadd.f32 %v1101, %v1344
      %v1390 = vadd.f32 %v1104, %v1347
      %v1391 = vadd.f32 %v1107, %v1350
      %v1392 = vadd.f32 %v1110, %v1353
      %v1393 = vadd.f32 %v1113, %v1356
      %v1394 = vadd.f32 %v1116, %v1359
      %v1395 = vadd.f32 %v1119, %v1362
      %v1396 = vld [vmem:[%s603 + $0x1] sm:$0xff]
      %v1397 = vld [vmem:[%s603 + $0x9] sm:$0xff]
      %v1398 = vld [vmem:[%s603 + $0x19] sm:$0xff]
      %v1399 = vld [vmem:[%s603 + $0x21] sm:$0xff]
      %v1400 = vld [vmem:[%s603 + $0x31] sm:$0xff]
      %v1401 = vld [vmem:[%s603 + $0x39] sm:$0xff]
      %v1402 = vld [vmem:[%s603 + $0x49] sm:$0xff]
      %v1403 = vld [vmem:[%s603 + $0x51] sm:$0xff]
      %v1404 = vld [vmem:[%s603 + $0x61] sm:$0xff]
      %v1405 = vld [vmem:[%s603 + $0x69] sm:$0xff]
      %v1406 = vld [vmem:[%s603 + $0x79] sm:$0xff]
      %v1407 = vld [vmem:[%s603 + $0x81] sm:$0xff]
      %v1408 = vld [vmem:[%s603 + $0x91] sm:$0xff]
      %v1409 = vld [vmem:[%s603 + $0x99] sm:$0xff]
      %v1410 = vld [vmem:[%s603 + $0xa9] sm:$0xff]
      %v1411 = vld [vmem:[%s603 + $0xb1] sm:$0xff]
      %v1412 = vld [vmem:[%s603 + $0xc1] sm:$0xff]
      %v1413 = vld [vmem:[%s603 + $0xc9] sm:$0xff]
      %v1414 = vld [vmem:[%s603 + $0xd9] sm:$0xff]
      %v1415 = vld [vmem:[%s603 + $0xe1] sm:$0xff]
      %v1416 = vld [vmem:[%s603 + $0xf1] sm:$0xff]
      %v1417 = vld [vmem:[%s603 + $0xf9] sm:$0xff]
      %v1418 = vld [vmem:[%s603 + $0x109] sm:$0xff]
      %v1419 = vld [vmem:[%s603 + $0x111] sm:$0xff]
      %v1420 = vld [vmem:[%s603 + $0x121] sm:$0xff]
      %v1421 = vld [vmem:[%s603 + $0x129] sm:$0xff]
      %v1422 = vld [vmem:[%s603 + $0x139] sm:$0xff]
      %v1423 = vld [vmem:[%s603 + $0x141] sm:$0xff]
      %v1424 = vld [vmem:[%s603 + $0x151] sm:$0xff]
      %v1425 = vld [vmem:[%s603 + $0x159] sm:$0xff]
      %v1426 = vld [vmem:[%s603 + $0x169] sm:$0xff]
      %v1427 = vld [vmem:[%s603 + $0x171] sm:$0xff]
      %s1428 = scalar_lea.vmem %s3, 24
      %v1429 = vld [vmem:[%s1428] sm:$0xff]
      %v1431 = vsel %vm547, %v1396, 0
      %v1434 = vsel %vm547, %v1397, 0
      %v1437 = vsel %vm547, %v1398, 0
      %v1440 = vsel %vm547, %v1399, 0
      %v1443 = vsel %vm547, %v1400, 0
      %v1446 = vsel %vm547, %v1401, 0
      %v1449 = vsel %vm547, %v1402, 0
      %v1452 = vsel %vm547, %v1403, 0
      %v1455 = vsel %vm547, %v1404, 0
      %v1458 = vsel %vm547, %v1405, 0
      %v1461 = vsel %vm547, %v1406, 0
      %v1464 = vsel %vm547, %v1407, 0
      %v1467 = vsel %vm547, %v1408, 0
      %v1470 = vsel %vm547, %v1409, 0
      %v1473 = vsel %vm547, %v1410, 0
      %v1476 = vsel %vm547, %v1411, 0
      %v1479 = vsel %vm547, %v1412, 0
      %v1482 = vsel %vm547, %v1413, 0
      %v1485 = vsel %vm547, %v1414, 0
      %v1488 = vsel %vm547, %v1415, 0
      %v1491 = vsel %vm547, %v1416, 0
      %v1494 = vsel %vm547, %v1417, 0
      %v1497 = vsel %vm547, %v1418, 0
      %v1500 = vsel %vm547, %v1419, 0
      %v1503 = vsel %vm547, %v1420, 0
      %v1506 = vsel %vm547, %v1421, 0
      %v1509 = vsel %vm547, %v1422, 0
      %v1512 = vsel %vm547, %v1423, 0
      %v1515 = vsel %vm547, %v1424, 0
      %v1518 = vsel %vm547, %v1425, 0
      %v1521 = vsel %vm547, %v1426, 0
      %v1524 = vsel %vm547, %v1427, 0
      %1526 = vmatpush.msra.mxu0 0.0
      %1527 = vmatpush.msra.mxu0 0.0
      %1528 = vmatpush.msra.mxu0 0.0
      %1529 = vmatpush.msra.mxu0 0.0
      %1530 = vmatpush.msra.mxu0 0.0
      %1531 = vmatpush.msra.mxu0 0.0
      %1532 = vmatpush.msra.mxu0 0.0
      %1533 = vmatpush.msra.mxu0 0.0
      %1534 = vmatpush.msra.mxu0 0.0
      %1535 = vmatpush.msra.mxu0 0.0
      %1536 = vmatpush.msra.mxu0 0.0
      %1537 = vmatpush.msra.mxu0 0.0
      %1538 = vmatpush.msra.mxu0 0.0
      %1539 = vmatpush.msra.mxu0 0.0
      %1540 = vmatpush.msra.mxu0 0.0
      %1541 = vmatpush.msra.mxu0 %v1429
      %1542 = vmatmul.f32.gmra.mxu0 %v1431
      %v1543 = vpop.f32.mrf.mxu0
      %v1544 = vadd.f32 0.0, %v1543
      %1545 = vmatmul.f32.gmra.mxu0 %v1434
      %v1546 = vpop.f32.mrf.mxu0
      %v1547 = vadd.f32 0.0, %v1546
      %1548 = vmatmul.f32.gmra.mxu0 %v1437
      %v1549 = vpop.f32.mrf.mxu0
      %v1550 = vadd.f32 0.0, %v1549
      %1551 = vmatmul.f32.gmra.mxu0 %v1440
      %v1552 = vpop.f32.mrf.mxu0
      %v1553 = vadd.f32 0.0, %v1552
      %1554 = vmatmul.f32.gmra.mxu0 %v1443
      %v1555 = vpop.f32.mrf.mxu0
      %v1556 = vadd.f32 0.0, %v1555
      %1557 = vmatmul.f32.gmra.mxu0 %v1446
      %v1558 = vpop.f32.mrf.mxu0
      %v1559 = vadd.f32 0.0, %v1558
      %1560 = vmatmul.f32.gmra.mxu0 %v1449
      %v1561 = vpop.f32.mrf.mxu0
      %v1562 = vadd.f32 0.0, %v1561
      %1563 = vmatmul.f32.gmra.mxu0 %v1452
      %v1564 = vpop.f32.mrf.mxu0
      %v1565 = vadd.f32 0.0, %v1564
      %1566 = vmatmul.f32.gmra.mxu0 %v1455
      %v1567 = vpop.f32.mrf.mxu0
      %v1568 = vadd.f32 0.0, %v1567
      %1569 = vmatmul.f32.gmra.mxu0 %v1458
      %v1570 = vpop.f32.mrf.mxu0
      %v1571 = vadd.f32 0.0, %v1570
      %1572 = vmatmul.f32.gmra.mxu0 %v1461
      %v1573 = vpop.f32.mrf.mxu0
      %v1574 = vadd.f32 0.0, %v1573
      %1575 = vmatmul.f32.gmra.mxu0 %v1464
      %v1576 = vpop.f32.mrf.mxu0
      %v1577 = vadd.f32 0.0, %v1576
      %1578 = vmatmul.f32.gmra.mxu0 %v1467
      %v1579 = vpop.f32.mrf.mxu0
      %v1580 = vadd.f32 0.0, %v1579
      %1581 = vmatmul.f32.gmra.mxu0 %v1470
      %v1582 = vpop.f32.mrf.mxu0
      %v1583 = vadd.f32 0.0, %v1582
      %1584 = vmatmul.f32.gmra.mxu0 %v1473
      %v1585 = vpop.f32.mrf.mxu0
      %v1586 = vadd.f32 0.0, %v1585
      %1587 = vmatmul.f32.gmra.mxu0 %v1476
      %v1588 = vpop.f32.mrf.mxu0
      %v1589 = vadd.f32 0.0, %v1588
      %1590 = vmatmul.f32.gmra.mxu0 %v1479
      %v1591 = vpop.f32.mrf.mxu0
      %v1592 = vadd.f32 0.0, %v1591
      %1593 = vmatmul.f32.gmra.mxu0 %v1482
      %v1594 = vpop.f32.mrf.mxu0
      %v1595 = vadd.f32 0.0, %v1594
      %1596 = vmatmul.f32.gmra.mxu0 %v1485
      %v1597 = vpop.f32.mrf.mxu0
      %v1598 = vadd.f32 0.0, %v1597
      %1599 = vmatmul.f32.gmra.mxu0 %v1488
      %v1600 = vpop.f32.mrf.mxu0
      %v1601 = vadd.f32 0.0, %v1600
      %1602 = vmatmul.f32.gmra.mxu0 %v1491
      %v1603 = vpop.f32.mrf.mxu0
      %v1604 = vadd.f32 0.0, %v1603
      %1605 = vmatmul.f32.gmra.mxu0 %v1494
      %v1606 = vpop.f32.mrf.mxu0
      %v1607 = vadd.f32 0.0, %v1606
      %1608 = vmatmul.f32.gmra.mxu0 %v1497
      %v1609 = vpop.f32.mrf.mxu0
      %v1610 = vadd.f32 0.0, %v1609
      %1611 = vmatmul.f32.gmra.mxu0 %v1500
      %v1612 = vpop.f32.mrf.mxu0
      %v1613 = vadd.f32 0.0, %v1612
      %1614 = vmatmul.f32.gmra.mxu0 %v1503
      %v1615 = vpop.f32.mrf.mxu0
      %v1616 = vadd.f32 0.0, %v1615
      %1617 = vmatmul.f32.gmra.mxu0 %v1506
      %v1618 = vpop.f32.mrf.mxu0
      %v1619 = vadd.f32 0.0, %v1618
      %1620 = vmatmul.f32.gmra.mxu0 %v1509
      %v1621 = vpop.f32.mrf.mxu0
      %v1622 = vadd.f32 0.0, %v1621
      %1623 = vmatmul.f32.gmra.mxu0 %v1512
      %v1624 = vpop.f32.mrf.mxu0
      %v1625 = vadd.f32 0.0, %v1624
      %1626 = vmatmul.f32.gmra.mxu0 %v1515
      %v1627 = vpop.f32.mrf.mxu0
      %v1628 = vadd.f32 0.0, %v1627
      %1629 = vmatmul.f32.gmra.mxu0 %v1518
      %v1630 = vpop.f32.mrf.mxu0
      %v1631 = vadd.f32 0.0, %v1630
      %1632 = vmatmul.f32.gmra.mxu0 %v1521
      %v1633 = vpop.f32.mrf.mxu0
      %v1634 = vadd.f32 0.0, %v1633
      %1635 = vmatmul.f32.gmra.mxu0 %v1524
      %v1636 = vpop.f32.mrf.mxu0
      %v1637 = vadd.f32 0.0, %v1636
      %1638 = vdwg.mxu0
      %v1639 = vadd.f32 %v1364, %v1544
      %v1640 = vadd.f32 %v1365, %v1547
      %v1641 = vadd.f32 %v1366, %v1550
      %v1642 = vadd.f32 %v1367, %v1553
      %v1643 = vadd.f32 %v1368, %v1556
      %v1644 = vadd.f32 %v1369, %v1559
      %v1645 = vadd.f32 %v1370, %v1562
      %v1646 = vadd.f32 %v1371, %v1565
      %v1647 = vadd.f32 %v1372, %v1568
      %v1648 = vadd.f32 %v1373, %v1571
      %v1649 = vadd.f32 %v1374, %v1574
      %v1650 = vadd.f32 %v1375, %v1577
      %v1651 = vadd.f32 %v1376, %v1580
      %v1652 = vadd.f32 %v1377, %v1583
      %v1653 = vadd.f32 %v1378, %v1586
      %v1654 = vadd.f32 %v1379, %v1589
      %v1655 = vadd.f32 %v1380, %v1592
      %v1656 = vadd.f32 %v1381, %v1595
      %v1657 = vadd.f32 %v1382, %v1598
      %v1658 = vadd.f32 %v1383, %v1601
      %v1659 = vadd.f32 %v1384, %v1604
      %v1660 = vadd.f32 %v1385, %v1607
      %v1661 = vadd.f32 %v1386, %v1610
      %v1662 = vadd.f32 %v1387, %v1613
      %v1663 = vadd.f32 %v1388, %v1616
      %v1664 = vadd.f32 %v1389, %v1619
      %v1665 = vadd.f32 %v1390, %v1622
      %v1666 = vadd.f32 %v1391, %v1625
      %v1667 = vadd.f32 %v1392, %v1628
      %v1668 = vadd.f32 %v1393, %v1631
      %v1669 = vadd.f32 %v1394, %v1634
      %v1670 = vadd.f32 %v1395, %v1637
      %v1671 = vld [vmem:[%s4] sm:$0x1]
      %v1673 = vperm.slane %v1671, 0
      %v1675 = vadd.f32 %v1639, %v1673
      %v1676 = vadd.f32 %v1640, %v1673
      %v1677 = vadd.f32 %v1641, %v1673
      %v1678 = vadd.f32 %v1642, %v1673
      %v1679 = vadd.f32 %v1643, %v1673
      %v1680 = vadd.f32 %v1644, %v1673
      %v1681 = vadd.f32 %v1645, %v1673
      %v1682 = vadd.f32 %v1646, %v1673
      %v1683 = vadd.f32 %v1647, %v1673
      %v1684 = vadd.f32 %v1648, %v1673
      %v1685 = vadd.f32 %v1649, %v1673
      %v1686 = vadd.f32 %v1650, %v1673
      %v1687 = vadd.f32 %v1651, %v1673
      %v1688 = vadd.f32 %v1652, %v1673
      %v1689 = vadd.f32 %v1653, %v1673
      %v1690 = vadd.f32 %v1654, %v1673
      %v1691 = vadd.f32 %v1655, %v1673
      %v1692 = vadd.f32 %v1656, %v1673
      %v1693 = vadd.f32 %v1657, %v1673
      %v1694 = vadd.f32 %v1658, %v1673
      %v1695 = vadd.f32 %v1659, %v1673
      %v1696 = vadd.f32 %v1660, %v1673
      %v1697 = vadd.f32 %v1661, %v1673
      %v1698 = vadd.f32 %v1662, %v1673
      %v1699 = vadd.f32 %v1663, %v1673
      %v1700 = vadd.f32 %v1664, %v1673
      %v1701 = vadd.f32 %v1665, %v1673
      %v1702 = vadd.f32 %v1666, %v1673
      %v1703 = vadd.f32 %v1667, %v1673
      %v1704 = vadd.f32 %v1668, %v1673
      %v1705 = vadd.f32 %v1669, %v1673
      %v1706 = vadd.f32 %v1670, %v1673
      %1707 = vst.msk [vmem:[%s289] sm:$0xff] %vm547, %v1675
      %1708 = vst.msk [vmem:[%s289 + $0x8] sm:$0xff] %vm547, %v1676
      %1709 = vst.msk [vmem:[%s289 + $0x10] sm:$0xff] %vm547, %v1677
      %1710 = vst.msk [vmem:[%s289 + $0x18] sm:$0xff] %vm547, %v1678
      %1711 = vst.msk [vmem:[%s289 + $0x20] sm:$0xff] %vm547, %v1679
      %1712 = vst.msk [vmem:[%s289 + $0x28] sm:$0xff] %vm547, %v1680
      %1713 = vst.msk [vmem:[%s289 + $0x30] sm:$0xff] %vm547, %v1681
      %1714 = vst.msk [vmem:[%s289 + $0x38] sm:$0xff] %vm547, %v1682
      %1715 = vst.msk [vmem:[%s289 + $0x40] sm:$0xff] %vm547, %v1683
      %1716 = vst.msk [vmem:[%s289 + $0x48] sm:$0xff] %vm547, %v1684
      %1717 = vst.msk [vmem:[%s289 + $0x50] sm:$0xff] %vm547, %v1685
      %1718 = vst.msk [vmem:[%s289 + $0x58] sm:$0xff] %vm547, %v1686
      %1719 = vst.msk [vmem:[%s289 + $0x60] sm:$0xff] %vm547, %v1687
      %1720 = vst.msk [vmem:[%s289 + $0x68] sm:$0xff] %vm547, %v1688
      %1721 = vst.msk [vmem:[%s289 + $0x70] sm:$0xff] %vm547, %v1689
      %1722 = vst.msk [vmem:[%s289 + $0x78] sm:$0xff] %vm547, %v1690
      %1723 = vst.msk [vmem:[%s289 + $0x80] sm:$0xff] %vm547, %v1691
      %1724 = vst.msk [vmem:[%s289 + $0x88] sm:$0xff] %vm547, %v1692
      %1725 = vst.msk [vmem:[%s289 + $0x90] sm:$0xff] %vm547, %v1693
      %1726 = vst.msk [vmem:[%s289 + $0x98] sm:$0xff] %vm547, %v1694
      %1727 = vst.msk [vmem:[%s289 + $0xa0] sm:$0xff] %vm547, %v1695
      %1728 = vst.msk [vmem:[%s289 + $0xa8] sm:$0xff] %vm547, %v1696
      %1729 = vst.msk [vmem:[%s289 + $0xb0] sm:$0xff] %vm547, %v1697
      %1730 = vst.msk [vmem:[%s289 + $0xb8] sm:$0xff] %vm547, %v1698
      %1731 = vst.msk [vmem:[%s289 + $0xc0] sm:$0xff] %vm547, %v1699
      %1732 = vst.msk [vmem:[%s289 + $0xc8] sm:$0xff] %vm547, %v1700
      %1733 = vst.msk [vmem:[%s289 + $0xd0] sm:$0xff] %vm547, %v1701
      %1734 = vst.msk [vmem:[%s289 + $0xd8] sm:$0xff] %vm547, %v1702
      %1735 = vst.msk [vmem:[%s289 + $0xe0] sm:$0xff] %vm547, %v1703
      %1736 = vst.msk [vmem:[%s289 + $0xe8] sm:$0xff] %vm547, %v1704
      %1737 = vst.msk [vmem:[%s289 + $0xf0] sm:$0xff] %vm547, %v1705
      %1738 = vst.msk [vmem:[%s289 + $0xf8] sm:$0xff] %vm547, %v1706
      %v1739 = vsel %vm547, %v1675, 0.0
      %v1740 = vsel %vm547, %v1676, 0.0
      %v1741 = vadd.f32 %v1739, %v1740
      %v1742 = vsel %vm547, %v1677, 0.0
      %v1743 = vadd.f32 %v1741, %v1742
      %v1744 = vsel %vm547, %v1678, 0.0
      %v1745 = vadd.f32 %v1743, %v1744
      %v1746 = vsel %vm547, %v1679, 0.0
      %v1747 = vadd.f32 %v1745, %v1746
      %v1748 = vsel %vm547, %v1680, 0.0
      %v1749 = vadd.f32 %v1747, %v1748
      %v1750 = vsel %vm547, %v1681, 0.0
      %v1751 = vadd.f32 %v1749, %v1750
      %v1752 = vsel %vm547, %v1682, 0.0
      %v1753 = vadd.f32 %v1751, %v1752
      %v1754 = vsel %vm547, %v1683, 0.0
      %v1755 = vadd.f32 %v1753, %v1754
      %v1756 = vsel %vm547, %v1684, 0.0
      %v1757 = vadd.f32 %v1755, %v1756
      %v1758 = vsel %vm547, %v1685, 0.0
      %v1759 = vadd.f32 %v1757, %v1758
      %v1760 = vsel %vm547, %v1686, 0.0
      %v1761 = vadd.f32 %v1759, %v1760
      %v1762 = vsel %vm547, %v1687, 0.0
      %v1763 = vadd.f32 %v1761, %v1762
      %v1764 = vsel %vm547, %v1688, 0.0
      %v1765 = vadd.f32 %v1763, %v1764
      %v1766 = vsel %vm547, %v1689, 0.0
      %v1767 = vadd.f32 %v1765, %v1766
      %v1768 = vsel %vm547, %v1690, 0.0
      %v1769 = vadd.f32 %v1767, %v1768
      %v1770 = vsel %vm547, %v1691, 0.0
      %v1771 = vadd.f32 %v1769, %v1770
      %v1772 = vsel %vm547, %v1692, 0.0
      %v1773 = vadd.f32 %v1771, %v1772
      %v1774 = vsel %vm547, %v1693, 0.0
      %v1775 = vadd.f32 %v1773, %v1774
      %v1776 = vsel %vm547, %v1694, 0.0
      %v1777 = vadd.f32 %v1775, %v1776
      %v1778 = vsel %vm547, %v1695, 0.0
      %v1779 = vadd.f32 %v1777, %v1778
      %v1780 = vsel %vm547, %v1696, 0.0
      %v1781 = vadd.f32 %v1779, %v1780
      %v1782 = vsel %vm547, %v1697, 0.0
      %v1783 = vadd.f32 %v1781, %v1782
      %v1784 = vsel %vm547, %v1698, 0.0
      %v1785 = vadd.f32 %v1783, %v1784
      %v1786 = vsel %vm547, %v1699, 0.0
      %v1787 = vadd.f32 %v1785, %v1786
      %v1788 = vsel %vm547, %v1700, 0.0
      %v1789 = vadd.f32 %v1787, %v1788
      %v1790 = vsel %vm547, %v1701, 0.0
      %v1791 = vadd.f32 %v1789, %v1790
      %v1792 = vsel %vm547, %v1702, 0.0
      %v1793 = vadd.f32 %v1791, %v1792
      %v1794 = vsel %vm547, %v1703, 0.0
      %v1795 = vadd.f32 %v1793, %v1794
      %v1796 = vsel %vm547, %v1704, 0.0
      %v1797 = vadd.f32 %v1795, %v1796
      %v1798 = vsel %vm547, %v1705, 0.0
      %v1799 = vadd.f32 %v1797, %v1798
      %v1800 = vsel %vm547, %v1706, 0.0
      %v1801 = vadd.f32 %v1799, %v1800
      %v1802 = vrot.slane %v1801, 4
      %v1803 = vadd.f32 %v1801, %v1802
      %v1804 = vrot.slane %v1803, 2
      %v1805 = vadd.f32 %v1803, %v1804
      %v1806 = vrot.slane %v1805, 1
      %v1807 = vadd.f32 %v1805, %v1806
      %v1808 = vadd.f32 %v1807, 0.0
      %v1809 = vmul.f32 %v1675, %v1675
      %v1810 = vmul.f32 %v1676, %v1676
      %v1811 = vmul.f32 %v1677, %v1677
      %v1812 = vmul.f32 %v1678, %v1678
      %v1813 = vmul.f32 %v1679, %v1679
      %v1814 = vmul.f32 %v1680, %v1680
      %v1815 = vmul.f32 %v1681, %v1681
      %v1816 = vmul.f32 %v1682, %v1682
      %v1817 = vmul.f32 %v1683, %v1683
      %v1818 = vmul.f32 %v1684, %v1684
      %v1819 = vmul.f32 %v1685, %v1685
      %v1820 = vmul.f32 %v1686, %v1686
      %v1821 = vmul.f32 %v1687, %v1687
      %v1822 = vmul.f32 %v1688, %v1688
      %v1823 = vmul.f32 %v1689, %v1689
      %v1824 = vmul.f32 %v1690, %v1690
      %v1825 = vmul.f32 %v1691, %v1691
      %v1826 = vmul.f32 %v1692, %v1692
      %v1827 = vmul.f32 %v1693, %v1693
      %v1828 = vmul.f32 %v1694, %v1694
      %v1829 = vmul.f32 %v1695, %v1695
      %v1830 = vmul.f32 %v1696, %v1696
      %v1831 = vmul.f32 %v1697, %v1697
      %v1832 = vmul.f32 %v1698, %v1698
      %v1833 = vmul.f32 %v1699, %v1699
      %v1834 = vmul.f32 %v1700, %v1700
      %v1835 = vmul.f32 %v1701, %v1701
      %v1836 = vmul.f32 %v1702, %v1702
      %v1837 = vmul.f32 %v1703, %v1703
      %v1838 = vmul.f32 %v1704, %v1704
      %v1839 = vmul.f32 %v1705, %v1705
      %v1840 = vmul.f32 %v1706, %v1706
      %v1841 = vsel %vm547, %v1809, 0.0
      %v1842 = vsel %vm547, %v1810, 0.0
      %v1843 = vadd.f32 %v1841, %v1842
      %v1844 = vsel %vm547, %v1811, 0.0
      %v1845 = vadd.f32 %v1843, %v1844
      %v1846 = vsel %vm547, %v1812, 0.0
      %v1847 = vadd.f32 %v1845, %v1846
      %v1848 = vsel %vm547, %v1813, 0.0
      %v1849 = vadd.f32 %v1847, %v1848
      %v1850 = vsel %vm547, %v1814, 0.0
      %v1851 = vadd.f32 %v1849, %v1850
      %v1852 = vsel %vm547, %v1815, 0.0
      %v1853 = vadd.f32 %v1851, %v1852
      %v1854 = vsel %vm547, %v1816, 0.0
      %v1855 = vadd.f32 %v1853, %v1854
      %v1856 = vsel %vm547, %v1817, 0.0
      %v1857 = vadd.f32 %v1855, %v1856
      %v1858 = vsel %vm547, %v1818, 0.0
      %v1859 = vadd.f32 %v1857, %v1858
      %v1860 = vsel %vm547, %v1819, 0.0
      %v1861 = vadd.f32 %v1859, %v1860
      %v1862 = vsel %vm547, %v1820, 0.0
      %v1863 = vadd.f32 %v1861, %v1862
      %v1864 = vsel %vm547, %v1821, 0.0
      %v1865 = vadd.f32 %v1863, %v1864
      %v1866 = vsel %vm547, %v1822, 0.0
      %v1867 = vadd.f32 %v1865, %v1866
      %v1868 = vsel %vm547, %v1823, 0.0
      %v1869 = vadd.f32 %v1867, %v1868
      %v1870 = vsel %vm547, %v1824, 0.0
      %v1871 = vadd.f32 %v1869, %v1870
      %v1872 = vsel %vm547, %v1825, 0.0
      %v1873 = vadd.f32 %v1871, %v1872
      %v1874 = vsel %vm547, %v1826, 0.0
      %v1875 = vadd.f32 %v1873, %v1874
      %v1876 = vsel %vm547, %v1827, 0.0
      %v1877 = vadd.f32 %v1875, %v1876
      %v1878 = vsel %vm547, %v1828, 0.0
      %v1879 = vadd.f32 %v1877, %v1878
      %v1880 = vsel %vm547, %v1829, 0.0
      %v1881 = vadd.f32 %v1879, %v1880
      %v1882 = vsel %vm547, %v1830, 0.0
      %v1883 = vadd.f32 %v1881, %v1882
      %v1884 = vsel %vm547, %v1831, 0.0
      %v1885 = vadd.f32 %v1883, %v1884
      %v1886 = vsel %vm547, %v1832, 0.0
      %v1887 = vadd.f32 %v1885, %v1886
      %v1888 = vsel %vm547, %v1833, 0.0
      %v1889 = vadd.f32 %v1887, %v1888
      %v1890 = vsel %vm547, %v1834, 0.0
      %v1891 = vadd.f32 %v1889, %v1890
      %v1892 = vsel %vm547, %v1835, 0.0
      %v1893 = vadd.f32 %v1891, %v1892
      %v1894 = vsel %vm547, %v1836, 0.0
      %v1895 = vadd.f32 %v1893, %v1894
      %v1896 = vsel %vm547, %v1837, 0.0
      %v1897 = vadd.f32 %v1895, %v1896
      %v1898 = vsel %vm547, %v1838, 0.0
      %v1899 = vadd.f32 %v1897, %v1898
      %v1900 = vsel %vm547, %v1839, 0.0
      %v1901 = vadd.f32 %v1899, %v1900
      %v1902 = vsel %vm547, %v1840, 0.0
      %v1903 = vadd.f32 %v1901, %v1902
      %v1904 = vrot.slane %v1903, 4
      %v1905 = vadd.f32 %v1903, %v1904
      %v1906 = vrot.slane %v1905, 2
      %v1907 = vadd.f32 %v1905, %v1906
      %v1908 = vrot.slane %v1907, 1
      %v1909 = vadd.f32 %v1907, %v1908
      %v1910 = vadd.f32 %v1909, 0.0
      %v1911 = vld [vmem:[#allocation2 + $0x1] sm:$0xff]
      %v1912 = vld [vmem:[#allocation2 + $0x9] sm:$0xff]
      %v1913 = vld [vmem:[#allocation2 + $0x19] sm:$0xff]
      %v1914 = vld [vmem:[#allocation2 + $0x21] sm:$0xff]
      %v1915 = vld [vmem:[#allocation2 + $0x31] sm:$0xff]
      %v1916 = vld [vmem:[#allocation2 + $0x39] sm:$0xff]
      %v1917 = vld [vmem:[#allocation2 + $0x49] sm:$0xff]
      %v1918 = vld [vmem:[#allocation2 + $0x51] sm:$0xff]
      %v1919 = vld [vmem:[#allocation2 + $0x61] sm:$0xff]
      %v1920 = vld [vmem:[#allocation2 + $0x69] sm:$0xff]
      %v1921 = vld [vmem:[#allocation2 + $0x79] sm:$0xff]
      %v1922 = vld [vmem:[#allocation2 + $0x81] sm:$0xff]
      %v1923 = vld [vmem:[#allocation2 + $0x91] sm:$0xff]
      %v1924 = vld [vmem:[#allocation2 + $0x99] sm:$0xff]
      %v1925 = vld [vmem:[#allocation2 + $0xa9] sm:$0xff]
      %v1926 = vld [vmem:[#allocation2 + $0xb1] sm:$0xff]
      %v1927 = vld [vmem:[#allocation2 + $0xc1] sm:$0xff]
      %v1928 = vld [vmem:[#allocation2 + $0xc9] sm:$0xff]
      %v1929 = vld [vmem:[#allocation2 + $0xd9] sm:$0xff]
      %v1930 = vld [vmem:[#allocation2 + $0xe1] sm:$0xff]
      %v1931 = vld [vmem:[#allocation2 + $0xf1] sm:$0xff]
      %v1932 = vld [vmem:[#allocation2 + $0xf9] sm:$0xff]
      %v1933 = vld [vmem:[#allocation2 + $0x109] sm:$0xff]
      %v1934 = vld [vmem:[#allocation2 + $0x111] sm:$0xff]
      %v1935 = vld [vmem:[#allocation2 + $0x121] sm:$0xff]
      %v1936 = vld [vmem:[#allocation2 + $0x129] sm:$0xff]
      %v1937 = vld [vmem:[#allocation2 + $0x139] sm:$0xff]
      %v1938 = vld [vmem:[#allocation2 + $0x141] sm:$0xff]
      %v1939 = vld [vmem:[#allocation2 + $0x151] sm:$0xff]
      %v1940 = vld [vmem:[#allocation2 + $0x159] sm:$0xff]
      %v1941 = vld [vmem:[#allocation2 + $0x169] sm:$0xff]
      %v1942 = vld [vmem:[#allocation2 + $0x171] sm:$0xff]
      %s1943 = scalar_lea.vmem %s3, 32
      %v1944 = vld [vmem:[%s1943] sm:$0xff]
      %v1945 = vld [vmem:[#allocation2 + $0x2] sm:$0xff]
      %v1946 = vld [vmem:[#allocation2 + $0xa] sm:$0xff]
      %v1947 = vld [vmem:[#allocation2 + $0x1a] sm:$0xff]
      %v1948 = vld [vmem:[#allocation2 + $0x22] sm:$0xff]
      %v1949 = vld [vmem:[#allocation2 + $0x32] sm:$0xff]
      %v1950 = vld [vmem:[#allocation2 + $0x3a] sm:$0xff]
      %v1951 = vld [vmem:[#allocation2 + $0x4a] sm:$0xff]
      %v1952 = vld [vmem:[#allocation2 + $0x52] sm:$0xff]
      %v1953 = vld [vmem:[#allocation2 + $0x62] sm:$0xff]
      %v1954 = vld [vmem:[#allocation2 + $0x6a] sm:$0xff]
      %v1955 = vld [vmem:[#allocation2 + $0x7a] sm:$0xff]
      %v1956 = vld [vmem:[#allocation2 + $0x82] sm:$0xff]
      %v1957 = vld [vmem:[#allocation2 + $0x92] sm:$0xff]
      %v1958 = vld [vmem:[#allocation2 + $0x9a] sm:$0xff]
      %v1959 = vld [vmem:[#allocation2 + $0xaa] sm:$0xff]
      %v1960 = vld [vmem:[#allocation2 + $0xb2] sm:$0xff]
      %v1961 = vld [vmem:[#allocation2 + $0xc2] sm:$0xff]
      %v1962 = vld [vmem:[#allocation2 + $0xca] sm:$0xff]
      %v1963 = vld [vmem:[#allocation2 + $0xda] sm:$0xff]
      %v1964 = vld [vmem:[#allocation2 + $0xe2] sm:$0xff]
      %v1965 = vld [vmem:[#allocation2 + $0xf2] sm:$0xff]
      %v1966 = vld [vmem:[#allocation2 + $0xfa] sm:$0xff]
      %v1967 = vld [vmem:[#allocation2 + $0x10a] sm:$0xff]
      %v1968 = vld [vmem:[#allocation2 + $0x112] sm:$0xff]
      %v1969 = vld [vmem:[#allocation2 + $0x122] sm:$0xff]
      %v1970 = vld [vmem:[#allocation2 + $0x12a] sm:$0xff]
      %v1971 = vld [vmem:[#allocation2 + $0x13a] sm:$0xff]
      %v1972 = vld [vmem:[#allocation2 + $0x142] sm:$0xff]
      %v1973 = vld [vmem:[#allocation2 + $0x152] sm:$0xff]
      %v1974 = vld [vmem:[#allocation2 + $0x15a] sm:$0xff]
      %v1975 = vld [vmem:[#allocation2 + $0x16a] sm:$0xff]
      %v1976 = vld [vmem:[#allocation2 + $0x172] sm:$0xff]
      %s1977 = scalar_lea.vmem %s3, 40
      %v1978 = vld [vmem:[%s1977] sm:$0xff]
      %v1980 = vsel %vm547, %v1945, 0
      %v1983 = vsel %vm547, %v1946, 0
      %v1986 = vsel %vm547, %v1947, 0
      %v1989 = vsel %vm547, %v1948, 0
      %v1992 = vsel %vm547, %v1949, 0
      %v1995 = vsel %vm547, %v1950, 0
      %v1998 = vsel %vm547, %v1951, 0
      %v2001 = vsel %vm547, %v1952, 0
      %v2004 = vsel %vm547, %v1953, 0
      %v2007 = vsel %vm547, %v1954, 0
      %v2010 = vsel %vm547, %v1955, 0
      %v2013 = vsel %vm547, %v1956, 0
      %v2016 = vsel %vm547, %v1957, 0
      %v2019 = vsel %vm547, %v1958, 0
      %v2022 = vsel %vm547, %v1959, 0
      %v2025 = vsel %vm547, %v1960, 0
      %v2028 = vsel %vm547, %v1961, 0
      %v2031 = vsel %vm547, %v1962, 0
      %v2034 = vsel %vm547, %v1963, 0
      %v2037 = vsel %vm547, %v1964, 0
      %v2040 = vsel %vm547, %v1965, 0
      %v2043 = vsel %vm547, %v1966, 0
      %v2046 = vsel %vm547, %v1967, 0
      %v2049 = vsel %vm547, %v1968, 0
      %v2052 = vsel %vm547, %v1969, 0
      %v2055 = vsel %vm547, %v1970, 0
      %v2058 = vsel %vm547, %v1971, 0
      %v2061 = vsel %vm547, %v1972, 0
      %v2064 = vsel %vm547, %v1973, 0
      %v2067 = vsel %vm547, %v1974, 0
      %v2070 = vsel %vm547, %v1975, 0
      %v2073 = vsel %vm547, %v1976, 0
      %2075 = vmatpush.msra.mxu0 0.0
      %2076 = vmatpush.msra.mxu0 0.0
      %2077 = vmatpush.msra.mxu0 0.0
      %2078 = vmatpush.msra.mxu0 0.0
      %2079 = vmatpush.msra.mxu0 0.0
      %2080 = vmatpush.msra.mxu0 0.0
      %2081 = vmatpush.msra.mxu0 0.0
      %2082 = vmatpush.msra.mxu0 0.0
      %2083 = vmatpush.msra.mxu0 0.0
      %2084 = vmatpush.msra.mxu0 0.0
      %2085 = vmatpush.msra.mxu0 0.0
      %2086 = vmatpush.msra.mxu0 0.0
      %2087 = vmatpush.msra.mxu0 0.0
      %2088 = vmatpush.msra.mxu0 0.0
      %2089 = vmatpush.msra.mxu0 0.0
      %2090 = vmatpush.msra.mxu0 %v1978
      %2091 = vmatmul.f32.gmra.mxu0 %v1980
      %v2092 = vpop.f32.mrf.mxu0
      %v2093 = vadd.f32 0.0, %v2092
      %2094 = vmatmul.f32.gmra.mxu0 %v1983
      %v2095 = vpop.f32.mrf.mxu0
      %v2096 = vadd.f32 0.0, %v2095
      %2097 = vmatmul.f32.gmra.mxu0 %v1986
      %v2098 = vpop.f32.mrf.mxu0
      %v2099 = vadd.f32 0.0, %v2098
      %2100 = vmatmul.f32.gmra.mxu0 %v1989
      %v2101 = vpop.f32.mrf.mxu0
      %v2102 = vadd.f32 0.0, %v2101
      %2103 = vmatmul.f32.gmra.mxu0 %v1992
      %v2104 = vpop.f32.mrf.mxu0
      %v2105 = vadd.f32 0.0, %v2104
      %2106 = vmatmul.f32.gmra.mxu0 %v1995
      %v2107 = vpop.f32.mrf.mxu0
      %v2108 = vadd.f32 0.0, %v2107
      %2109 = vmatmul.f32.gmra.mxu0 %v1998
      %v2110 = vpop.f32.mrf.mxu0
      %v2111 = vadd.f32 0.0, %v2110
      %2112 = vmatmul.f32.gmra.mxu0 %v2001
      %v2113 = vpop.f32.mrf.mxu0
      %v2114 = vadd.f32 0.0, %v2113
      %2115 = vmatmul.f32.gmra.mxu0 %v2004
      %v2116 = vpop.f32.mrf.mxu0
      %v2117 = vadd.f32 0.0, %v2116
      %2118 = vmatmul.f32.gmra.mxu0 %v2007
      %v2119 = vpop.f32.mrf.mxu0
      %v2120 = vadd.f32 0.0, %v2119
      %2121 = vmatmul.f32.gmra.mxu0 %v2010
      %v2122 = vpop.f32.mrf.mxu0
      %v2123 = vadd.f32 0.0, %v2122
      %2124 = vmatmul.f32.gmra.mxu0 %v2013
      %v2125 = vpop.f32.mrf.mxu0
      %v2126 = vadd.f32 0.0, %v2125
      %2127 = vmatmul.f32.gmra.mxu0 %v2016
      %v2128 = vpop.f32.mrf.mxu0
      %v2129 = vadd.f32 0.0, %v2128
      %2130 = vmatmul.f32.gmra.mxu0 %v2019
      %v2131 = vpop.f32.mrf.mxu0
      %v2132 = vadd.f32 0.0, %v2131
      %2133 = vmatmul.f32.gmra.mxu0 %v2022
      %v2134 = vpop.f32.mrf.mxu0
      %v2135 = vadd.f32 0.0, %v2134
      %2136 = vmatmul.f32.gmra.mxu0 %v2025
      %v2137 = vpop.f32.mrf.mxu0
      %v2138 = vadd.f32 0.0, %v2137
      %2139 = vmatmul.f32.gmra.mxu0 %v2028
      %v2140 = vpop.f32.mrf.mxu0
      %v2141 = vadd.f32 0.0, %v2140
      %2142 = vmatmul.f32.gmra.mxu0 %v2031
      %v2143 = vpop.f32.mrf.mxu0
      %v2144 = vadd.f32 0.0, %v2143
      %2145 = vmatmul.f32.gmra.mxu0 %v2034
      %v2146 = vpop.f32.mrf.mxu0
      %v2147 = vadd.f32 0.0, %v2146
      %2148 = vmatmul.f32.gmra.mxu0 %v2037
      %v2149 = vpop.f32.mrf.mxu0
      %v2150 = vadd.f32 0.0, %v2149
      %2151 = vmatmul.f32.gmra.mxu0 %v2040
      %v2152 = vpop.f32.mrf.mxu0
      %v2153 = vadd.f32 0.0, %v2152
      %2154 = vmatmul.f32.gmra.mxu0 %v2043
      %v2155 = vpop.f32.mrf.mxu0
      %v2156 = vadd.f32 0.0, %v2155
      %2157 = vmatmul.f32.gmra.mxu0 %v2046
      %v2158 = vpop.f32.mrf.mxu0
      %v2159 = vadd.f32 0.0, %v2158
      %2160 = vmatmul.f32.gmra.mxu0 %v2049
      %v2161 = vpop.f32.mrf.mxu0
      %v2162 = vadd.f32 0.0, %v2161
      %2163 = vmatmul.f32.gmra.mxu0 %v2052
      %v2164 = vpop.f32.mrf.mxu0
      %v2165 = vadd.f32 0.0, %v2164
      %2166 = vmatmul.f32.gmra.mxu0 %v2055
      %v2167 = vpop.f32.mrf.mxu0
      %v2168 = vadd.f32 0.0, %v2167
      %2169 = vmatmul.f32.gmra.mxu0 %v2058
      %v2170 = vpop.f32.mrf.mxu0
      %v2171 = vadd.f32 0.0, %v2170
      %2172 = vmatmul.f32.gmra.mxu0 %v2061
      %v2173 = vpop.f32.mrf.mxu0
      %v2174 = vadd.f32 0.0, %v2173
      %2175 = vmatmul.f32.gmra.mxu0 %v2064
      %v2176 = vpop.f32.mrf.mxu0
      %v2177 = vadd.f32 0.0, %v2176
      %2178 = vmatmul.f32.gmra.mxu0 %v2067
      %v2179 = vpop.f32.mrf.mxu0
      %v2180 = vadd.f32 0.0, %v2179
      %2181 = vmatmul.f32.gmra.mxu0 %v2070
      %v2182 = vpop.f32.mrf.mxu0
      %v2183 = vadd.f32 0.0, %v2182
      %2184 = vmatmul.f32.gmra.mxu0 %v2073
      %v2185 = vpop.f32.mrf.mxu0
      %v2186 = vadd.f32 0.0, %v2185
      %2187 = vdwg.mxu0
      %v2189 = vsel %vm547, %v1911, 0
      %v2192 = vsel %vm547, %v1912, 0
      %v2195 = vsel %vm547, %v1913, 0
      %v2198 = vsel %vm547, %v1914, 0
      %v2201 = vsel %vm547, %v1915, 0
      %v2204 = vsel %vm547, %v1916, 0
      %v2207 = vsel %vm547, %v1917, 0
      %v2210 = vsel %vm547, %v1918, 0
      %v2213 = vsel %vm547, %v1919, 0
      %v2216 = vsel %vm547, %v1920, 0
      %v2219 = vsel %vm547, %v1921, 0
      %v2222 = vsel %vm547, %v1922, 0
      %v2225 = vsel %vm547, %v1923, 0
      %v2228 = vsel %vm547, %v1924, 0
      %v2231 = vsel %vm547, %v1925, 0
      %v2234 = vsel %vm547, %v1926, 0
      %v2237 = vsel %vm547, %v1927, 0
      %v2240 = vsel %vm547, %v1928, 0
      %v2243 = vsel %vm547, %v1929, 0
      %v2246 = vsel %vm547, %v1930, 0
      %v2249 = vsel %vm547, %v1931, 0
      %v2252 = vsel %vm547, %v1932, 0
      %v2255 = vsel %vm547, %v1933, 0
      %v2258 = vsel %vm547, %v1934, 0
      %v2261 = vsel %vm547, %v1935, 0
      %v2264 = vsel %vm547, %v1936, 0
      %v2267 = vsel %vm547, %v1937, 0
      %v2270 = vsel %vm547, %v1938, 0
      %v2273 = vsel %vm547, %v1939, 0
      %v2276 = vsel %vm547, %v1940, 0
      %v2279 = vsel %vm547, %v1941, 0
      %v2282 = vsel %vm547, %v1942, 0
      %2284 = vmatpush.msra.mxu0 0.0
      %2285 = vmatpush.msra.mxu0 0.0
      %2286 = vmatpush.msra.mxu0 0.0
      %2287 = vmatpush.msra.mxu0 0.0
      %2288 = vmatpush.msra.mxu0 0.0
      %2289 = vmatpush.msra.mxu0 0.0
      %2290 = vmatpush.msra.mxu0 0.0
      %2291 = vmatpush.msra.mxu0 0.0
      %2292 = vmatpush.msra.mxu0 0.0
      %2293 = vmatpush.msra.mxu0 0.0
      %2294 = vmatpush.msra.mxu0 0.0
      %2295 = vmatpush.msra.mxu0 0.0
      %2296 = vmatpush.msra.mxu0 0.0
      %2297 = vmatpush.msra.mxu0 0.0
      %2298 = vmatpush.msra.mxu0 0.0
      %2299 = vmatpush.msra.mxu0 %v1944
      %2300 = vmatmul.f32.gmra.mxu0 %v2189
      %v2301 = vpop.f32.mrf.mxu0
      %v2302 = vadd.f32 %v2093, %v2301
      %2303 = vmatmul.f32.gmra.mxu0 %v2192
      %v2304 = vpop.f32.mrf.mxu0
      %v2305 = vadd.f32 %v2096, %v2304
      %2306 = vmatmul.f32.gmra.mxu0 %v2195
      %v2307 = vpop.f32.mrf.mxu0
      %v2308 = vadd.f32 %v2099, %v2307
      %2309 = vmatmul.f32.gmra.mxu0 %v2198
      %v2310 = vpop.f32.mrf.mxu0
      %v2311 = vadd.f32 %v2102, %v2310
      %2312 = vmatmul.f32.gmra.mxu0 %v2201
      %v2313 = vpop.f32.mrf.mxu0
      %v2314 = vadd.f32 %v2105, %v2313
      %2315 = vmatmul.f32.gmra.mxu0 %v2204
      %v2316 = vpop.f32.mrf.mxu0
      %v2317 = vadd.f32 %v2108, %v2316
      %2318 = vmatmul.f32.gmra.mxu0 %v2207
      %v2319 = vpop.f32.mrf.mxu0
      %v2320 = vadd.f32 %v2111, %v2319
      %2321 = vmatmul.f32.gmra.mxu0 %v2210
      %v2322 = vpop.f32.mrf.mxu0
      %v2323 = vadd.f32 %v2114, %v2322
      %2324 = vmatmul.f32.gmra.mxu0 %v2213
      %v2325 = vpop.f32.mrf.mxu0
      %v2326 = vadd.f32 %v2117, %v2325
      %2327 = vmatmul.f32.gmra.mxu0 %v2216
      %v2328 = vpop.f32.mrf.mxu0
      %v2329 = vadd.f32 %v2120, %v2328
      %2330 = vmatmul.f32.gmra.mxu0 %v2219
      %v2331 = vpop.f32.mrf.mxu0
      %v2332 = vadd.f32 %v2123, %v2331
      %2333 = vmatmul.f32.gmra.mxu0 %v2222
      %v2334 = vpop.f32.mrf.mxu0
      %v2335 = vadd.f32 %v2126, %v2334
      %2336 = vmatmul.f32.gmra.mxu0 %v2225
      %v2337 = vpop.f32.mrf.mxu0
      %v2338 = vadd.f32 %v2129, %v2337
      %2339 = vmatmul.f32.gmra.mxu0 %v2228
      %v2340 = vpop.f32.mrf.mxu0
      %v2341 = vadd.f32 %v2132, %v2340
      %2342 = vmatmul.f32.gmra.mxu0 %v2231
      %v2343 = vpop.f32.mrf.mxu0
      %v2344 = vadd.f32 %v2135, %v2343
      %2345 = vmatmul.f32.gmra.mxu0 %v2234
      %v2346 = vpop.f32.mrf.mxu0
      %v2347 = vadd.f32 %v2138, %v2346
      %2348 = vmatmul.f32.gmra.mxu0 %v2237
      %v2349 = vpop.f32.mrf.mxu0
      %v2350 = vadd.f32 %v2141, %v2349
      %2351 = vmatmul.f32.gmra.mxu0 %v2240
      %v2352 = vpop.f32.mrf.mxu0
      %v2353 = vadd.f32 %v2144, %v2352
      %2354 = vmatmul.f32.gmra.mxu0 %v2243
      %v2355 = vpop.f32.mrf.mxu0
      %v2356 = vadd.f32 %v2147, %v2355
      %2357 = vmatmul.f32.gmra.mxu0 %v2246
      %v2358 = vpop.f32.mrf.mxu0
      %v2359 = vadd.f32 %v2150, %v2358
      %2360 = vmatmul.f32.gmra.mxu0 %v2249
      %v2361 = vpop.f32.mrf.mxu0
      %v2362 = vadd.f32 %v2153, %v2361
      %2363 = vmatmul.f32.gmra.mxu0 %v2252
      %v2364 = vpop.f32.mrf.mxu0
      %v2365 = vadd.f32 %v2156, %v2364
      %2366 = vmatmul.f32.gmra.mxu0 %v2255
      %v2367 = vpop.f32.mrf.mxu0
      %v2368 = vadd.f32 %v2159, %v2367
      %2369 = vmatmul.f32.gmra.mxu0 %v2258
      %v2370 = vpop.f32.mrf.mxu0
      %v2371 = vadd.f32 %v2162, %v2370
      %2372 = vmatmul.f32.gmra.mxu0 %v2261
      %v2373 = vpop.f32.mrf.mxu0
      %v2374 = vadd.f32 %v2165, %v2373
      %2375 = vmatmul.f32.gmra.mxu0 %v2264
      %v2376 = vpop.f32.mrf.mxu0
      %v2377 = vadd.f32 %v2168, %v2376
      %2378 = vmatmul.f32.gmra.mxu0 %v2267
      %v2379 = vpop.f32.mrf.mxu0
      %v2380 = vadd.f32 %v2171, %v2379
      %2381 = vmatmul.f32.gmra.mxu0 %v2270
      %v2382 = vpop.f32.mrf.mxu0
      %v2383 = vadd.f32 %v2174, %v2382
      %2384 = vmatmul.f32.gmra.mxu0 %v2273
      %v2385 = vpop.f32.mrf.mxu0
      %v2386 = vadd.f32 %v2177, %v2385
      %2387 = vmatmul.f32.gmra.mxu0 %v2276
      %v2388 = vpop.f32.mrf.mxu0
      %v2389 = vadd.f32 %v2180, %v2388
      %2390 = vmatmul.f32.gmra.mxu0 %v2279
      %v2391 = vpop.f32.mrf.mxu0
      %v2392 = vadd.f32 %v2183, %v2391
      %2393 = vmatmul.f32.gmra.mxu0 %v2282
      %v2394 = vpop.f32.mrf.mxu0
      %v2395 = vadd.f32 %v2186, %v2394
      %2396 = vdwg.mxu0
      %v2397 = vld [vmem:[%s603 + $0x1] sm:$0xff]
      %v2398 = vld [vmem:[%s603 + $0x9] sm:$0xff]
      %v2399 = vld [vmem:[%s603 + $0x19] sm:$0xff]
      %v2400 = vld [vmem:[%s603 + $0x21] sm:$0xff]
      %v2401 = vld [vmem:[%s603 + $0x31] sm:$0xff]
      %v2402 = vld [vmem:[%s603 + $0x39] sm:$0xff]
      %v2403 = vld [vmem:[%s603 + $0x49] sm:$0xff]
      %v2404 = vld [vmem:[%s603 + $0x51] sm:$0xff]
      %v2405 = vld [vmem:[%s603 + $0x61] sm:$0xff]
      %v2406 = vld [vmem:[%s603 + $0x69] sm:$0xff]
      %v2407 = vld [vmem:[%s603 + $0x79] sm:$0xff]
      %v2408 = vld [vmem:[%s603 + $0x81] sm:$0xff]
      %v2409 = vld [vmem:[%s603 + $0x91] sm:$0xff]
      %v2410 = vld [vmem:[%s603 + $0x99] sm:$0xff]
      %v2411 = vld [vmem:[%s603 + $0xa9] sm:$0xff]
      %v2412 = vld [vmem:[%s603 + $0xb1] sm:$0xff]
      %v2413 = vld [vmem:[%s603 + $0xc1] sm:$0xff]
      %v2414 = vld [vmem:[%s603 + $0xc9] sm:$0xff]
      %v2415 = vld [vmem:[%s603 + $0xd9] sm:$0xff]
      %v2416 = vld [vmem:[%s603 + $0xe1] sm:$0xff]
      %v2417 = vld [vmem:[%s603 + $0xf1] sm:$0xff]
      %v2418 = vld [vmem:[%s603 + $0xf9] sm:$0xff]
      %v2419 = vld [vmem:[%s603 + $0x109] sm:$0xff]
      %v2420 = vld [vmem:[%s603 + $0x111] sm:$0xff]
      %v2421 = vld [vmem:[%s603 + $0x121] sm:$0xff]
      %v2422 = vld [vmem:[%s603 + $0x129] sm:$0xff]
      %v2423 = vld [vmem:[%s603 + $0x139] sm:$0xff]
      %v2424 = vld [vmem:[%s603 + $0x141] sm:$0xff]
      %v2425 = vld [vmem:[%s603 + $0x151] sm:$0xff]
      %v2426 = vld [vmem:[%s603 + $0x159] sm:$0xff]
      %v2427 = vld [vmem:[%s603 + $0x169] sm:$0xff]
      %v2428 = vld [vmem:[%s603 + $0x171] sm:$0xff]
      %s2429 = scalar_lea.vmem %s3, 48
      %v2430 = vld [vmem:[%s2429] sm:$0xff]
      %v2432 = vsel %vm547, %v2397, 0
      %v2435 = vsel %vm547, %v2398, 0
      %v2438 = vsel %vm547, %v2399, 0
      %v2441 = vsel %vm547, %v2400, 0
      %v2444 = vsel %vm547, %v2401, 0
      %v2447 = vsel %vm547, %v2402, 0
      %v2450 = vsel %vm547, %v2403, 0
      %v2453 = vsel %vm547, %v2404, 0
      %v2456 = vsel %vm547, %v2405, 0
      %v2459 = vsel %vm547, %v2406, 0
      %v2462 = vsel %vm547, %v2407, 0
      %v2465 = vsel %vm547, %v2408, 0
      %v2468 = vsel %vm547, %v2409, 0
      %v2471 = vsel %vm547, %v2410, 0
      %v2474 = vsel %vm547, %v2411, 0
      %v2477 = vsel %vm547, %v2412, 0
      %v2480 = vsel %vm547, %v2413, 0
      %v2483 = vsel %vm547, %v2414, 0
      %v2486 = vsel %vm547, %v2415, 0
      %v2489 = vsel %vm547, %v2416, 0
      %v2492 = vsel %vm547, %v2417, 0
      %v2495 = vsel %vm547, %v2418, 0
      %v2498 = vsel %vm547, %v2419, 0
      %v2501 = vsel %vm547, %v2420, 0
      %v2504 = vsel %vm547, %v2421, 0
      %v2507 = vsel %vm547, %v2422, 0
      %v2510 = vsel %vm547, %v2423, 0
      %v2513 = vsel %vm547, %v2424, 0
      %v2516 = vsel %vm547, %v2425, 0
      %v2519 = vsel %vm547, %v2426, 0
      %v2522 = vsel %vm547, %v2427, 0
      %v2525 = vsel %vm547, %v2428, 0
      %2527 = vmatpush.msra.mxu0 0.0
      %2528 = vmatpush.msra.mxu0 0.0
      %2529 = vmatpush.msra.mxu0 0.0
      %2530 = vmatpush.msra.mxu0 0.0
      %2531 = vmatpush.msra.mxu0 0.0
      %2532 = vmatpush.msra.mxu0 0.0
      %2533 = vmatpush.msra.mxu0 0.0
      %2534 = vmatpush.msra.mxu0 0.0
      %2535 = vmatpush.msra.mxu0 0.0
      %2536 = vmatpush.msra.mxu0 0.0
      %2537 = vmatpush.msra.mxu0 0.0
      %2538 = vmatpush.msra.mxu0 0.0
      %2539 = vmatpush.msra.mxu0 0.0
      %2540 = vmatpush.msra.mxu0 0.0
      %2541 = vmatpush.msra.mxu0 0.0
      %2542 = vmatpush.msra.mxu0 %v2430
      %2543 = vmatmul.f32.gmra.mxu0 %v2432
      %v2544 = vpop.f32.mrf.mxu0
      %v2545 = vadd.f32 0.0, %v2544
      %2546 = vmatmul.f32.gmra.mxu0 %v2435
      %v2547 = vpop.f32.mrf.mxu0
      %v2548 = vadd.f32 0.0, %v2547
      %2549 = vmatmul.f32.gmra.mxu0 %v2438
      %v2550 = vpop.f32.mrf.mxu0
      %v2551 = vadd.f32 0.0, %v2550
      %2552 = vmatmul.f32.gmra.mxu0 %v2441
      %v2553 = vpop.f32.mrf.mxu0
      %v2554 = vadd.f32 0.0, %v2553
      %2555 = vmatmul.f32.gmra.mxu0 %v2444
      %v2556 = vpop.f32.mrf.mxu0
      %v2557 = vadd.f32 0.0, %v2556
      %2558 = vmatmul.f32.gmra.mxu0 %v2447
      %v2559 = vpop.f32.mrf.mxu0
      %v2560 = vadd.f32 0.0, %v2559
      %2561 = vmatmul.f32.gmra.mxu0 %v2450
      %v2562 = vpop.f32.mrf.mxu0
      %v2563 = vadd.f32 0.0, %v2562
      %2564 = vmatmul.f32.gmra.mxu0 %v2453
      %v2565 = vpop.f32.mrf.mxu0
      %v2566 = vadd.f32 0.0, %v2565
      %2567 = vmatmul.f32.gmra.mxu0 %v2456
      %v2568 = vpop.f32.mrf.mxu0
      %v2569 = vadd.f32 0.0, %v2568
      %2570 = vmatmul.f32.gmra.mxu0 %v2459
      %v2571 = vpop.f32.mrf.mxu0
      %v2572 = vadd.f32 0.0, %v2571
      %2573 = vmatmul.f32.gmra.mxu0 %v2462
      %v2574 = vpop.f32.mrf.mxu0
      %v2575 = vadd.f32 0.0, %v2574
      %2576 = vmatmul.f32.gmra.mxu0 %v2465
      %v2577 = vpop.f32.mrf.mxu0
      %v2578 = vadd.f32 0.0, %v2577
      %2579 = vmatmul.f32.gmra.mxu0 %v2468
      %v2580 = vpop.f32.mrf.mxu0
      %v2581 = vadd.f32 0.0, %v2580
      %2582 = vmatmul.f32.gmra.mxu0 %v2471
      %v2583 = vpop.f32.mrf.mxu0
      %v2584 = vadd.f32 0.0, %v2583
      %2585 = vmatmul.f32.gmra.mxu0 %v2474
      %v2586 = vpop.f32.mrf.mxu0
      %v2587 = vadd.f32 0.0, %v2586
      %2588 = vmatmul.f32.gmra.mxu0 %v2477
      %v2589 = vpop.f32.mrf.mxu0
      %v2590 = vadd.f32 0.0, %v2589
      %2591 = vmatmul.f32.gmra.mxu0 %v2480
      %v2592 = vpop.f32.mrf.mxu0
      %v2593 = vadd.f32 0.0, %v2592
      %2594 = vmatmul.f32.gmra.mxu0 %v2483
      %v2595 = vpop.f32.mrf.mxu0
      %v2596 = vadd.f32 0.0, %v2595
      %2597 = vmatmul.f32.gmra.mxu0 %v2486
      %v2598 = vpop.f32.mrf.mxu0
      %v2599 = vadd.f32 0.0, %v2598
      %2600 = vmatmul.f32.gmra.mxu0 %v2489
      %v2601 = vpop.f32.mrf.mxu0
      %v2602 = vadd.f32 0.0, %v2601
      %2603 = vmatmul.f32.gmra.mxu0 %v2492
      %v2604 = vpop.f32.mrf.mxu0
      %v2605 = vadd.f32 0.0, %v2604
      %2606 = vmatmul.f32.gmra.mxu0 %v2495
      %v2607 = vpop.f32.mrf.mxu0
      %v2608 = vadd.f32 0.0, %v2607
      %2609 = vmatmul.f32.gmra.mxu0 %v2498
      %v2610 = vpop.f32.mrf.mxu0
      %v2611 = vadd.f32 0.0, %v2610
      %2612 = vmatmul.f32.gmra.mxu0 %v2501
      %v2613 = vpop.f32.mrf.mxu0
      %v2614 = vadd.f32 0.0, %v2613
      %2615 = vmatmul.f32.gmra.mxu0 %v2504
      %v2616 = vpop.f32.mrf.mxu0
      %v2617 = vadd.f32 0.0, %v2616
      %2618 = vmatmul.f32.gmra.mxu0 %v2507
      %v2619 = vpop.f32.mrf.mxu0
      %v2620 = vadd.f32 0.0, %v2619
      %2621 = vmatmul.f32.gmra.mxu0 %v2510
      %v2622 = vpop.f32.mrf.mxu0
      %v2623 = vadd.f32 0.0, %v2622
      %2624 = vmatmul.f32.gmra.mxu0 %v2513
      %v2625 = vpop.f32.mrf.mxu0
      %v2626 = vadd.f32 0.0, %v2625
      %2627 = vmatmul.f32.gmra.mxu0 %v2516
      %v2628 = vpop.f32.mrf.mxu0
      %v2629 = vadd.f32 0.0, %v2628
      %2630 = vmatmul.f32.gmra.mxu0 %v2519
      %v2631 = vpop.f32.mrf.mxu0
      %v2632 = vadd.f32 0.0, %v2631
      %2633 = vmatmul.f32.gmra.mxu0 %v2522
      %v2634 = vpop.f32.mrf.mxu0
      %v2635 = vadd.f32 0.0, %v2634
      %2636 = vmatmul.f32.gmra.mxu0 %v2525
      %v2637 = vpop.f32.mrf.mxu0
      %v2638 = vadd.f32 0.0, %v2637
      %2639 = vdwg.mxu0
      %v2640 = vadd.f32 %v2302, %v2545
      %v2641 = vadd.f32 %v2305, %v2548
      %v2642 = vadd.f32 %v2308, %v2551
      %v2643 = vadd.f32 %v2311, %v2554
      %v2644 = vadd.f32 %v2314, %v2557
      %v2645 = vadd.f32 %v2317, %v2560
      %v2646 = vadd.f32 %v2320, %v2563
      %v2647 = vadd.f32 %v2323, %v2566
      %v2648 = vadd.f32 %v2326, %v2569
      %v2649 = vadd.f32 %v2329, %v2572
      %v2650 = vadd.f32 %v2332, %v2575
      %v2651 = vadd.f32 %v2335, %v2578
      %v2652 = vadd.f32 %v2338, %v2581
      %v2653 = vadd.f32 %v2341, %v2584
      %v2654 = vadd.f32 %v2344, %v2587
      %v2655 = vadd.f32 %v2347, %v2590
      %v2656 = vadd.f32 %v2350, %v2593
      %v2657 = vadd.f32 %v2353, %v2596
      %v2658 = vadd.f32 %v2356, %v2599
      %v2659 = vadd.f32 %v2359, %v2602
      %v2660 = vadd.f32 %v2362, %v2605
      %v2661 = vadd.f32 %v2365, %v2608
      %v2662 = vadd.f32 %v2368, %v2611
      %v2663 = vadd.f32 %v2371, %v2614
      %v2664 = vadd.f32 %v2374, %v2617
      %v2665 = vadd.f32 %v2377, %v2620
      %v2666 = vadd.f32 %v2380, %v2623
      %v2667 = vadd.f32 %v2383, %v2626
      %v2668 = vadd.f32 %v2386, %v2629
      %v2669 = vadd.f32 %v2389, %v2632
      %v2670 = vadd.f32 %v2392, %v2635
      %v2671 = vadd.f32 %v2395, %v2638
      %v2672 = vld [vmem:[%s603 + $0x2] sm:$0xff]
      %v2673 = vld [vmem:[%s603 + $0xa] sm:$0xff]
      %v2674 = vld [vmem:[%s603 + $0x1a] sm:$0xff]
      %v2675 = vld [vmem:[%s603 + $0x22] sm:$0xff]
      %v2676 = vld [vmem:[%s603 + $0x32] sm:$0xff]
      %v2677 = vld [vmem:[%s603 + $0x3a] sm:$0xff]
      %v2678 = vld [vmem:[%s603 + $0x4a] sm:$0xff]
      %v2679 = vld [vmem:[%s603 + $0x52] sm:$0xff]
      %v2680 = vld [vmem:[%s603 + $0x62] sm:$0xff]
      %v2681 = vld [vmem:[%s603 + $0x6a] sm:$0xff]
      %v2682 = vld [vmem:[%s603 + $0x7a] sm:$0xff]
      %v2683 = vld [vmem:[%s603 + $0x82] sm:$0xff]
      %v2684 = vld [vmem:[%s603 + $0x92] sm:$0xff]
      %v2685 = vld [vmem:[%s603 + $0x9a] sm:$0xff]
      %v2686 = vld [vmem:[%s603 + $0xaa] sm:$0xff]
      %v2687 = vld [vmem:[%s603 + $0xb2] sm:$0xff]
      %v2688 = vld [vmem:[%s603 + $0xc2] sm:$0xff]
      %v2689 = vld [vmem:[%s603 + $0xca] sm:$0xff]
      %v2690 = vld [vmem:[%s603 + $0xda] sm:$0xff]
      %v2691 = vld [vmem:[%s603 + $0xe2] sm:$0xff]
      %v2692 = vld [vmem:[%s603 + $0xf2] sm:$0xff]
      %v2693 = vld [vmem:[%s603 + $0xfa] sm:$0xff]
      %v2694 = vld [vmem:[%s603 + $0x10a] sm:$0xff]
      %v2695 = vld [vmem:[%s603 + $0x112] sm:$0xff]
      %v2696 = vld [vmem:[%s603 + $0x122] sm:$0xff]
      %v2697 = vld [vmem:[%s603 + $0x12a] sm:$0xff]
      %v2698 = vld [vmem:[%s603 + $0x13a] sm:$0xff]
      %v2699 = vld [vmem:[%s603 + $0x142] sm:$0xff]
      %v2700 = vld [vmem:[%s603 + $0x152] sm:$0xff]
      %v2701 = vld [vmem:[%s603 + $0x15a] sm:$0xff]
      %v2702 = vld [vmem:[%s603 + $0x16a] sm:$0xff]
      %v2703 = vld [vmem:[%s603 + $0x172] sm:$0xff]
      %s2704 = scalar_lea.vmem %s3, 56
      %v2705 = vld [vmem:[%s2704] sm:$0xff]
      %v2707 = vsel %vm547, %v2672, 0
      %v2710 = vsel %vm547, %v2673, 0
      %v2713 = vsel %vm547, %v2674, 0
      %v2716 = vsel %vm547, %v2675, 0
      %v2719 = vsel %vm547, %v2676, 0
      %v2722 = vsel %vm547, %v2677, 0
      %v2725 = vsel %vm547, %v2678, 0
      %v2728 = vsel %vm547, %v2679, 0
      %v2731 = vsel %vm547, %v2680, 0
      %v2734 = vsel %vm547, %v2681, 0
      %v2737 = vsel %vm547, %v2682, 0
      %v2740 = vsel %vm547, %v2683, 0
      %v2743 = vsel %vm547, %v2684, 0
      %v2746 = vsel %vm547, %v2685, 0
      %v2749 = vsel %vm547, %v2686, 0
      %v2752 = vsel %vm547, %v2687, 0
      %v2755 = vsel %vm547, %v2688, 0
      %v2758 = vsel %vm547, %v2689, 0
      %v2761 = vsel %vm547, %v2690, 0
      %v2764 = vsel %vm547, %v2691, 0
      %v2767 = vsel %vm547, %v2692, 0
      %v2770 = vsel %vm547, %v2693, 0
      %v2773 = vsel %vm547, %v2694, 0
      %v2776 = vsel %vm547, %v2695, 0
      %v2779 = vsel %vm547, %v2696, 0
      %v2782 = vsel %vm547, %v2697, 0
      %v2785 = vsel %vm547, %v2698, 0
      %v2788 = vsel %vm547, %v2699, 0
      %v2791 = vsel %vm547, %v2700, 0
      %v2794 = vsel %vm547, %v2701, 0
      %v2797 = vsel %vm547, %v2702, 0
      %v2800 = vsel %vm547, %v2703, 0
      %2802 = vmatpush.msra.mxu0 0.0
      %2803 = vmatpush.msra.mxu0 0.0
      %2804 = vmatpush.msra.mxu0 0.0
      %2805 = vmatpush.msra.mxu0 0.0
      %2806 = vmatpush.msra.mxu0 0.0
      %2807 = vmatpush.msra.mxu0 0.0
      %2808 = vmatpush.msra.mxu0 0.0
      %2809 = vmatpush.msra.mxu0 0.0
      %2810 = vmatpush.msra.mxu0 0.0
      %2811 = vmatpush.msra.mxu0 0.0
      %2812 = vmatpush.msra.mxu0 0.0
      %2813 = vmatpush.msra.mxu0 0.0
      %2814 = vmatpush.msra.mxu0 0.0
      %2815 = vmatpush.msra.mxu0 0.0
      %2816 = vmatpush.msra.mxu0 0.0
      %2817 = vmatpush.msra.mxu0 %v2705
      %2818 = vmatmul.f32.gmra.mxu0 %v2707
      %v2819 = vpop.f32.mrf.mxu0
      %v2820 = vadd.f32 0.0, %v2819
      %2821 = vmatmul.f32.gmra.mxu0 %v2710
      %v2822 = vpop.f32.mrf.mxu0
      %v2823 = vadd.f32 0.0, %v2822
      %2824 = vmatmul.f32.gmra.mxu0 %v2713
      %v2825 = vpop.f32.mrf.mxu0
      %v2826 = vadd.f32 0.0, %v2825
      %2827 = vmatmul.f32.gmra.mxu0 %v2716
      %v2828 = vpop.f32.mrf.mxu0
      %v2829 = vadd.f32 0.0, %v2828
      %2830 = vmatmul.f32.gmra.mxu0 %v2719
      %v2831 = vpop.f32.mrf.mxu0
      %v2832 = vadd.f32 0.0, %v2831
      %2833 = vmatmul.f32.gmra.mxu0 %v2722
      %v2834 = vpop.f32.mrf.mxu0
      %v2835 = vadd.f32 0.0, %v2834
      %2836 = vmatmul.f32.gmra.mxu0 %v2725
      %v2837 = vpop.f32.mrf.mxu0
      %v2838 = vadd.f32 0.0, %v2837
      %2839 = vmatmul.f32.gmra.mxu0 %v2728
      %v2840 = vpop.f32.mrf.mxu0
      %v2841 = vadd.f32 0.0, %v2840
      %2842 = vmatmul.f32.gmra.mxu0 %v2731
      %v2843 = vpop.f32.mrf.mxu0
      %v2844 = vadd.f32 0.0, %v2843
      %2845 = vmatmul.f32.gmra.mxu0 %v2734
      %v2846 = vpop.f32.mrf.mxu0
      %v2847 = vadd.f32 0.0, %v2846
      %2848 = vmatmul.f32.gmra.mxu0 %v2737
      %v2849 = vpop.f32.mrf.mxu0
      %v2850 = vadd.f32 0.0, %v2849
      %2851 = vmatmul.f32.gmra.mxu0 %v2740
      %v2852 = vpop.f32.mrf.mxu0
      %v2853 = vadd.f32 0.0, %v2852
      %2854 = vmatmul.f32.gmra.mxu0 %v2743
      %v2855 = vpop.f32.mrf.mxu0
      %v2856 = vadd.f32 0.0, %v2855
      %2857 = vmatmul.f32.gmra.mxu0 %v2746
      %v2858 = vpop.f32.mrf.mxu0
      %v2859 = vadd.f32 0.0, %v2858
      %2860 = vmatmul.f32.gmra.mxu0 %v2749
      %v2861 = vpop.f32.mrf.mxu0
      %v2862 = vadd.f32 0.0, %v2861
      %2863 = vmatmul.f32.gmra.mxu0 %v2752
      %v2864 = vpop.f32.mrf.mxu0
      %v2865 = vadd.f32 0.0, %v2864
      %2866 = vmatmul.f32.gmra.mxu0 %v2755
      %v2867 = vpop.f32.mrf.mxu0
      %v2868 = vadd.f32 0.0, %v2867
      %2869 = vmatmul.f32.gmra.mxu0 %v2758
      %v2870 = vpop.f32.mrf.mxu0
      %v2871 = vadd.f32 0.0, %v2870
      %2872 = vmatmul.f32.gmra.mxu0 %v2761
      %v2873 = vpop.f32.mrf.mxu0
      %v2874 = vadd.f32 0.0, %v2873
      %2875 = vmatmul.f32.gmra.mxu0 %v2764
      %v2876 = vpop.f32.mrf.mxu0
      %v2877 = vadd.f32 0.0, %v2876
      %2878 = vmatmul.f32.gmra.mxu0 %v2767
      %v2879 = vpop.f32.mrf.mxu0
      %v2880 = vadd.f32 0.0, %v2879
      %2881 = vmatmul.f32.gmra.mxu0 %v2770
      %v2882 = vpop.f32.mrf.mxu0
      %v2883 = vadd.f32 0.0, %v2882
      %2884 = vmatmul.f32.gmra.mxu0 %v2773
      %v2885 = vpop.f32.mrf.mxu0
      %v2886 = vadd.f32 0.0, %v2885
      %2887 = vmatmul.f32.gmra.mxu0 %v2776
      %v2888 = vpop.f32.mrf.mxu0
      %v2889 = vadd.f32 0.0, %v2888
      %2890 = vmatmul.f32.gmra.mxu0 %v2779
      %v2891 = vpop.f32.mrf.mxu0
      %v2892 = vadd.f32 0.0, %v2891
      %2893 = vmatmul.f32.gmra.mxu0 %v2782
      %v2894 = vpop.f32.mrf.mxu0
      %v2895 = vadd.f32 0.0, %v2894
      %2896 = vmatmul.f32.gmra.mxu0 %v2785
      %v2897 = vpop.f32.mrf.mxu0
      %v2898 = vadd.f32 0.0, %v2897
      %2899 = vmatmul.f32.gmra.mxu0 %v2788
      %v2900 = vpop.f32.mrf.mxu0
      %v2901 = vadd.f32 0.0, %v2900
      %2902 = vmatmul.f32.gmra.mxu0 %v2791
      %v2903 = vpop.f32.mrf.mxu0
      %v2904 = vadd.f32 0.0, %v2903
      %2905 = vmatmul.f32.gmra.mxu0 %v2794
      %v2906 = vpop.f32.mrf.mxu0
      %v2907 = vadd.f32 0.0, %v2906
      %2908 = vmatmul.f32.gmra.mxu0 %v2797
      %v2909 = vpop.f32.mrf.mxu0
      %v2910 = vadd.f32 0.0, %v2909
      %2911 = vmatmul.f32.gmra.mxu0 %v2800
      %v2912 = vpop.f32.mrf.mxu0
      %v2913 = vadd.f32 0.0, %v2912
      %2914 = vdwg.mxu0
      %v2915 = vadd.f32 %v2640, %v2820
      %v2916 = vadd.f32 %v2641, %v2823
      %v2917 = vadd.f32 %v2642, %v2826
      %v2918 = vadd.f32 %v2643, %v2829
      %v2919 = vadd.f32 %v2644, %v2832
      %v2920 = vadd.f32 %v2645, %v2835
      %v2921 = vadd.f32 %v2646, %v2838
      %v2922 = vadd.f32 %v2647, %v2841
      %v2923 = vadd.f32 %v2648, %v2844
      %v2924 = vadd.f32 %v2649, %v2847
      %v2925 = vadd.f32 %v2650, %v2850
      %v2926 = vadd.f32 %v2651, %v2853
      %v2927 = vadd.f32 %v2652, %v2856
      %v2928 = vadd.f32 %v2653, %v2859
      %v2929 = vadd.f32 %v2654, %v2862
      %v2930 = vadd.f32 %v2655, %v2865
      %v2931 = vadd.f32 %v2656, %v2868
      %v2932 = vadd.f32 %v2657, %v2871
      %v2933 = vadd.f32 %v2658, %v2874
      %v2934 = vadd.f32 %v2659, %v2877
      %v2935 = vadd.f32 %v2660, %v2880
      %v2936 = vadd.f32 %v2661, %v2883
      %v2937 = vadd.f32 %v2662, %v2886
      %v2938 = vadd.f32 %v2663, %v2889
      %v2939 = vadd.f32 %v2664, %v2892
      %v2940 = vadd.f32 %v2665, %v2895
      %v2941 = vadd.f32 %v2666, %v2898
      %v2942 = vadd.f32 %v2667, %v2901
      %v2943 = vadd.f32 %v2668, %v2904
      %v2944 = vadd.f32 %v2669, %v2907
      %v2945 = vadd.f32 %v2670, %v2910
      %v2946 = vadd.f32 %v2671, %v2913
      %v2947 = vld [vmem:[%s4] sm:$0x1]
      %v2949 = vperm.slane %v2947, 0
      %v2951 = vadd.f32 %v2915, %v2949
      %v2952 = vadd.f32 %v2916, %v2949
      %v2953 = vadd.f32 %v2917, %v2949
      %v2954 = vadd.f32 %v2918, %v2949
      %v2955 = vadd.f32 %v2919, %v2949
      %v2956 = vadd.f32 %v2920, %v2949
      %v2957 = vadd.f32 %v2921, %v2949
      %v2958 = vadd.f32 %v2922, %v2949
      %v2959 = vadd.f32 %v2923, %v2949
      %v2960 = vadd.f32 %v2924, %v2949
      %v2961 = vadd.f32 %v2925, %v2949
      %v2962 = vadd.f32 %v2926, %v2949
      %v2963 = vadd.f32 %v2927, %v2949
      %v2964 = vadd.f32 %v2928, %v2949
      %v2965 = vadd.f32 %v2929, %v2949
      %v2966 = vadd.f32 %v2930, %v2949
      %v2967 = vadd.f32 %v2931, %v2949
      %v2968 = vadd.f32 %v2932, %v2949
      %v2969 = vadd.f32 %v2933, %v2949
      %v2970 = vadd.f32 %v2934, %v2949
      %v2971 = vadd.f32 %v2935, %v2949
      %v2972 = vadd.f32 %v2936, %v2949
      %v2973 = vadd.f32 %v2937, %v2949
      %v2974 = vadd.f32 %v2938, %v2949
      %v2975 = vadd.f32 %v2939, %v2949
      %v2976 = vadd.f32 %v2940, %v2949
      %v2977 = vadd.f32 %v2941, %v2949
      %v2978 = vadd.f32 %v2942, %v2949
      %v2979 = vadd.f32 %v2943, %v2949
      %v2980 = vadd.f32 %v2944, %v2949
      %v2981 = vadd.f32 %v2945, %v2949
      %v2982 = vadd.f32 %v2946, %v2949
      %s2983 = scalar_lea.vmem %s289, 256
      %2984 = vst.msk [vmem:[%s2983] sm:$0xff] %vm547, %v2951
      %2985 = vst.msk [vmem:[%s2983 + $0x8] sm:$0xff] %vm547, %v2952
      %2986 = vst.msk [vmem:[%s2983 + $0x10] sm:$0xff] %vm547, %v2953
      %2987 = vst.msk [vmem:[%s2983 + $0x18] sm:$0xff] %vm547, %v2954
      %2988 = vst.msk [vmem:[%s2983 + $0x20] sm:$0xff] %vm547, %v2955
      %2989 = vst.msk [vmem:[%s2983 + $0x28] sm:$0xff] %vm547, %v2956
      %2990 = vst.msk [vmem:[%s2983 + $0x30] sm:$0xff] %vm547, %v2957
      %2991 = vst.msk [vmem:[%s2983 + $0x38] sm:$0xff] %vm547, %v2958
      %2992 = vst.msk [vmem:[%s2983 + $0x40] sm:$0xff] %vm547, %v2959
      %2993 = vst.msk [vmem:[%s2983 + $0x48] sm:$0xff] %vm547, %v2960
      %2994 = vst.msk [vmem:[%s2983 + $0x50] sm:$0xff] %vm547, %v2961
      %2995 = vst.msk [vmem:[%s2983 + $0x58] sm:$0xff] %vm547, %v2962
      %2996 = vst.msk [vmem:[%s2983 + $0x60] sm:$0xff] %vm547, %v2963
      %2997 = vst.msk [vmem:[%s2983 + $0x68] sm:$0xff] %vm547, %v2964
      %2998 = vst.msk [vmem:[%s2983 + $0x70] sm:$0xff] %vm547, %v2965
      %2999 = vst.msk [vmem:[%s2983 + $0x78] sm:$0xff] %vm547, %v2966
      %3000 = vst.msk [vmem:[%s2983 + $0x80] sm:$0xff] %vm547, %v2967
      %3001 = vst.msk [vmem:[%s2983 + $0x88] sm:$0xff] %vm547, %v2968
      %3002 = vst.msk [vmem:[%s2983 + $0x90] sm:$0xff] %vm547, %v2969
      %3003 = vst.msk [vmem:[%s2983 + $0x98] sm:$0xff] %vm547, %v2970
      %3004 = vst.msk [vmem:[%s2983 + $0xa0] sm:$0xff] %vm547, %v2971
      %3005 = vst.msk [vmem:[%s2983 + $0xa8] sm:$0xff] %vm547, %v2972
      %3006 = vst.msk [vmem:[%s2983 + $0xb0] sm:$0xff] %vm547, %v2973
      %3007 = vst.msk [vmem:[%s2983 + $0xb8] sm:$0xff] %vm547, %v2974
      %3008 = vst.msk [vmem:[%s2983 + $0xc0] sm:$0xff] %vm547, %v2975
      %3009 = vst.msk [vmem:[%s2983 + $0xc8] sm:$0xff] %vm547, %v2976
      %3010 = vst.msk [vmem:[%s2983 + $0xd0] sm:$0xff] %vm547, %v2977
      %3011 = vst.msk [vmem:[%s2983 + $0xd8] sm:$0xff] %vm547, %v2978
      %3012 = vst.msk [vmem:[%s2983 + $0xe0] sm:$0xff] %vm547, %v2979
      %3013 = vst.msk [vmem:[%s2983 + $0xe8] sm:$0xff] %vm547, %v2980
      %3014 = vst.msk [vmem:[%s2983 + $0xf0] sm:$0xff] %vm547, %v2981
      %3015 = vst.msk [vmem:[%s2983 + $0xf8] sm:$0xff] %vm547, %v2982
      %v3016 = vsel %vm547, %v2951, 0.0
      %v3017 = vsel %vm547, %v2952, 0.0
      %v3018 = vadd.f32 %v3016, %v3017
      %v3019 = vsel %vm547, %v2953, 0.0
      %v3020 = vadd.f32 %v3018, %v3019
      %v3021 = vsel %vm547, %v2954, 0.0
      %v3022 = vadd.f32 %v3020, %v3021
      %v3023 = vsel %vm547, %v2955, 0.0
      %v3024 = vadd.f32 %v3022, %v3023
      %v3025 = vsel %vm547, %v2956, 0.0
      %v3026 = vadd.f32 %v3024, %v3025
      %v3027 = vsel %vm547, %v2957, 0.0
      %v3028 = vadd.f32 %v3026, %v3027
      %v3029 = vsel %vm547, %v2958, 0.0
      %v3030 = vadd.f32 %v3028, %v3029
      %v3031 = vsel %vm547, %v2959, 0.0
      %v3032 = vadd.f32 %v3030, %v3031
      %v3033 = vsel %vm547, %v2960, 0.0
      %v3034 = vadd.f32 %v3032, %v3033
      %v3035 = vsel %vm547, %v2961, 0.0
      %v3036 = vadd.f32 %v3034, %v3035
      %v3037 = vsel %vm547, %v2962, 0.0
      %v3038 = vadd.f32 %v3036, %v3037
      %v3039 = vsel %vm547, %v2963, 0.0
      %v3040 = vadd.f32 %v3038, %v3039
      %v3041 = vsel %vm547, %v2964, 0.0
      %v3042 = vadd.f32 %v3040, %v3041
      %v3043 = vsel %vm547, %v2965, 0.0
      %v3044 = vadd.f32 %v3042, %v3043
      %v3045 = vsel %vm547, %v2966, 0.0
      %v3046 = vadd.f32 %v3044, %v3045
      %v3047 = vsel %vm547, %v2967, 0.0
      %v3048 = vadd.f32 %v3046, %v3047
      %v3049 = vsel %vm547, %v2968, 0.0
      %v3050 = vadd.f32 %v3048, %v3049
      %v3051 = vsel %vm547, %v2969, 0.0
      %v3052 = vadd.f32 %v3050, %v3051
      %v3053 = vsel %vm547, %v2970, 0.0
      %v3054 = vadd.f32 %v3052, %v3053
      %v3055 = vsel %vm547, %v2971, 0.0
      %v3056 = vadd.f32 %v3054, %v3055
      %v3057 = vsel %vm547, %v2972, 0.0
      %v3058 = vadd.f32 %v3056, %v3057
      %v3059 = vsel %vm547, %v2973, 0.0
      %v3060 = vadd.f32 %v3058, %v3059
      %v3061 = vsel %vm547, %v2974, 0.0
      %v3062 = vadd.f32 %v3060, %v3061
      %v3063 = vsel %vm547, %v2975, 0.0
      %v3064 = vadd.f32 %v3062, %v3063
      %v3065 = vsel %vm547, %v2976, 0.0
      %v3066 = vadd.f32 %v3064, %v3065
      %v3067 = vsel %vm547, %v2977, 0.0
      %v3068 = vadd.f32 %v3066, %v3067
      %v3069 = vsel %vm547, %v2978, 0.0
      %v3070 = vadd.f32 %v3068, %v3069
      %v3071 = vsel %vm547, %v2979, 0.0
      %v3072 = vadd.f32 %v3070, %v3071
      %v3073 = vsel %vm547, %v2980, 0.0
      %v3074 = vadd.f32 %v3072, %v3073
      %v3075 = vsel %vm547, %v2981, 0.0
      %v3076 = vadd.f32 %v3074, %v3075
      %v3077 = vsel %vm547, %v2982, 0.0
      %v3078 = vadd.f32 %v3076, %v3077
      %v3079 = vrot.slane %v3078, 4
      %v3080 = vadd.f32 %v3078, %v3079
      %v3081 = vrot.slane %v3080, 2
      %v3082 = vadd.f32 %v3080, %v3081
      %v3083 = vrot.slane %v3082, 1
      %v3084 = vadd.f32 %v3082, %v3083
      %v3085 = vadd.f32 %v1808, %v3084
      %v3086 = vmul.f32 %v2951, %v2951
      %v3087 = vmul.f32 %v2952, %v2952
      %v3088 = vmul.f32 %v2953, %v2953
      %v3089 = vmul.f32 %v2954, %v2954
      %v3090 = vmul.f32 %v2955, %v2955
      %v3091 = vmul.f32 %v2956, %v2956
      %v3092 = vmul.f32 %v2957, %v2957
      %v3093 = vmul.f32 %v2958, %v2958
      %v3094 = vmul.f32 %v2959, %v2959
      %v3095 = vmul.f32 %v2960, %v2960
      %v3096 = vmul.f32 %v2961, %v2961
      %v3097 = vmul.f32 %v2962, %v2962
      %v3098 = vmul.f32 %v2963, %v2963
      %v3099 = vmul.f32 %v2964, %v2964
      %v3100 = vmul.f32 %v2965, %v2965
      %v3101 = vmul.f32 %v2966, %v2966
      %v3102 = vmul.f32 %v2967, %v2967
      %v3103 = vmul.f32 %v2968, %v2968
      %v3104 = vmul.f32 %v2969, %v2969
      %v3105 = vmul.f32 %v2970, %v2970
      %v3106 = vmul.f32 %v2971, %v2971
      %v3107 = vmul.f32 %v2972, %v2972
      %v3108 = vmul.f32 %v2973, %v2973
      %v3109 = vmul.f32 %v2974, %v2974
      %v3110 = vmul.f32 %v2975, %v2975
      %v3111 = vmul.f32 %v2976, %v2976
      %v3112 = vmul.f32 %v2977, %v2977
      %v3113 = vmul.f32 %v2978, %v2978
      %v3114 = vmul.f32 %v2979, %v2979
      %v3115 = vmul.f32 %v2980, %v2980
      %v3116 = vmul.f32 %v2981, %v2981
      %v3117 = vmul.f32 %v2982, %v2982
      %v3118 = vsel %vm547, %v3086, 0.0
      %v3119 = vsel %vm547, %v3087, 0.0
      %v3120 = vadd.f32 %v3118, %v3119
      %v3121 = vsel %vm547, %v3088, 0.0
      %v3122 = vadd.f32 %v3120, %v3121
      %v3123 = vsel %vm547, %v3089, 0.0
      %v3124 = vadd.f32 %v3122, %v3123
      %v3125 = vsel %vm547, %v3090, 0.0
      %v3126 = vadd.f32 %v3124, %v3125
      %v3127 = vsel %vm547, %v3091, 0.0
      %v3128 = vadd.f32 %v3126, %v3127
      %v3129 = vsel %vm547, %v3092, 0.0
      %v3130 = vadd.f32 %v3128, %v3129
      %v3131 = vsel %vm547, %v3093, 0.0
      %v3132 = vadd.f32 %v3130, %v3131
      %v3133 = vsel %vm547, %v3094, 0.0
      %v3134 = vadd.f32 %v3132, %v3133
      %v3135 = vsel %vm547, %v3095, 0.0
      %v3136 = vadd.f32 %v3134, %v3135
      %v3137 = vsel %vm547, %v3096, 0.0
      %v3138 = vadd.f32 %v3136, %v3137
      %v3139 = vsel %vm547, %v3097, 0.0
      %v3140 = vadd.f32 %v3138, %v3139
      %v3141 = vsel %vm547, %v3098, 0.0
      %v3142 = vadd.f32 %v3140, %v3141
      %v3143 = vsel %vm547, %v3099, 0.0
      %v3144 = vadd.f32 %v3142, %v3143
      %v3145 = vsel %vm547, %v3100, 0.0
      %v3146 = vadd.f32 %v3144, %v3145
      %v3147 = vsel %vm547, %v3101, 0.0
      %v3148 = vadd.f32 %v3146, %v3147
      %v3149 = vsel %vm547, %v3102, 0.0
      %v3150 = vadd.f32 %v3148, %v3149
      %v3151 = vsel %vm547, %v3103, 0.0
      %v3152 = vadd.f32 %v3150, %v3151
      %v3153 = vsel %vm547, %v3104, 0.0
      %v3154 = vadd.f32 %v3152, %v3153
      %v3155 = vsel %vm547, %v3105, 0.0
      %v3156 = vadd.f32 %v3154, %v3155
      %v3157 = vsel %vm547, %v3106, 0.0
      %v3158 = vadd.f32 %v3156, %v3157
      %v3159 = vsel %vm547, %v3107, 0.0
      %v3160 = vadd.f32 %v3158, %v3159
      %v3161 = vsel %vm547, %v3108, 0.0
      %v3162 = vadd.f32 %v3160, %v3161
      %v3163 = vsel %vm547, %v3109, 0.0
      %v3164 = vadd.f32 %v3162, %v3163
      %v3165 = vsel %vm547, %v3110, 0.0
      %v3166 = vadd.f32 %v3164, %v3165
      %v3167 = vsel %vm547, %v3111, 0.0
      %v3168 = vadd.f32 %v3166, %v3167
      %v3169 = vsel %vm547, %v3112, 0.0
      %v3170 = vadd.f32 %v3168, %v3169
      %v3171 = vsel %vm547, %v3113, 0.0
      %v3172 = vadd.f32 %v3170, %v3171
      %v3173 = vsel %vm547, %v3114, 0.0
      %v3174 = vadd.f32 %v3172, %v3173
      %v3175 = vsel %vm547, %v3115, 0.0
      %v3176 = vadd.f32 %v3174, %v3175
      %v3177 = vsel %vm547, %v3116, 0.0
      %v3178 = vadd.f32 %v3176, %v3177
      %v3179 = vsel %vm547, %v3117, 0.0
      %v3180 = vadd.f32 %v3178, %v3179
      %v3181 = vrot.slane %v3180, 4
      %v3182 = vadd.f32 %v3180, %v3181
      %v3183 = vrot.slane %v3182, 2
      %v3184 = vadd.f32 %v3182, %v3183
      %v3185 = vrot.slane %v3184, 1
      %v3186 = vadd.f32 %v3184, %v3185
      %v3187 = vadd.f32 %v1910, %v3186
      %v3188 = vld [vmem:[%s603] sm:$0xff]
      %v3189 = vld [vmem:[%s603 + $0x8] sm:$0xff]
      %v3190 = vld [vmem:[%s603 + $0x18] sm:$0xff]
      %v3191 = vld [vmem:[%s603 + $0x20] sm:$0xff]
      %v3192 = vld [vmem:[%s603 + $0x30] sm:$0xff]
      %v3193 = vld [vmem:[%s603 + $0x38] sm:$0xff]
      %v3194 = vld [vmem:[%s603 + $0x48] sm:$0xff]
      %v3195 = vld [vmem:[%s603 + $0x50] sm:$0xff]
      %v3196 = vld [vmem:[%s603 + $0x60] sm:$0xff]
      %v3197 = vld [vmem:[%s603 + $0x68] sm:$0xff]
      %v3198 = vld [vmem:[%s603 + $0x78] sm:$0xff]
      %v3199 = vld [vmem:[%s603 + $0x80] sm:$0xff]
      %v3200 = vld [vmem:[%s603 + $0x90] sm:$0xff]
      %v3201 = vld [vmem:[%s603 + $0x98] sm:$0xff]
      %v3202 = vld [vmem:[%s603 + $0xa8] sm:$0xff]
      %v3203 = vld [vmem:[%s603 + $0xb0] sm:$0xff]
      %v3204 = vld [vmem:[%s603 + $0xc0] sm:$0xff]
      %v3205 = vld [vmem:[%s603 + $0xc8] sm:$0xff]
      %v3206 = vld [vmem:[%s603 + $0xd8] sm:$0xff]
      %v3207 = vld [vmem:[%s603 + $0xe0] sm:$0xff]
      %v3208 = vld [vmem:[%s603 + $0xf0] sm:$0xff]
      %v3209 = vld [vmem:[%s603 + $0xf8] sm:$0xff]
      %v3210 = vld [vmem:[%s603 + $0x108] sm:$0xff]
      %v3211 = vld [vmem:[%s603 + $0x110] sm:$0xff]
      %v3212 = vld [vmem:[%s603 + $0x120] sm:$0xff]
      %v3213 = vld [vmem:[%s603 + $0x128] sm:$0xff]
      %v3214 = vld [vmem:[%s603 + $0x138] sm:$0xff]
      %v3215 = vld [vmem:[%s603 + $0x140] sm:$0xff]
      %v3216 = vld [vmem:[%s603 + $0x150] sm:$0xff]
      %v3217 = vld [vmem:[%s603 + $0x158] sm:$0xff]
      %v3218 = vld [vmem:[%s603 + $0x168] sm:$0xff]
      %v3219 = vld [vmem:[%s603 + $0x170] sm:$0xff]
      %s3220 = scalar_lea.vmem %s3, 64
      %v3221 = vld [vmem:[%s3220] sm:$0xff]
      %v3222 = vld [vmem:[%s603 + $0x1] sm:$0xff]
      %v3223 = vld [vmem:[%s603 + $0x9] sm:$0xff]
      %v3224 = vld [vmem:[%s603 + $0x19] sm:$0xff]
      %v3225 = vld [vmem:[%s603 + $0x21] sm:$0xff]
      %v3226 = vld [vmem:[%s603 + $0x31] sm:$0xff]
      %v3227 = vld [vmem:[%s603 + $0x39] sm:$0xff]
      %v3228 = vld [vmem:[%s603 + $0x49] sm:$0xff]
      %v3229 = vld [vmem:[%s603 + $0x51] sm:$0xff]
      %v3230 = vld [vmem:[%s603 + $0x61] sm:$0xff]
      %v3231 = vld [vmem:[%s603 + $0x69] sm:$0xff]
      %v3232 = vld [vmem:[%s603 + $0x79] sm:$0xff]
      %v3233 = vld [vmem:[%s603 + $0x81] sm:$0xff]
      %v3234 = vld [vmem:[%s603 + $0x91] sm:$0xff]
      %v3235 = vld [vmem:[%s603 + $0x99] sm:$0xff]
      %v3236 = vld [vmem:[%s603 + $0xa9] sm:$0xff]
      %v3237 = vld [vmem:[%s603 + $0xb1] sm:$0xff]
      %v3238 = vld [vmem:[%s603 + $0xc1] sm:$0xff]
      %v3239 = vld [vmem:[%s603 + $0xc9] sm:$0xff]
      %v3240 = vld [vmem:[%s603 + $0xd9] sm:$0xff]
      %v3241 = vld [vmem:[%s603 + $0xe1] sm:$0xff]
      %v3242 = vld [vmem:[%s603 + $0xf1] sm:$0xff]
      %v3243 = vld [vmem:[%s603 + $0xf9] sm:$0xff]
      %v3244 = vld [vmem:[%s603 + $0x109] sm:$0xff]
      %v3245 = vld [vmem:[%s603 + $0x111] sm:$0xff]
      %v3246 = vld [vmem:[%s603 + $0x121] sm:$0xff]
      %v3247 = vld [vmem:[%s603 + $0x129] sm:$0xff]
      %v3248 = vld [vmem:[%s603 + $0x139] sm:$0xff]
      %v3249 = vld [vmem:[%s603 + $0x141] sm:$0xff]
      %v3250 = vld [vmem:[%s603 + $0x151] sm:$0xff]
      %v3251 = vld [vmem:[%s603 + $0x159] sm:$0xff]
      %v3252 = vld [vmem:[%s603 + $0x169] sm:$0xff]
      %v3253 = vld [vmem:[%s603 + $0x171] sm:$0xff]
      %s3254 = scalar_lea.vmem %s3, 72
      %v3255 = vld [vmem:[%s3254] sm:$0xff]
      %v3257 = vsel %vm547, %v3222, 0
      %v3260 = vsel %vm547, %v3223, 0
      %v3263 = vsel %vm547, %v3224, 0
      %v3266 = vsel %vm547, %v3225, 0
      %v3269 = vsel %vm547, %v3226, 0
      %v3272 = vsel %vm547, %v3227, 0
      %v3275 = vsel %vm547, %v3228, 0
      %v3278 = vsel %vm547, %v3229, 0
      %v3281 = vsel %vm547, %v3230, 0
      %v3284 = vsel %vm547, %v3231, 0
      %v3287 = vsel %vm547, %v3232, 0
      %v3290 = vsel %vm547, %v3233, 0
      %v3293 = vsel %vm547, %v3234, 0
      %v3296 = vsel %vm547, %v3235, 0
      %v3299 = vsel %vm547, %v3236, 0
      %v3302 = vsel %vm547, %v3237, 0
      %v3305 = vsel %vm547, %v3238, 0
      %v3308 = vsel %vm547, %v3239, 0
      %v3311 = vsel %vm547, %v3240, 0
      %v3314 = vsel %vm547, %v3241, 0
      %v3317 = vsel %vm547, %v3242, 0
      %v3320 = vsel %vm547, %v3243, 0
      %v3323 = vsel %vm547, %v3244, 0
      %v3326 = vsel %vm547, %v3245, 0
      %v3329 = vsel %vm547, %v3246, 0
      %v3332 = vsel %vm547, %v3247, 0
      %v3335 = vsel %vm547, %v3248, 0
      %v3338 = vsel %vm547, %v3249, 0
      %v3341 = vsel %vm547, %v3250, 0
      %v3344 = vsel %vm547, %v3251, 0
      %v3347 = vsel %vm547, %v3252, 0
      %v3350 = vsel %vm547, %v3253, 0
      %3352 = vmatpush.msra.mxu0 0.0
      %3353 = vmatpush.msra.mxu0 0.0
      %3354 = vmatpush.msra.mxu0 0.0
      %3355 = vmatpush.msra.mxu0 0.0
      %3356 = vmatpush.msra.mxu0 0.0
      %3357 = vmatpush.msra.mxu0 0.0
      %3358 = vmatpush.msra.mxu0 0.0
      %3359 = vmatpush.msra.mxu0 0.0
      %3360 = vmatpush.msra.mxu0 0.0
      %3361 = vmatpush.msra.mxu0 0.0
      %3362 = vmatpush.msra.mxu0 0.0
      %3363 = vmatpush.msra.mxu0 0.0
      %3364 = vmatpush.msra.mxu0 0.0
      %3365 = vmatpush.msra.mxu0 0.0
      %3366 = vmatpush.msra.mxu0 0.0
      %3367 = vmatpush.msra.mxu0 %v3255
      %3368 = vmatmul.f32.gmra.mxu0 %v3257
      %v3369 = vpop.f32.mrf.mxu0
      %v3370 = vadd.f32 0.0, %v3369
      %3371 = vmatmul.f32.gmra.mxu0 %v3260
      %v3372 = vpop.f32.mrf.mxu0
      %v3373 = vadd.f32 0.0, %v3372
      %3374 = vmatmul.f32.gmra.mxu0 %v3263
      %v3375 = vpop.f32.mrf.mxu0
      %v3376 = vadd.f32 0.0, %v3375
      %3377 = vmatmul.f32.gmra.mxu0 %v3266
      %v3378 = vpop.f32.mrf.mxu0
      %v3379 = vadd.f32 0.0, %v3378
      %3380 = vmatmul.f32.gmra.mxu0 %v3269
      %v3381 = vpop.f32.mrf.mxu0
      %v3382 = vadd.f32 0.0, %v3381
      %3383 = vmatmul.f32.gmra.mxu0 %v3272
      %v3384 = vpop.f32.mrf.mxu0
      %v3385 = vadd.f32 0.0, %v3384
      %3386 = vmatmul.f32.gmra.mxu0 %v3275
      %v3387 = vpop.f32.mrf.mxu0
      %v3388 = vadd.f32 0.0, %v3387
      %3389 = vmatmul.f32.gmra.mxu0 %v3278
      %v3390 = vpop.f32.mrf.mxu0
      %v3391 = vadd.f32 0.0, %v3390
      %3392 = vmatmul.f32.gmra.mxu0 %v3281
      %v3393 = vpop.f32.mrf.mxu0
      %v3394 = vadd.f32 0.0, %v3393
      %3395 = vmatmul.f32.gmra.mxu0 %v3284
      %v3396 = vpop.f32.mrf.mxu0
      %v3397 = vadd.f32 0.0, %v3396
      %3398 = vmatmul.f32.gmra.mxu0 %v3287
      %v3399 = vpop.f32.mrf.mxu0
      %v3400 = vadd.f32 0.0, %v3399
      %3401 = vmatmul.f32.gmra.mxu0 %v3290
      %v3402 = vpop.f32.mrf.mxu0
      %v3403 = vadd.f32 0.0, %v3402
      %3404 = vmatmul.f32.gmra.mxu0 %v3293
      %v3405 = vpop.f32.mrf.mxu0
      %v3406 = vadd.f32 0.0, %v3405
      %3407 = vmatmul.f32.gmra.mxu0 %v3296
      %v3408 = vpop.f32.mrf.mxu0
      %v3409 = vadd.f32 0.0, %v3408
      %3410 = vmatmul.f32.gmra.mxu0 %v3299
      %v3411 = vpop.f32.mrf.mxu0
      %v3412 = vadd.f32 0.0, %v3411
      %3413 = vmatmul.f32.gmra.mxu0 %v3302
      %v3414 = vpop.f32.mrf.mxu0
      %v3415 = vadd.f32 0.0, %v3414
      %3416 = vmatmul.f32.gmra.mxu0 %v3305
      %v3417 = vpop.f32.mrf.mxu0
      %v3418 = vadd.f32 0.0, %v3417
      %3419 = vmatmul.f32.gmra.mxu0 %v3308
      %v3420 = vpop.f32.mrf.mxu0
      %v3421 = vadd.f32 0.0, %v3420
      %3422 = vmatmul.f32.gmra.mxu0 %v3311
      %v3423 = vpop.f32.mrf.mxu0
      %v3424 = vadd.f32 0.0, %v3423
      %3425 = vmatmul.f32.gmra.mxu0 %v3314
      %v3426 = vpop.f32.mrf.mxu0
      %v3427 = vadd.f32 0.0, %v3426
      %3428 = vmatmul.f32.gmra.mxu0 %v3317
      %v3429 = vpop.f32.mrf.mxu0
      %v3430 = vadd.f32 0.0, %v3429
      %3431 = vmatmul.f32.gmra.mxu0 %v3320
      %v3432 = vpop.f32.mrf.mxu0
      %v3433 = vadd.f32 0.0, %v3432
      %3434 = vmatmul.f32.gmra.mxu0 %v3323
      %v3435 = vpop.f32.mrf.mxu0
      %v3436 = vadd.f32 0.0, %v3435
      %3437 = vmatmul.f32.gmra.mxu0 %v3326
      %v3438 = vpop.f32.mrf.mxu0
      %v3439 = vadd.f32 0.0, %v3438
      %3440 = vmatmul.f32.gmra.mxu0 %v3329
      %v3441 = vpop.f32.mrf.mxu0
      %v3442 = vadd.f32 0.0, %v3441
      %3443 = vmatmul.f32.gmra.mxu0 %v3332
      %v3444 = vpop.f32.mrf.mxu0
      %v3445 = vadd.f32 0.0, %v3444
      %3446 = vmatmul.f32.gmra.mxu0 %v3335
      %v3447 = vpop.f32.mrf.mxu0
      %v3448 = vadd.f32 0.0, %v3447
      %3449 = vmatmul.f32.gmra.mxu0 %v3338
      %v3450 = vpop.f32.mrf.mxu0
      %v3451 = vadd.f32 0.0, %v3450
      %3452 = vmatmul.f32.gmra.mxu0 %v3341
      %v3453 = vpop.f32.mrf.mxu0
      %v3454 = vadd.f32 0.0, %v3453
      %3455 = vmatmul.f32.gmra.mxu0 %v3344
      %v3456 = vpop.f32.mrf.mxu0
      %v3457 = vadd.f32 0.0, %v3456
      %3458 = vmatmul.f32.gmra.mxu0 %v3347
      %v3459 = vpop.f32.mrf.mxu0
      %v3460 = vadd.f32 0.0, %v3459
      %3461 = vmatmul.f32.gmra.mxu0 %v3350
      %v3462 = vpop.f32.mrf.mxu0
      %v3463 = vadd.f32 0.0, %v3462
      %3464 = vdwg.mxu0
      %v3466 = vsel %vm547, %v3188, 0
      %v3469 = vsel %vm547, %v3189, 0
      %v3472 = vsel %vm547, %v3190, 0
      %v3475 = vsel %vm547, %v3191, 0
      %v3478 = vsel %vm547, %v3192, 0
      %v3481 = vsel %vm547, %v3193, 0
      %v3484 = vsel %vm547, %v3194, 0
      %v3487 = vsel %vm547, %v3195, 0
      %v3490 = vsel %vm547, %v3196, 0
      %v3493 = vsel %vm547, %v3197, 0
      %v3496 = vsel %vm547, %v3198, 0
      %v3499 = vsel %vm547, %v3199, 0
      %v3502 = vsel %vm547, %v3200, 0
      %v3505 = vsel %vm547, %v3201, 0
      %v3508 = vsel %vm547, %v3202, 0
      %v3511 = vsel %vm547, %v3203, 0
      %v3514 = vsel %vm547, %v3204, 0
      %v3517 = vsel %vm547, %v3205, 0
      %v3520 = vsel %vm547, %v3206, 0
      %v3523 = vsel %vm547, %v3207, 0
      %v3526 = vsel %vm547, %v3208, 0
      %v3529 = vsel %vm547, %v3209, 0
      %v3532 = vsel %vm547, %v3210, 0
      %v3535 = vsel %vm547, %v3211, 0
      %v3538 = vsel %vm547, %v3212, 0
      %v3541 = vsel %vm547, %v3213, 0
      %v3544 = vsel %vm547, %v3214, 0
      %v3547 = vsel %vm547, %v3215, 0
      %v3550 = vsel %vm547, %v3216, 0
      %v3553 = vsel %vm547, %v3217, 0
      %v3556 = vsel %vm547, %v3218, 0
      %v3559 = vsel %vm547, %v3219, 0
      %3561 = vmatpush.msra.mxu0 0.0
      %3562 = vmatpush.msra.mxu0 0.0
      %3563 = vmatpush.msra.mxu0 0.0
      %3564 = vmatpush.msra.mxu0 0.0
      %3565 = vmatpush.msra.mxu0 0.0
      %3566 = vmatpush.msra.mxu0 0.0
      %3567 = vmatpush.msra.mxu0 0.0
      %3568 = vmatpush.msra.mxu0 0.0
      %3569 = vmatpush.msra.mxu0 0.0
      %3570 = vmatpush.msra.mxu0 0.0
      %3571 = vmatpush.msra.mxu0 0.0
      %3572 = vmatpush.msra.mxu0 0.0
      %3573 = vmatpush.msra.mxu0 0.0
      %3574 = vmatpush.msra.mxu0 0.0
      %3575 = vmatpush.msra.mxu0 0.0
      %3576 = vmatpush.msra.mxu0 %v3221
      %3577 = vmatmul.f32.gmra.mxu0 %v3466
      %v3578 = vpop.f32.mrf.mxu0
      %v3579 = vadd.f32 %v3370, %v3578
      %3580 = vmatmul.f32.gmra.mxu0 %v3469
      %v3581 = vpop.f32.mrf.mxu0
      %v3582 = vadd.f32 %v3373, %v3581
      %3583 = vmatmul.f32.gmra.mxu0 %v3472
      %v3584 = vpop.f32.mrf.mxu0
      %v3585 = vadd.f32 %v3376, %v3584
      %3586 = vmatmul.f32.gmra.mxu0 %v3475
      %v3587 = vpop.f32.mrf.mxu0
      %v3588 = vadd.f32 %v3379, %v3587
      %3589 = vmatmul.f32.gmra.mxu0 %v3478
      %v3590 = vpop.f32.mrf.mxu0
      %v3591 = vadd.f32 %v3382, %v3590
      %3592 = vmatmul.f32.gmra.mxu0 %v3481
      %v3593 = vpop.f32.mrf.mxu0
      %v3594 = vadd.f32 %v3385, %v3593
      %3595 = vmatmul.f32.gmra.mxu0 %v3484
      %v3596 = vpop.f32.mrf.mxu0
      %v3597 = vadd.f32 %v3388, %v3596
      %3598 = vmatmul.f32.gmra.mxu0 %v3487
      %v3599 = vpop.f32.mrf.mxu0
      %v3600 = vadd.f32 %v3391, %v3599
      %3601 = vmatmul.f32.gmra.mxu0 %v3490
      %v3602 = vpop.f32.mrf.mxu0
      %v3603 = vadd.f32 %v3394, %v3602
      %3604 = vmatmul.f32.gmra.mxu0 %v3493
      %v3605 = vpop.f32.mrf.mxu0
      %v3606 = vadd.f32 %v3397, %v3605
      %3607 = vmatmul.f32.gmra.mxu0 %v3496
      %v3608 = vpop.f32.mrf.mxu0
      %v3609 = vadd.f32 %v3400, %v3608
      %3610 = vmatmul.f32.gmra.mxu0 %v3499
      %v3611 = vpop.f32.mrf.mxu0
      %v3612 = vadd.f32 %v3403, %v3611
      %3613 = vmatmul.f32.gmra.mxu0 %v3502
      %v3614 = vpop.f32.mrf.mxu0
      %v3615 = vadd.f32 %v3406, %v3614
      %3616 = vmatmul.f32.gmra.mxu0 %v3505
      %v3617 = vpop.f32.mrf.mxu0
      %v3618 = vadd.f32 %v3409, %v3617
      %3619 = vmatmul.f32.gmra.mxu0 %v3508
      %v3620 = vpop.f32.mrf.mxu0
      %v3621 = vadd.f32 %v3412, %v3620
      %3622 = vmatmul.f32.gmra.mxu0 %v3511
      %v3623 = vpop.f32.mrf.mxu0
      %v3624 = vadd.f32 %v3415, %v3623
      %3625 = vmatmul.f32.gmra.mxu0 %v3514
      %v3626 = vpop.f32.mrf.mxu0
      %v3627 = vadd.f32 %v3418, %v3626
      %3628 = vmatmul.f32.gmra.mxu0 %v3517
      %v3629 = vpop.f32.mrf.mxu0
      %v3630 = vadd.f32 %v3421, %v3629
      %3631 = vmatmul.f32.gmra.mxu0 %v3520
      %v3632 = vpop.f32.mrf.mxu0
      %v3633 = vadd.f32 %v3424, %v3632
      %3634 = vmatmul.f32.gmra.mxu0 %v3523
      %v3635 = vpop.f32.mrf.mxu0
      %v3636 = vadd.f32 %v3427, %v3635
      %3637 = vmatmul.f32.gmra.mxu0 %v3526
      %v3638 = vpop.f32.mrf.mxu0
      %v3639 = vadd.f32 %v3430, %v3638
      %3640 = vmatmul.f32.gmra.mxu0 %v3529
      %v3641 = vpop.f32.mrf.mxu0
      %v3642 = vadd.f32 %v3433, %v3641
      %3643 = vmatmul.f32.gmra.mxu0 %v3532
      %v3644 = vpop.f32.mrf.mxu0
      %v3645 = vadd.f32 %v3436, %v3644
      %3646 = vmatmul.f32.gmra.mxu0 %v3535
      %v3647 = vpop.f32.mrf.mxu0
      %v3648 = vadd.f32 %v3439, %v3647
      %3649 = vmatmul.f32.gmra.mxu0 %v3538
      %v3650 = vpop.f32.mrf.mxu0
      %v3651 = vadd.f32 %v3442, %v3650
      %3652 = vmatmul.f32.gmra.mxu0 %v3541
      %v3653 = vpop.f32.mrf.mxu0
      %v3654 = vadd.f32 %v3445, %v3653
      %3655 = vmatmul.f32.gmra.mxu0 %v3544
      %v3656 = vpop.f32.mrf.mxu0
      %v3657 = vadd.f32 %v3448, %v3656
      %3658 = vmatmul.f32.gmra.mxu0 %v3547
      %v3659 = vpop.f32.mrf.mxu0
      %v3660 = vadd.f32 %v3451, %v3659
      %3661 = vmatmul.f32.gmra.mxu0 %v3550
      %v3662 = vpop.f32.mrf.mxu0
      %v3663 = vadd.f32 %v3454, %v3662
      %3664 = vmatmul.f32.gmra.mxu0 %v3553
      %v3665 = vpop.f32.mrf.mxu0
      %v3666 = vadd.f32 %v3457, %v3665
      %3667 = vmatmul.f32.gmra.mxu0 %v3556
      %v3668 = vpop.f32.mrf.mxu0
      %v3669 = vadd.f32 %v3460, %v3668
      %3670 = vmatmul.f32.gmra.mxu0 %v3559
      %v3671 = vpop.f32.mrf.mxu0
      %v3672 = vadd.f32 %v3463, %v3671
      %3673 = vdwg.mxu0
      %s3674 = scalar_lea.vmem [#allocation2], 48
      %v3675 = vld [vmem:[%s3674] sm:$0xff]
      %v3676 = vld [vmem:[%s3674 + $0x8] sm:$0xff]
      %v3677 = vld [vmem:[%s3674 + $0x18] sm:$0xff]
      %v3678 = vld [vmem:[%s3674 + $0x20] sm:$0xff]
      %v3679 = vld [vmem:[%s3674 + $0x30] sm:$0xff]
      %v3680 = vld [vmem:[%s3674 + $0x38] sm:$0xff]
      %v3681 = vld [vmem:[%s3674 + $0x48] sm:$0xff]
      %v3682 = vld [vmem:[%s3674 + $0x50] sm:$0xff]
      %v3683 = vld [vmem:[%s3674 + $0x60] sm:$0xff]
      %v3684 = vld [vmem:[%s3674 + $0x68] sm:$0xff]
      %v3685 = vld [vmem:[%s3674 + $0x78] sm:$0xff]
      %v3686 = vld [vmem:[%s3674 + $0x80] sm:$0xff]
      %v3687 = vld [vmem:[%s3674 + $0x90] sm:$0xff]
      %v3688 = vld [vmem:[%s3674 + $0x98] sm:$0xff]
      %v3689 = vld [vmem:[%s3674 + $0xa8] sm:$0xff]
      %v3690 = vld [vmem:[%s3674 + $0xb0] sm:$0xff]
      %v3691 = vld [vmem:[%s3674 + $0xc0] sm:$0xff]
      %v3692 = vld [vmem:[%s3674 + $0xc8] sm:$0xff]
      %v3693 = vld [vmem:[%s3674 + $0xd8] sm:$0xff]
      %v3694 = vld [vmem:[%s3674 + $0xe0] sm:$0xff]
      %v3695 = vld [vmem:[%s3674 + $0xf0] sm:$0xff]
      %v3696 = vld [vmem:[%s3674 + $0xf8] sm:$0xff]
      %v3697 = vld [vmem:[%s3674 + $0x108] sm:$0xff]
      %v3698 = vld [vmem:[%s3674 + $0x110] sm:$0xff]
      %v3699 = vld [vmem:[%s3674 + $0x120] sm:$0xff]
      %v3700 = vld [vmem:[%s3674 + $0x128] sm:$0xff]
      %v3701 = vld [vmem:[%s3674 + $0x138] sm:$0xff]
      %v3702 = vld [vmem:[%s3674 + $0x140] sm:$0xff]
      %v3703 = vld [vmem:[%s3674 + $0x150] sm:$0xff]
      %v3704 = vld [vmem:[%s3674 + $0x158] sm:$0xff]
      %v3705 = vld [vmem:[%s3674 + $0x168] sm:$0xff]
      %v3706 = vld [vmem:[%s3674 + $0x170] sm:$0xff]
      %s3707 = scalar_lea.vmem %s3, 80
      %v3708 = vld [vmem:[%s3707] sm:$0xff]
      %v3710 = vsel %vm547, %v3675, 0
      %v3713 = vsel %vm547, %v3676, 0
      %v3716 = vsel %vm547, %v3677, 0
      %v3719 = vsel %vm547, %v3678, 0
      %v3722 = vsel %vm547, %v3679, 0
      %v3725 = vsel %vm547, %v3680, 0
      %v3728 = vsel %vm547, %v3681, 0
      %v3731 = vsel %vm547, %v3682, 0
      %v3734 = vsel %vm547, %v3683, 0
      %v3737 = vsel %vm547, %v3684, 0
      %v3740 = vsel %vm547, %v3685, 0
      %v3743 = vsel %vm547, %v3686, 0
      %v3746 = vsel %vm547, %v3687, 0
      %v3749 = vsel %vm547, %v3688, 0
      %v3752 = vsel %vm547, %v3689, 0
      %v3755 = vsel %vm547, %v3690, 0
      %v3758 = vsel %vm547, %v3691, 0
      %v3761 = vsel %vm547, %v3692, 0
      %v3764 = vsel %vm547, %v3693, 0
      %v3767 = vsel %vm547, %v3694, 0
      %v3770 = vsel %vm547, %v3695, 0
      %v3773 = vsel %vm547, %v3696, 0
      %v3776 = vsel %vm547, %v3697, 0
      %v3779 = vsel %vm547, %v3698, 0
      %v3782 = vsel %vm547, %v3699, 0
      %v3785 = vsel %vm547, %v3700, 0
      %v3788 = vsel %vm547, %v3701, 0
      %v3791 = vsel %vm547, %v3702, 0
      %v3794 = vsel %vm547, %v3703, 0
      %v3797 = vsel %vm547, %v3704, 0
      %v3800 = vsel %vm547, %v3705, 0
      %v3803 = vsel %vm547, %v3706, 0
      %3805 = vmatpush.msra.mxu0 0.0
      %3806 = vmatpush.msra.mxu0 0.0
      %3807 = vmatpush.msra.mxu0 0.0
      %3808 = vmatpush.msra.mxu0 0.0
      %3809 = vmatpush.msra.mxu0 0.0
      %3810 = vmatpush.msra.mxu0 0.0
      %3811 = vmatpush.msra.mxu0 0.0
      %3812 = vmatpush.msra.mxu0 0.0
      %3813 = vmatpush.msra.mxu0 0.0
      %3814 = vmatpush.msra.mxu0 0.0
      %3815 = vmatpush.msra.mxu0 0.0
      %3816 = vmatpush.msra.mxu0 0.0
      %3817 = vmatpush.msra.mxu0 0.0
      %3818 = vmatpush.msra.mxu0 0.0
      %3819 = vmatpush.msra.mxu0 0.0
      %3820 = vmatpush.msra.mxu0 %v3708
      %3821 = vmatmul.f32.gmra.mxu0 %v3710
      %v3822 = vpop.f32.mrf.mxu0
      %v3823 = vadd.f32 0.0, %v3822
      %3824 = vmatmul.f32.gmra.mxu0 %v3713
      %v3825 = vpop.f32.mrf.mxu0
      %v3826 = vadd.f32 0.0, %v3825
      %3827 = vmatmul.f32.gmra.mxu0 %v3716
      %v3828 = vpop.f32.mrf.mxu0
      %v3829 = vadd.f32 0.0, %v3828
      %3830 = vmatmul.f32.gmra.mxu0 %v3719
      %v3831 = vpop.f32.mrf.mxu0
      %v3832 = vadd.f32 0.0, %v3831
      %3833 = vmatmul.f32.gmra.mxu0 %v3722
      %v3834 = vpop.f32.mrf.mxu0
      %v3835 = vadd.f32 0.0, %v3834
      %3836 = vmatmul.f32.gmra.mxu0 %v3725
      %v3837 = vpop.f32.mrf.mxu0
      %v3838 = vadd.f32 0.0, %v3837
      %3839 = vmatmul.f32.gmra.mxu0 %v3728
      %v3840 = vpop.f32.mrf.mxu0
      %v3841 = vadd.f32 0.0, %v3840
      %3842 = vmatmul.f32.gmra.mxu0 %v3731
      %v3843 = vpop.f32.mrf.mxu0
      %v3844 = vadd.f32 0.0, %v3843
      %3845 = vmatmul.f32.gmra.mxu0 %v3734
      %v3846 = vpop.f32.mrf.mxu0
      %v3847 = vadd.f32 0.0, %v3846
      %3848 = vmatmul.f32.gmra.mxu0 %v3737
      %v3849 = vpop.f32.mrf.mxu0
      %v3850 = vadd.f32 0.0, %v3849
      %3851 = vmatmul.f32.gmra.mxu0 %v3740
      %v3852 = vpop.f32.mrf.mxu0
      %v3853 = vadd.f32 0.0, %v3852
      %3854 = vmatmul.f32.gmra.mxu0 %v3743
      %v3855 = vpop.f32.mrf.mxu0
      %v3856 = vadd.f32 0.0, %v3855
      %3857 = vmatmul.f32.gmra.mxu0 %v3746
      %v3858 = vpop.f32.mrf.mxu0
      %v3859 = vadd.f32 0.0, %v3858
      %3860 = vmatmul.f32.gmra.mxu0 %v3749
      %v3861 = vpop.f32.mrf.mxu0
      %v3862 = vadd.f32 0.0, %v3861
      %3863 = vmatmul.f32.gmra.mxu0 %v3752
      %v3864 = vpop.f32.mrf.mxu0
      %v3865 = vadd.f32 0.0, %v3864
      %3866 = vmatmul.f32.gmra.mxu0 %v3755
      %v3867 = vpop.f32.mrf.mxu0
      %v3868 = vadd.f32 0.0, %v3867
      %3869 = vmatmul.f32.gmra.mxu0 %v3758
      %v3870 = vpop.f32.mrf.mxu0
      %v3871 = vadd.f32 0.0, %v3870
      %3872 = vmatmul.f32.gmra.mxu0 %v3761
      %v3873 = vpop.f32.mrf.mxu0
      %v3874 = vadd.f32 0.0, %v3873
      %3875 = vmatmul.f32.gmra.mxu0 %v3764
      %v3876 = vpop.f32.mrf.mxu0
      %v3877 = vadd.f32 0.0, %v3876
      %3878 = vmatmul.f32.gmra.mxu0 %v3767
      %v3879 = vpop.f32.mrf.mxu0
      %v3880 = vadd.f32 0.0, %v3879
      %3881 = vmatmul.f32.gmra.mxu0 %v3770
      %v3882 = vpop.f32.mrf.mxu0
      %v3883 = vadd.f32 0.0, %v3882
      %3884 = vmatmul.f32.gmra.mxu0 %v3773
      %v3885 = vpop.f32.mrf.mxu0
      %v3886 = vadd.f32 0.0, %v3885
      %3887 = vmatmul.f32.gmra.mxu0 %v3776
      %v3888 = vpop.f32.mrf.mxu0
      %v3889 = vadd.f32 0.0, %v3888
      %3890 = vmatmul.f32.gmra.mxu0 %v3779
      %v3891 = vpop.f32.mrf.mxu0
      %v3892 = vadd.f32 0.0, %v3891
      %3893 = vmatmul.f32.gmra.mxu0 %v3782
      %v3894 = vpop.f32.mrf.mxu0
      %v3895 = vadd.f32 0.0, %v3894
      %3896 = vmatmul.f32.gmra.mxu0 %v3785
      %v3897 = vpop.f32.mrf.mxu0
      %v3898 = vadd.f32 0.0, %v3897
      %3899 = vmatmul.f32.gmra.mxu0 %v3788
      %v3900 = vpop.f32.mrf.mxu0
      %v3901 = vadd.f32 0.0, %v3900
      %3902 = vmatmul.f32.gmra.mxu0 %v3791
      %v3903 = vpop.f32.mrf.mxu0
      %v3904 = vadd.f32 0.0, %v3903
      %3905 = vmatmul.f32.gmra.mxu0 %v3794
      %v3906 = vpop.f32.mrf.mxu0
      %v3907 = vadd.f32 0.0, %v3906
      %3908 = vmatmul.f32.gmra.mxu0 %v3797
      %v3909 = vpop.f32.mrf.mxu0
      %v3910 = vadd.f32 0.0, %v3909
      %3911 = vmatmul.f32.gmra.mxu0 %v3800
      %v3912 = vpop.f32.mrf.mxu0
      %v3913 = vadd.f32 0.0, %v3912
      %3914 = vmatmul.f32.gmra.mxu0 %v3803
      %v3915 = vpop.f32.mrf.mxu0
      %v3916 = vadd.f32 0.0, %v3915
      %3917 = vdwg.mxu0
      %v3918 = vadd.f32 %v3579, %v3823
      %v3919 = vadd.f32 %v3582, %v3826
      %v3920 = vadd.f32 %v3585, %v3829
      %v3921 = vadd.f32 %v3588, %v3832
      %v3922 = vadd.f32 %v3591, %v3835
      %v3923 = vadd.f32 %v3594, %v3838
      %v3924 = vadd.f32 %v3597, %v3841
      %v3925 = vadd.f32 %v3600, %v3844
      %v3926 = vadd.f32 %v3603, %v3847
      %v3927 = vadd.f32 %v3606, %v3850
      %v3928 = vadd.f32 %v3609, %v3853
      %v3929 = vadd.f32 %v3612, %v3856
      %v3930 = vadd.f32 %v3615, %v3859
      %v3931 = vadd.f32 %v3618, %v3862
      %v3932 = vadd.f32 %v3621, %v3865
      %v3933 = vadd.f32 %v3624, %v3868
      %v3934 = vadd.f32 %v3627, %v3871
      %v3935 = vadd.f32 %v3630, %v3874
      %v3936 = vadd.f32 %v3633, %v3877
      %v3937 = vadd.f32 %v3636, %v3880
      %v3938 = vadd.f32 %v3639, %v3883
      %v3939 = vadd.f32 %v3642, %v3886
      %v3940 = vadd.f32 %v3645, %v3889
      %v3941 = vadd.f32 %v3648, %v3892
      %v3942 = vadd.f32 %v3651, %v3895
      %v3943 = vadd.f32 %v3654, %v3898
      %v3944 = vadd.f32 %v3657, %v3901
      %v3945 = vadd.f32 %v3660, %v3904
      %v3946 = vadd.f32 %v3663, %v3907
      %v3947 = vadd.f32 %v3666, %v3910
      %v3948 = vadd.f32 %v3669, %v3913
      %v3949 = vadd.f32 %v3672, %v3916
      %v3950 = vld [vmem:[%s3674 + $0x1] sm:$0xff]
      %v3951 = vld [vmem:[%s3674 + $0x9] sm:$0xff]
      %v3952 = vld [vmem:[%s3674 + $0x19] sm:$0xff]
      %v3953 = vld [vmem:[%s3674 + $0x21] sm:$0xff]
      %v3954 = vld [vmem:[%s3674 + $0x31] sm:$0xff]
      %v3955 = vld [vmem:[%s3674 + $0x39] sm:$0xff]
      %v3956 = vld [vmem:[%s3674 + $0x49] sm:$0xff]
      %v3957 = vld [vmem:[%s3674 + $0x51] sm:$0xff]
      %v3958 = vld [vmem:[%s3674 + $0x61] sm:$0xff]
      %v3959 = vld [vmem:[%s3674 + $0x69] sm:$0xff]
      %v3960 = vld [vmem:[%s3674 + $0x79] sm:$0xff]
      %v3961 = vld [vmem:[%s3674 + $0x81] sm:$0xff]
      %v3962 = vld [vmem:[%s3674 + $0x91] sm:$0xff]
      %v3963 = vld [vmem:[%s3674 + $0x99] sm:$0xff]
      %v3964 = vld [vmem:[%s3674 + $0xa9] sm:$0xff]
      %v3965 = vld [vmem:[%s3674 + $0xb1] sm:$0xff]
      %v3966 = vld [vmem:[%s3674 + $0xc1] sm:$0xff]
      %v3967 = vld [vmem:[%s3674 + $0xc9] sm:$0xff]
      %v3968 = vld [vmem:[%s3674 + $0xd9] sm:$0xff]
      %v3969 = vld [vmem:[%s3674 + $0xe1] sm:$0xff]
      %v3970 = vld [vmem:[%s3674 + $0xf1] sm:$0xff]
      %v3971 = vld [vmem:[%s3674 + $0xf9] sm:$0xff]
      %v3972 = vld [vmem:[%s3674 + $0x109] sm:$0xff]
      %v3973 = vld [vmem:[%s3674 + $0x111] sm:$0xff]
      %v3974 = vld [vmem:[%s3674 + $0x121] sm:$0xff]
      %v3975 = vld [vmem:[%s3674 + $0x129] sm:$0xff]
      %v3976 = vld [vmem:[%s3674 + $0x139] sm:$0xff]
      %v3977 = vld [vmem:[%s3674 + $0x141] sm:$0xff]
      %v3978 = vld [vmem:[%s3674 + $0x151] sm:$0xff]
      %v3979 = vld [vmem:[%s3674 + $0x159] sm:$0xff]
      %v3980 = vld [vmem:[%s3674 + $0x169] sm:$0xff]
      %v3981 = vld [vmem:[%s3674 + $0x171] sm:$0xff]
      %s3982 = scalar_lea.vmem %s3, 88
      %v3983 = vld [vmem:[%s3982] sm:$0xff]
      %v3985 = vsel %vm547, %v3950, 0
      %v3988 = vsel %vm547, %v3951, 0
      %v3991 = vsel %vm547, %v3952, 0
      %v3994 = vsel %vm547, %v3953, 0
      %v3997 = vsel %vm547, %v3954, 0
      %v4000 = vsel %vm547, %v3955, 0
      %v4003 = vsel %vm547, %v3956, 0
      %v4006 = vsel %vm547, %v3957, 0
      %v4009 = vsel %vm547, %v3958, 0
      %v4012 = vsel %vm547, %v3959, 0
      %v4015 = vsel %vm547, %v3960, 0
      %v4018 = vsel %vm547, %v3961, 0
      %v4021 = vsel %vm547, %v3962, 0
      %v4024 = vsel %vm547, %v3963, 0
      %v4027 = vsel %vm547, %v3964, 0
      %v4030 = vsel %vm547, %v3965, 0
      %v4033 = vsel %vm547, %v3966, 0
      %v4036 = vsel %vm547, %v3967, 0
      %v4039 = vsel %vm547, %v3968, 0
      %v4042 = vsel %vm547, %v3969, 0
      %v4045 = vsel %vm547, %v3970, 0
      %v4048 = vsel %vm547, %v3971, 0
      %v4051 = vsel %vm547, %v3972, 0
      %v4054 = vsel %vm547, %v3973, 0
      %v4057 = vsel %vm547, %v3974, 0
      %v4060 = vsel %vm547, %v3975, 0
      %v4063 = vsel %vm547, %v3976, 0
      %v4066 = vsel %vm547, %v3977, 0
      %v4069 = vsel %vm547, %v3978, 0
      %v4072 = vsel %vm547, %v3979, 0
      %v4075 = vsel %vm547, %v3980, 0
      %v4078 = vsel %vm547, %v3981, 0
      %4080 = vmatpush.msra.mxu0 0.0
      %4081 = vmatpush.msra.mxu0 0.0
      %4082 = vmatpush.msra.mxu0 0.0
      %4083 = vmatpush.msra.mxu0 0.0
      %4084 = vmatpush.msra.mxu0 0.0
      %4085 = vmatpush.msra.mxu0 0.0
      %4086 = vmatpush.msra.mxu0 0.0
      %4087 = vmatpush.msra.mxu0 0.0
      %4088 = vmatpush.msra.mxu0 0.0
      %4089 = vmatpush.msra.mxu0 0.0
      %4090 = vmatpush.msra.mxu0 0.0
      %4091 = vmatpush.msra.mxu0 0.0
      %4092 = vmatpush.msra.mxu0 0.0
      %4093 = vmatpush.msra.mxu0 0.0
      %4094 = vmatpush.msra.mxu0 0.0
      %4095 = vmatpush.msra.mxu0 %v3983
      %4096 = vmatmul.f32.gmra.mxu0 %v3985
      %v4097 = vpop.f32.mrf.mxu0
      %v4098 = vadd.f32 0.0, %v4097
      %4099 = vmatmul.f32.gmra.mxu0 %v3988
      %v4100 = vpop.f32.mrf.mxu0
      %v4101 = vadd.f32 0.0, %v4100
      %4102 = vmatmul.f32.gmra.mxu0 %v3991
      %v4103 = vpop.f32.mrf.mxu0
      %v4104 = vadd.f32 0.0, %v4103
      %4105 = vmatmul.f32.gmra.mxu0 %v3994
      %v4106 = vpop.f32.mrf.mxu0
      %v4107 = vadd.f32 0.0, %v4106
      %4108 = vmatmul.f32.gmra.mxu0 %v3997
      %v4109 = vpop.f32.mrf.mxu0
      %v4110 = vadd.f32 0.0, %v4109
      %4111 = vmatmul.f32.gmra.mxu0 %v4000
      %v4112 = vpop.f32.mrf.mxu0
      %v4113 = vadd.f32 0.0, %v4112
      %4114 = vmatmul.f32.gmra.mxu0 %v4003
      %v4115 = vpop.f32.mrf.mxu0
      %v4116 = vadd.f32 0.0, %v4115
      %4117 = vmatmul.f32.gmra.mxu0 %v4006
      %v4118 = vpop.f32.mrf.mxu0
      %v4119 = vadd.f32 0.0, %v4118
      %4120 = vmatmul.f32.gmra.mxu0 %v4009
      %v4121 = vpop.f32.mrf.mxu0
      %v4122 = vadd.f32 0.0, %v4121
      %4123 = vmatmul.f32.gmra.mxu0 %v4012
      %v4124 = vpop.f32.mrf.mxu0
      %v4125 = vadd.f32 0.0, %v4124
      %4126 = vmatmul.f32.gmra.mxu0 %v4015
      %v4127 = vpop.f32.mrf.mxu0
      %v4128 = vadd.f32 0.0, %v4127
      %4129 = vmatmul.f32.gmra.mxu0 %v4018
      %v4130 = vpop.f32.mrf.mxu0
      %v4131 = vadd.f32 0.0, %v4130
      %4132 = vmatmul.f32.gmra.mxu0 %v4021
      %v4133 = vpop.f32.mrf.mxu0
      %v4134 = vadd.f32 0.0, %v4133
      %4135 = vmatmul.f32.gmra.mxu0 %v4024
      %v4136 = vpop.f32.mrf.mxu0
      %v4137 = vadd.f32 0.0, %v4136
      %4138 = vmatmul.f32.gmra.mxu0 %v4027
      %v4139 = vpop.f32.mrf.mxu0
      %v4140 = vadd.f32 0.0, %v4139
      %4141 = vmatmul.f32.gmra.mxu0 %v4030
      %v4142 = vpop.f32.mrf.mxu0
      %v4143 = vadd.f32 0.0, %v4142
      %4144 = vmatmul.f32.gmra.mxu0 %v4033
      %v4145 = vpop.f32.mrf.mxu0
      %v4146 = vadd.f32 0.0, %v4145
      %4147 = vmatmul.f32.gmra.mxu0 %v4036
      %v4148 = vpop.f32.mrf.mxu0
      %v4149 = vadd.f32 0.0, %v4148
      %4150 = vmatmul.f32.gmra.mxu0 %v4039
      %v4151 = vpop.f32.mrf.mxu0
      %v4152 = vadd.f32 0.0, %v4151
      %4153 = vmatmul.f32.gmra.mxu0 %v4042
      %v4154 = vpop.f32.mrf.mxu0
      %v4155 = vadd.f32 0.0, %v4154
      %4156 = vmatmul.f32.gmra.mxu0 %v4045
      %v4157 = vpop.f32.mrf.mxu0
      %v4158 = vadd.f32 0.0, %v4157
      %4159 = vmatmul.f32.gmra.mxu0 %v4048
      %v4160 = vpop.f32.mrf.mxu0
      %v4161 = vadd.f32 0.0, %v4160
      %4162 = vmatmul.f32.gmra.mxu0 %v4051
      %v4163 = vpop.f32.mrf.mxu0
      %v4164 = vadd.f32 0.0, %v4163
      %4165 = vmatmul.f32.gmra.mxu0 %v4054
      %v4166 = vpop.f32.mrf.mxu0
      %v4167 = vadd.f32 0.0, %v4166
      %4168 = vmatmul.f32.gmra.mxu0 %v4057
      %v4169 = vpop.f32.mrf.mxu0
      %v4170 = vadd.f32 0.0, %v4169
      %4171 = vmatmul.f32.gmra.mxu0 %v4060
      %v4172 = vpop.f32.mrf.mxu0
      %v4173 = vadd.f32 0.0, %v4172
      %4174 = vmatmul.f32.gmra.mxu0 %v4063
      %v4175 = vpop.f32.mrf.mxu0
      %v4176 = vadd.f32 0.0, %v4175
      %4177 = vmatmul.f32.gmra.mxu0 %v4066
      %v4178 = vpop.f32.mrf.mxu0
      %v4179 = vadd.f32 0.0, %v4178
      %4180 = vmatmul.f32.gmra.mxu0 %v4069
      %v4181 = vpop.f32.mrf.mxu0
      %v4182 = vadd.f32 0.0, %v4181
      %4183 = vmatmul.f32.gmra.mxu0 %v4072
      %v4184 = vpop.f32.mrf.mxu0
      %v4185 = vadd.f32 0.0, %v4184
      %4186 = vmatmul.f32.gmra.mxu0 %v4075
      %v4187 = vpop.f32.mrf.mxu0
      %v4188 = vadd.f32 0.0, %v4187
      %4189 = vmatmul.f32.gmra.mxu0 %v4078
      %v4190 = vpop.f32.mrf.mxu0
      %v4191 = vadd.f32 0.0, %v4190
      %4192 = vdwg.mxu0
      %v4193 = vadd.f32 %v3918, %v4098
      %v4194 = vadd.f32 %v3919, %v4101
      %v4195 = vadd.f32 %v3920, %v4104
      %v4196 = vadd.f32 %v3921, %v4107
      %v4197 = vadd.f32 %v3922, %v4110
      %v4198 = vadd.f32 %v3923, %v4113
      %v4199 = vadd.f32 %v3924, %v4116
      %v4200 = vadd.f32 %v3925, %v4119
      %v4201 = vadd.f32 %v3926, %v4122
      %v4202 = vadd.f32 %v3927, %v4125
      %v4203 = vadd.f32 %v3928, %v4128
      %v4204 = vadd.f32 %v3929, %v4131
      %v4205 = vadd.f32 %v3930, %v4134
      %v4206 = vadd.f32 %v3931, %v4137
      %v4207 = vadd.f32 %v3932, %v4140
      %v4208 = vadd.f32 %v3933, %v4143
      %v4209 = vadd.f32 %v3934, %v4146
      %v4210 = vadd.f32 %v3935, %v4149
      %v4211 = vadd.f32 %v3936, %v4152
      %v4212 = vadd.f32 %v3937, %v4155
      %v4213 = vadd.f32 %v3938, %v4158
      %v4214 = vadd.f32 %v3939, %v4161
      %v4215 = vadd.f32 %v3940, %v4164
      %v4216 = vadd.f32 %v3941, %v4167
      %v4217 = vadd.f32 %v3942, %v4170
      %v4218 = vadd.f32 %v3943, %v4173
      %v4219 = vadd.f32 %v3944, %v4176
      %v4220 = vadd.f32 %v3945, %v4179
      %v4221 = vadd.f32 %v3946, %v4182
      %v4222 = vadd.f32 %v3947, %v4185
      %v4223 = vadd.f32 %v3948, %v4188
      %v4224 = vadd.f32 %v3949, %v4191
      %v4225 = vld [vmem:[%s4] sm:$0x1]
      %v4227 = vperm.slane %v4225, 0
      %v4229 = vadd.f32 %v4193, %v4227
      %v4230 = vadd.f32 %v4194, %v4227
      %v4231 = vadd.f32 %v4195, %v4227
      %v4232 = vadd.f32 %v4196, %v4227
      %v4233 = vadd.f32 %v4197, %v4227
      %v4234 = vadd.f32 %v4198, %v4227
      %v4235 = vadd.f32 %v4199, %v4227
      %v4236 = vadd.f32 %v4200, %v4227
      %v4237 = vadd.f32 %v4201, %v4227
      %v4238 = vadd.f32 %v4202, %v4227
      %v4239 = vadd.f32 %v4203, %v4227
      %v4240 = vadd.f32 %v4204, %v4227
      %v4241 = vadd.f32 %v4205, %v4227
      %v4242 = vadd.f32 %v4206, %v4227
      %v4243 = vadd.f32 %v4207, %v4227
      %v4244 = vadd.f32 %v4208, %v4227
      %v4245 = vadd.f32 %v4209, %v4227
      %v4246 = vadd.f32 %v4210, %v4227
      %v4247 = vadd.f32 %v4211, %v4227
      %v4248 = vadd.f32 %v4212, %v4227
      %v4249 = vadd.f32 %v4213, %v4227
      %v4250 = vadd.f32 %v4214, %v4227
      %v4251 = vadd.f32 %v4215, %v4227
      %v4252 = vadd.f32 %v4216, %v4227
      %v4253 = vadd.f32 %v4217, %v4227
      %v4254 = vadd.f32 %v4218, %v4227
      %v4255 = vadd.f32 %v4219, %v4227
      %v4256 = vadd.f32 %v4220, %v4227
      %v4257 = vadd.f32 %v4221, %v4227
      %v4258 = vadd.f32 %v4222, %v4227
      %v4259 = vadd.f32 %v4223, %v4227
      %v4260 = vadd.f32 %v4224, %v4227
      %s4261 = scalar_lea.vmem %s289, 512
      %4262 = vst.msk [vmem:[%s4261] sm:$0xff] %vm547, %v4229
      %4263 = vst.msk [vmem:[%s4261 + $0x8] sm:$0xff] %vm547, %v4230
      %4264 = vst.msk [vmem:[%s4261 + $0x10] sm:$0xff] %vm547, %v4231
      %4265 = vst.msk [vmem:[%s4261 + $0x18] sm:$0xff] %vm547, %v4232
      %4266 = vst.msk [vmem:[%s4261 + $0x20] sm:$0xff] %vm547, %v4233
      %4267 = vst.msk [vmem:[%s4261 + $0x28] sm:$0xff] %vm547, %v4234
      %4268 = vst.msk [vmem:[%s4261 + $0x30] sm:$0xff] %vm547, %v4235
      %4269 = vst.msk [vmem:[%s4261 + $0x38] sm:$0xff] %vm547, %v4236
      %4270 = vst.msk [vmem:[%s4261 + $0x40] sm:$0xff] %vm547, %v4237
      %4271 = vst.msk [vmem:[%s4261 + $0x48] sm:$0xff] %vm547, %v4238
      %4272 = vst.msk [vmem:[%s4261 + $0x50] sm:$0xff] %vm547, %v4239
      %4273 = vst.msk [vmem:[%s4261 + $0x58] sm:$0xff] %vm547, %v4240
      %4274 = vst.msk [vmem:[%s4261 + $0x60] sm:$0xff] %vm547, %v4241
      %4275 = vst.msk [vmem:[%s4261 + $0x68] sm:$0xff] %vm547, %v4242
      %4276 = vst.msk [vmem:[%s4261 + $0x70] sm:$0xff] %vm547, %v4243
      %4277 = vst.msk [vmem:[%s4261 + $0x78] sm:$0xff] %vm547, %v4244
      %4278 = vst.msk [vmem:[%s4261 + $0x80] sm:$0xff] %vm547, %v4245
      %4279 = vst.msk [vmem:[%s4261 + $0x88] sm:$0xff] %vm547, %v4246
      %4280 = vst.msk [vmem:[%s4261 + $0x90] sm:$0xff] %vm547, %v4247
      %4281 = vst.msk [vmem:[%s4261 + $0x98] sm:$0xff] %vm547, %v4248
      %4282 = vst.msk [vmem:[%s4261 + $0xa0] sm:$0xff] %vm547, %v4249
      %4283 = vst.msk [vmem:[%s4261 + $0xa8] sm:$0xff] %vm547, %v4250
      %4284 = vst.msk [vmem:[%s4261 + $0xb0] sm:$0xff] %vm547, %v4251
      %4285 = vst.msk [vmem:[%s4261 + $0xb8] sm:$0xff] %vm547, %v4252
      %4286 = vst.msk [vmem:[%s4261 + $0xc0] sm:$0xff] %vm547, %v4253
      %4287 = vst.msk [vmem:[%s4261 + $0xc8] sm:$0xff] %vm547, %v4254
      %4288 = vst.msk [vmem:[%s4261 + $0xd0] sm:$0xff] %vm547, %v4255
      %4289 = vst.msk [vmem:[%s4261 + $0xd8] sm:$0xff] %vm547, %v4256
      %4290 = vst.msk [vmem:[%s4261 + $0xe0] sm:$0xff] %vm547, %v4257
      %4291 = vst.msk [vmem:[%s4261 + $0xe8] sm:$0xff] %vm547, %v4258
      %4292 = vst.msk [vmem:[%s4261 + $0xf0] sm:$0xff] %vm547, %v4259
      %4293 = vst.msk [vmem:[%s4261 + $0xf8] sm:$0xff] %vm547, %v4260
      %v4294 = vsel %vm547, %v4229, 0.0
      %v4295 = vsel %vm547, %v4230, 0.0
      %v4296 = vadd.f32 %v4294, %v4295
      %v4297 = vsel %vm547, %v4231, 0.0
      %v4298 = vadd.f32 %v4296, %v4297
      %v4299 = vsel %vm547, %v4232, 0.0
      %v4300 = vadd.f32 %v4298, %v4299
      %v4301 = vsel %vm547, %v4233, 0.0
      %v4302 = vadd.f32 %v4300, %v4301
      %v4303 = vsel %vm547, %v4234, 0.0
      %v4304 = vadd.f32 %v4302, %v4303
      %v4305 = vsel %vm547, %v4235, 0.0
      %v4306 = vadd.f32 %v4304, %v4305
      %v4307 = vsel %vm547, %v4236, 0.0
      %v4308 = vadd.f32 %v4306, %v4307
      %v4309 = vsel %vm547, %v4237, 0.0
      %v4310 = vadd.f32 %v4308, %v4309
      %v4311 = vsel %vm547, %v4238, 0.0
      %v4312 = vadd.f32 %v4310, %v4311
      %v4313 = vsel %vm547, %v4239, 0.0
      %v4314 = vadd.f32 %v4312, %v4313
      %v4315 = vsel %vm547, %v4240, 0.0
      %v4316 = vadd.f32 %v4314, %v4315
      %v4317 = vsel %vm547, %v4241, 0.0
      %v4318 = vadd.f32 %v4316, %v4317
      %v4319 = vsel %vm547, %v4242, 0.0
      %v4320 = vadd.f32 %v4318, %v4319
      %v4321 = vsel %vm547, %v4243, 0.0
      %v4322 = vadd.f32 %v4320, %v4321
      %v4323 = vsel %vm547, %v4244, 0.0
      %v4324 = vadd.f32 %v4322, %v4323
      %v4325 = vsel %vm547, %v4245, 0.0
      %v4326 = vadd.f32 %v4324, %v4325
      %v4327 = vsel %vm547, %v4246, 0.0
      %v4328 = vadd.f32 %v4326, %v4327
      %v4329 = vsel %vm547, %v4247, 0.0
      %v4330 = vadd.f32 %v4328, %v4329
      %v4331 = vsel %vm547, %v4248, 0.0
      %v4332 = vadd.f32 %v4330, %v4331
      %v4333 = vsel %vm547, %v4249, 0.0
      %v4334 = vadd.f32 %v4332, %v4333
      %v4335 = vsel %vm547, %v4250, 0.0
      %v4336 = vadd.f32 %v4334, %v4335
      %v4337 = vsel %vm547, %v4251, 0.0
      %v4338 = vadd.f32 %v4336, %v4337
      %v4339 = vsel %vm547, %v4252, 0.0
      %v4340 = vadd.f32 %v4338, %v4339
      %v4341 = vsel %vm547, %v4253, 0.0
      %v4342 = vadd.f32 %v4340, %v4341
      %v4343 = vsel %vm547, %v4254, 0.0
      %v4344 = vadd.f32 %v4342, %v4343
      %v4345 = vsel %vm547, %v4255, 0.0
      %v4346 = vadd.f32 %v4344, %v4345
      %v4347 = vsel %vm547, %v4256, 0.0
      %v4348 = vadd.f32 %v4346, %v4347
      %v4349 = vsel %vm547, %v4257, 0.0
      %v4350 = vadd.f32 %v4348, %v4349
      %v4351 = vsel %vm547, %v4258, 0.0
      %v4352 = vadd.f32 %v4350, %v4351
      %v4353 = vsel %vm547, %v4259, 0.0
      %v4354 = vadd.f32 %v4352, %v4353
      %v4355 = vsel %vm547, %v4260, 0.0
      %v4356 = vadd.f32 %v4354, %v4355
      %v4357 = vrot.slane %v4356, 4
      %v4358 = vadd.f32 %v4356, %v4357
      %v4359 = vrot.slane %v4358, 2
      %v4360 = vadd.f32 %v4358, %v4359
      %v4361 = vrot.slane %v4360, 1
      %v4362 = vadd.f32 %v4360, %v4361
      %v4363 = vadd.f32 %v3085, %v4362
      %v4364 = vmul.f32 %v4229, %v4229
      %v4365 = vmul.f32 %v4230, %v4230
      %v4366 = vmul.f32 %v4231, %v4231
      %v4367 = vmul.f32 %v4232, %v4232
      %v4368 = vmul.f32 %v4233, %v4233
      %v4369 = vmul.f32 %v4234, %v4234
      %v4370 = vmul.f32 %v4235, %v4235
      %v4371 = vmul.f32 %v4236, %v4236
      %v4372 = vmul.f32 %v4237, %v4237
      %v4373 = vmul.f32 %v4238, %v4238
      %v4374 = vmul.f32 %v4239, %v4239
      %v4375 = vmul.f32 %v4240, %v4240
      %v4376 = vmul.f32 %v4241, %v4241
      %v4377 = vmul.f32 %v4242, %v4242
      %v4378 = vmul.f32 %v4243, %v4243
      %v4379 = vmul.f32 %v4244, %v4244
      %v4380 = vmul.f32 %v4245, %v4245
      %v4381 = vmul.f32 %v4246, %v4246
      %v4382 = vmul.f32 %v4247, %v4247
      %v4383 = vmul.f32 %v4248, %v4248
      %v4384 = vmul.f32 %v4249, %v4249
      %v4385 = vmul.f32 %v4250, %v4250
      %v4386 = vmul.f32 %v4251, %v4251
      %v4387 = vmul.f32 %v4252, %v4252
      %v4388 = vmul.f32 %v4253, %v4253
      %v4389 = vmul.f32 %v4254, %v4254
      %v4390 = vmul.f32 %v4255, %v4255
      %v4391 = vmul.f32 %v4256, %v4256
      %v4392 = vmul.f32 %v4257, %v4257
      %v4393 = vmul.f32 %v4258, %v4258
      %v4394 = vmul.f32 %v4259, %v4259
      %v4395 = vmul.f32 %v4260, %v4260
      %v4396 = vsel %vm547, %v4364, 0.0
      %v4397 = vsel %vm547, %v4365, 0.0
      %v4398 = vadd.f32 %v4396, %v4397
      %v4399 = vsel %vm547, %v4366, 0.0
      %v4400 = vadd.f32 %v4398, %v4399
      %v4401 = vsel %vm547, %v4367, 0.0
      %v4402 = vadd.f32 %v4400, %v4401
      %v4403 = vsel %vm547, %v4368, 0.0
      %v4404 = vadd.f32 %v4402, %v4403
      %v4405 = vsel %vm547, %v4369, 0.0
      %v4406 = vadd.f32 %v4404, %v4405
      %v4407 = vsel %vm547, %v4370, 0.0
      %v4408 = vadd.f32 %v4406, %v4407
      %v4409 = vsel %vm547, %v4371, 0.0
      %v4410 = vadd.f32 %v4408, %v4409
      %v4411 = vsel %vm547, %v4372, 0.0
      %v4412 = vadd.f32 %v4410, %v4411
      %v4413 = vsel %vm547, %v4373, 0.0
      %v4414 = vadd.f32 %v4412, %v4413
      %v4415 = vsel %vm547, %v4374, 0.0
      %v4416 = vadd.f32 %v4414, %v4415
      %v4417 = vsel %vm547, %v4375, 0.0
      %v4418 = vadd.f32 %v4416, %v4417
      %v4419 = vsel %vm547, %v4376, 0.0
      %v4420 = vadd.f32 %v4418, %v4419
      %v4421 = vsel %vm547, %v4377, 0.0
      %v4422 = vadd.f32 %v4420, %v4421
      %v4423 = vsel %vm547, %v4378, 0.0
      %v4424 = vadd.f32 %v4422, %v4423
      %v4425 = vsel %vm547, %v4379, 0.0
      %v4426 = vadd.f32 %v4424, %v4425
      %v4427 = vsel %vm547, %v4380, 0.0
      %v4428 = vadd.f32 %v4426, %v4427
      %v4429 = vsel %vm547, %v4381, 0.0
      %v4430 = vadd.f32 %v4428, %v4429
      %v4431 = vsel %vm547, %v4382, 0.0
      %v4432 = vadd.f32 %v4430, %v4431
      %v4433 = vsel %vm547, %v4383, 0.0
      %v4434 = vadd.f32 %v4432, %v4433
      %v4435 = vsel %vm547, %v4384, 0.0
      %v4436 = vadd.f32 %v4434, %v4435
      %v4437 = vsel %vm547, %v4385, 0.0
      %v4438 = vadd.f32 %v4436, %v4437
      %v4439 = vsel %vm547, %v4386, 0.0
      %v4440 = vadd.f32 %v4438, %v4439
      %v4441 = vsel %vm547, %v4387, 0.0
      %v4442 = vadd.f32 %v4440, %v4441
      %v4443 = vsel %vm547, %v4388, 0.0
      %v4444 = vadd.f32 %v4442, %v4443
      %v4445 = vsel %vm547, %v4389, 0.0
      %v4446 = vadd.f32 %v4444, %v4445
      %v4447 = vsel %vm547, %v4390, 0.0
      %v4448 = vadd.f32 %v4446, %v4447
      %v4449 = vsel %vm547, %v4391, 0.0
      %v4450 = vadd.f32 %v4448, %v4449
      %v4451 = vsel %vm547, %v4392, 0.0
      %v4452 = vadd.f32 %v4450, %v4451
      %v4453 = vsel %vm547, %v4393, 0.0
      %v4454 = vadd.f32 %v4452, %v4453
      %v4455 = vsel %vm547, %v4394, 0.0
      %v4456 = vadd.f32 %v4454, %v4455
      %v4457 = vsel %vm547, %v4395, 0.0
      %v4458 = vadd.f32 %v4456, %v4457
      %v4459 = vrot.slane %v4458, 4
      %v4460 = vadd.f32 %v4458, %v4459
      %v4461 = vrot.slane %v4460, 2
      %v4462 = vadd.f32 %v4460, %v4461
      %v4463 = vrot.slane %v4462, 1
      %v4464 = vadd.f32 %v4462, %v4463
      %v4465 = vadd.f32 %v3187, %v4464
      %v4466 = vld [vmem:[%s603 + $0x1] sm:$0xff]
      %v4467 = vld [vmem:[%s603 + $0x9] sm:$0xff]
      %v4468 = vld [vmem:[%s603 + $0x19] sm:$0xff]
      %v4469 = vld [vmem:[%s603 + $0x21] sm:$0xff]
      %v4470 = vld [vmem:[%s603 + $0x31] sm:$0xff]
      %v4471 = vld [vmem:[%s603 + $0x39] sm:$0xff]
      %v4472 = vld [vmem:[%s603 + $0x49] sm:$0xff]
      %v4473 = vld [vmem:[%s603 + $0x51] sm:$0xff]
      %v4474 = vld [vmem:[%s603 + $0x61] sm:$0xff]
      %v4475 = vld [vmem:[%s603 + $0x69] sm:$0xff]
      %v4476 = vld [vmem:[%s603 + $0x79] sm:$0xff]
      %v4477 = vld [vmem:[%s603 + $0x81] sm:$0xff]
      %v4478 = vld [vmem:[%s603 + $0x91] sm:$0xff]
      %v4479 = vld [vmem:[%s603 + $0x99] sm:$0xff]
      %v4480 = vld [vmem:[%s603 + $0xa9] sm:$0xff]
      %v4481 = vld [vmem:[%s603 + $0xb1] sm:$0xff]
      %v4482 = vld [vmem:[%s603 + $0xc1] sm:$0xff]
      %v4483 = vld [vmem:[%s603 + $0xc9] sm:$0xff]
      %v4484 = vld [vmem:[%s603 + $0xd9] sm:$0xff]
      %v4485 = vld [vmem:[%s603 + $0xe1] sm:$0xff]
      %v4486 = vld [vmem:[%s603 + $0xf1] sm:$0xff]
      %v4487 = vld [vmem:[%s603 + $0xf9] sm:$0xff]
      %v4488 = vld [vmem:[%s603 + $0x109] sm:$0xff]
      %v4489 = vld [vmem:[%s603 + $0x111] sm:$0xff]
      %v4490 = vld [vmem:[%s603 + $0x121] sm:$0xff]
      %v4491 = vld [vmem:[%s603 + $0x129] sm:$0xff]
      %v4492 = vld [vmem:[%s603 + $0x139] sm:$0xff]
      %v4493 = vld [vmem:[%s603 + $0x141] sm:$0xff]
      %v4494 = vld [vmem:[%s603 + $0x151] sm:$0xff]
      %v4495 = vld [vmem:[%s603 + $0x159] sm:$0xff]
      %v4496 = vld [vmem:[%s603 + $0x169] sm:$0xff]
      %v4497 = vld [vmem:[%s603 + $0x171] sm:$0xff]
      %s4498 = scalar_lea.vmem %s3, 96
      %v4499 = vld [vmem:[%s4498] sm:$0xff]
      %v4500 = vld [vmem:[%s603 + $0x2] sm:$0xff]
      %v4501 = vld [vmem:[%s603 + $0xa] sm:$0xff]
      %v4502 = vld [vmem:[%s603 + $0x1a] sm:$0xff]
      %v4503 = vld [vmem:[%s603 + $0x22] sm:$0xff]
      %v4504 = vld [vmem:[%s603 + $0x32] sm:$0xff]
      %v4505 = vld [vmem:[%s603 + $0x3a] sm:$0xff]
      %v4506 = vld [vmem:[%s603 + $0x4a] sm:$0xff]
      %v4507 = vld [vmem:[%s603 + $0x52] sm:$0xff]
      %v4508 = vld [vmem:[%s603 + $0x62] sm:$0xff]
      %v4509 = vld [vmem:[%s603 + $0x6a] sm:$0xff]
      %v4510 = vld [vmem:[%s603 + $0x7a] sm:$0xff]
      %v4511 = vld [vmem:[%s603 + $0x82] sm:$0xff]
      %v4512 = vld [vmem:[%s603 + $0x92] sm:$0xff]
      %v4513 = vld [vmem:[%s603 + $0x9a] sm:$0xff]
      %v4514 = vld [vmem:[%s603 + $0xaa] sm:$0xff]
      %v4515 = vld [vmem:[%s603 + $0xb2] sm:$0xff]
      %v4516 = vld [vmem:[%s603 + $0xc2] sm:$0xff]
      %v4517 = vld [vmem:[%s603 + $0xca] sm:$0xff]
      %v4518 = vld [vmem:[%s603 + $0xda] sm:$0xff]
      %v4519 = vld [vmem:[%s603 + $0xe2] sm:$0xff]
      %v4520 = vld [vmem:[%s603 + $0xf2] sm:$0xff]
      %v4521 = vld [vmem:[%s603 + $0xfa] sm:$0xff]
      %v4522 = vld [vmem:[%s603 + $0x10a] sm:$0xff]
      %v4523 = vld [vmem:[%s603 + $0x112] sm:$0xff]
      %v4524 = vld [vmem:[%s603 + $0x122] sm:$0xff]
      %v4525 = vld [vmem:[%s603 + $0x12a] sm:$0xff]
      %v4526 = vld [vmem:[%s603 + $0x13a] sm:$0xff]
      %v4527 = vld [vmem:[%s603 + $0x142] sm:$0xff]
      %v4528 = vld [vmem:[%s603 + $0x152] sm:$0xff]
      %v4529 = vld [vmem:[%s603 + $0x15a] sm:$0xff]
      %v4530 = vld [vmem:[%s603 + $0x16a] sm:$0xff]
      %v4531 = vld [vmem:[%s603 + $0x172] sm:$0xff]
      %s4532 = scalar_lea.vmem %s3, 104
      %v4533 = vld [vmem:[%s4532] sm:$0xff]
      %v4535 = vsel %vm547, %v4500, 0
      %v4538 = vsel %vm547, %v4501, 0
      %v4541 = vsel %vm547, %v4502, 0
      %v4544 = vsel %vm547, %v4503, 0
      %v4547 = vsel %vm547, %v4504, 0
      %v4550 = vsel %vm547, %v4505, 0
      %v4553 = vsel %vm547, %v4506, 0
      %v4556 = vsel %vm547, %v4507, 0
      %v4559 = vsel %vm547, %v4508, 0
      %v4562 = vsel %vm547, %v4509, 0
      %v4565 = vsel %vm547, %v4510, 0
      %v4568 = vsel %vm547, %v4511, 0
      %v4571 = vsel %vm547, %v4512, 0
      %v4574 = vsel %vm547, %v4513, 0
      %v4577 = vsel %vm547, %v4514, 0
      %v4580 = vsel %vm547, %v4515, 0
      %v4583 = vsel %vm547, %v4516, 0
      %v4586 = vsel %vm547, %v4517, 0
      %v4589 = vsel %vm547, %v4518, 0
      %v4592 = vsel %vm547, %v4519, 0
      %v4595 = vsel %vm547, %v4520, 0
      %v4598 = vsel %vm547, %v4521, 0
      %v4601 = vsel %vm547, %v4522, 0
      %v4604 = vsel %vm547, %v4523, 0
      %v4607 = vsel %vm547, %v4524, 0
      %v4610 = vsel %vm547, %v4525, 0
      %v4613 = vsel %vm547, %v4526, 0
      %v4616 = vsel %vm547, %v4527, 0
      %v4619 = vsel %vm547, %v4528, 0
      %v4622 = vsel %vm547, %v4529, 0
      %v4625 = vsel %vm547, %v4530, 0
      %v4628 = vsel %vm547, %v4531, 0
      %4630 = vmatpush.msra.mxu0 0.0
      %4631 = vmatpush.msra.mxu0 0.0
      %4632 = vmatpush.msra.mxu0 0.0
      %4633 = vmatpush.msra.mxu0 0.0
      %4634 = vmatpush.msra.mxu0 0.0
      %4635 = vmatpush.msra.mxu0 0.0
      %4636 = vmatpush.msra.mxu0 0.0
      %4637 = vmatpush.msra.mxu0 0.0
      %4638 = vmatpush.msra.mxu0 0.0
      %4639 = vmatpush.msra.mxu0 0.0
      %4640 = vmatpush.msra.mxu0 0.0
      %4641 = vmatpush.msra.mxu0 0.0
      %4642 = vmatpush.msra.mxu0 0.0
      %4643 = vmatpush.msra.mxu0 0.0
      %4644 = vmatpush.msra.mxu0 0.0
      %4645 = vmatpush.msra.mxu0 %v4533
      %4646 = vmatmul.f32.gmra.mxu0 %v4535
      %v4647 = vpop.f32.mrf.mxu0
      %v4648 = vadd.f32 0.0, %v4647
      %4649 = vmatmul.f32.gmra.mxu0 %v4538
      %v4650 = vpop.f32.mrf.mxu0
      %v4651 = vadd.f32 0.0, %v4650
      %4652 = vmatmul.f32.gmra.mxu0 %v4541
      %v4653 = vpop.f32.mrf.mxu0
      %v4654 = vadd.f32 0.0, %v4653
      %4655 = vmatmul.f32.gmra.mxu0 %v4544
      %v4656 = vpop.f32.mrf.mxu0
      %v4657 = vadd.f32 0.0, %v4656
      %4658 = vmatmul.f32.gmra.mxu0 %v4547
      %v4659 = vpop.f32.mrf.mxu0
      %v4660 = vadd.f32 0.0, %v4659
      %4661 = vmatmul.f32.gmra.mxu0 %v4550
      %v4662 = vpop.f32.mrf.mxu0
      %v4663 = vadd.f32 0.0, %v4662
      %4664 = vmatmul.f32.gmra.mxu0 %v4553
      %v4665 = vpop.f32.mrf.mxu0
      %v4666 = vadd.f32 0.0, %v4665
      %4667 = vmatmul.f32.gmra.mxu0 %v4556
      %v4668 = vpop.f32.mrf.mxu0
      %v4669 = vadd.f32 0.0, %v4668
      %4670 = vmatmul.f32.gmra.mxu0 %v4559
      %v4671 = vpop.f32.mrf.mxu0
      %v4672 = vadd.f32 0.0, %v4671
      %4673 = vmatmul.f32.gmra.mxu0 %v4562
      %v4674 = vpop.f32.mrf.mxu0
      %v4675 = vadd.f32 0.0, %v4674
      %4676 = vmatmul.f32.gmra.mxu0 %v4565
      %v4677 = vpop.f32.mrf.mxu0
      %v4678 = vadd.f32 0.0, %v4677
      %4679 = vmatmul.f32.gmra.mxu0 %v4568
      %v4680 = vpop.f32.mrf.mxu0
      %v4681 = vadd.f32 0.0, %v4680
      %4682 = vmatmul.f32.gmra.mxu0 %v4571
      %v4683 = vpop.f32.mrf.mxu0
      %v4684 = vadd.f32 0.0, %v4683
      %4685 = vmatmul.f32.gmra.mxu0 %v4574
      %v4686 = vpop.f32.mrf.mxu0
      %v4687 = vadd.f32 0.0, %v4686
      %4688 = vmatmul.f32.gmra.mxu0 %v4577
      %v4689 = vpop.f32.mrf.mxu0
      %v4690 = vadd.f32 0.0, %v4689
      %4691 = vmatmul.f32.gmra.mxu0 %v4580
      %v4692 = vpop.f32.mrf.mxu0
      %v4693 = vadd.f32 0.0, %v4692
      %4694 = vmatmul.f32.gmra.mxu0 %v4583
      %v4695 = vpop.f32.mrf.mxu0
      %v4696 = vadd.f32 0.0, %v4695
      %4697 = vmatmul.f32.gmra.mxu0 %v4586
      %v4698 = vpop.f32.mrf.mxu0
      %v4699 = vadd.f32 0.0, %v4698
      %4700 = vmatmul.f32.gmra.mxu0 %v4589
      %v4701 = vpop.f32.mrf.mxu0
      %v4702 = vadd.f32 0.0, %v4701
      %4703 = vmatmul.f32.gmra.mxu0 %v4592
      %v4704 = vpop.f32.mrf.mxu0
      %v4705 = vadd.f32 0.0, %v4704
      %4706 = vmatmul.f32.gmra.mxu0 %v4595
      %v4707 = vpop.f32.mrf.mxu0
      %v4708 = vadd.f32 0.0, %v4707
      %4709 = vmatmul.f32.gmra.mxu0 %v4598
      %v4710 = vpop.f32.mrf.mxu0
      %v4711 = vadd.f32 0.0, %v4710
      %4712 = vmatmul.f32.gmra.mxu0 %v4601
      %v4713 = vpop.f32.mrf.mxu0
      %v4714 = vadd.f32 0.0, %v4713
      %4715 = vmatmul.f32.gmra.mxu0 %v4604
      %v4716 = vpop.f32.mrf.mxu0
      %v4717 = vadd.f32 0.0, %v4716
      %4718 = vmatmul.f32.gmra.mxu0 %v4607
      %v4719 = vpop.f32.mrf.mxu0
      %v4720 = vadd.f32 0.0, %v4719
      %4721 = vmatmul.f32.gmra.mxu0 %v4610
      %v4722 = vpop.f32.mrf.mxu0
      %v4723 = vadd.f32 0.0, %v4722
      %4724 = vmatmul.f32.gmra.mxu0 %v4613
      %v4725 = vpop.f32.mrf.mxu0
      %v4726 = vadd.f32 0.0, %v4725
      %4727 = vmatmul.f32.gmra.mxu0 %v4616
      %v4728 = vpop.f32.mrf.mxu0
      %v4729 = vadd.f32 0.0, %v4728
      %4730 = vmatmul.f32.gmra.mxu0 %v4619
      %v4731 = vpop.f32.mrf.mxu0
      %v4732 = vadd.f32 0.0, %v4731
      %4733 = vmatmul.f32.gmra.mxu0 %v4622
      %v4734 = vpop.f32.mrf.mxu0
      %v4735 = vadd.f32 0.0, %v4734
      %4736 = vmatmul.f32.gmra.mxu0 %v4625
      %v4737 = vpop.f32.mrf.mxu0
      %v4738 = vadd.f32 0.0, %v4737
      %4739 = vmatmul.f32.gmra.mxu0 %v4628
      %v4740 = vpop.f32.mrf.mxu0
      %v4741 = vadd.f32 0.0, %v4740
      %4742 = vdwg.mxu0
      %v4744 = vsel %vm547, %v4466, 0
      %v4747 = vsel %vm547, %v4467, 0
      %v4750 = vsel %vm547, %v4468, 0
      %v4753 = vsel %vm547, %v4469, 0
      %v4756 = vsel %vm547, %v4470, 0
      %v4759 = vsel %vm547, %v4471, 0
      %v4762 = vsel %vm547, %v4472, 0
      %v4765 = vsel %vm547, %v4473, 0
      %v4768 = vsel %vm547, %v4474, 0
      %v4771 = vsel %vm547, %v4475, 0
      %v4774 = vsel %vm547, %v4476, 0
      %v4777 = vsel %vm547, %v4477, 0
      %v4780 = vsel %vm547, %v4478, 0
      %v4783 = vsel %vm547, %v4479, 0
      %v4786 = vsel %vm547, %v4480, 0
      %v4789 = vsel %vm547, %v4481, 0
      %v4792 = vsel %vm547, %v4482, 0
      %v4795 = vsel %vm547, %v4483, 0
      %v4798 = vsel %vm547, %v4484, 0
      %v4801 = vsel %vm547, %v4485, 0
      %v4804 = vsel %vm547, %v4486, 0
      %v4807 = vsel %vm547, %v4487, 0
      %v4810 = vsel %vm547, %v4488, 0
      %v4813 = vsel %vm547, %v4489, 0
      %v4816 = vsel %vm547, %v4490, 0
      %v4819 = vsel %vm547, %v4491, 0
      %v4822 = vsel %vm547, %v4492, 0
      %v4825 = vsel %vm547, %v4493, 0
      %v4828 = vsel %vm547, %v4494, 0
      %v4831 = vsel %vm547, %v4495, 0
      %v4834 = vsel %vm547, %v4496, 0
      %v4837 = vsel %vm547, %v4497, 0
      %4839 = vmatpush.msra.mxu0 0.0
      %4840 = vmatpush.msra.mxu0 0.0
      %4841 = vmatpush.msra.mxu0 0.0
      %4842 = vmatpush.msra.mxu0 0.0
      %4843 = vmatpush.msra.mxu0 0.0
      %4844 = vmatpush.msra.mxu0 0.0
      %4845 = vmatpush.msra.mxu0 0.0
      %4846 = vmatpush.msra.mxu0 0.0
      %4847 = vmatpush.msra.mxu0 0.0
      %4848 = vmatpush.msra.mxu0 0.0
      %4849 = vmatpush.msra.mxu0 0.0
      %4850 = vmatpush.msra.mxu0 0.0
      %4851 = vmatpush.msra.mxu0 0.0
      %4852 = vmatpush.msra.mxu0 0.0
      %4853 = vmatpush.msra.mxu0 0.0
      %4854 = vmatpush.msra.mxu0 %v4499
      %4855 = vmatmul.f32.gmra.mxu0 %v4744
      %v4856 = vpop.f32.mrf.mxu0
      %v4857 = vadd.f32 %v4648, %v4856
      %4858 = vmatmul.f32.gmra.mxu0 %v4747
      %v4859 = vpop.f32.mrf.mxu0
      %v4860 = vadd.f32 %v4651, %v4859
      %4861 = vmatmul.f32.gmra.mxu0 %v4750
      %v4862 = vpop.f32.mrf.mxu0
      %v4863 = vadd.f32 %v4654, %v4862
      %4864 = vmatmul.f32.gmra.mxu0 %v4753
      %v4865 = vpop.f32.mrf.mxu0
      %v4866 = vadd.f32 %v4657, %v4865
      %4867 = vmatmul.f32.gmra.mxu0 %v4756
      %v4868 = vpop.f32.mrf.mxu0
      %v4869 = vadd.f32 %v4660, %v4868
      %4870 = vmatmul.f32.gmra.mxu0 %v4759
      %v4871 = vpop.f32.mrf.mxu0
      %v4872 = vadd.f32 %v4663, %v4871
      %4873 = vmatmul.f32.gmra.mxu0 %v4762
      %v4874 = vpop.f32.mrf.mxu0
      %v4875 = vadd.f32 %v4666, %v4874
      %4876 = vmatmul.f32.gmra.mxu0 %v4765
      %v4877 = vpop.f32.mrf.mxu0
      %v4878 = vadd.f32 %v4669, %v4877
      %4879 = vmatmul.f32.gmra.mxu0 %v4768
      %v4880 = vpop.f32.mrf.mxu0
      %v4881 = vadd.f32 %v4672, %v4880
      %4882 = vmatmul.f32.gmra.mxu0 %v4771
      %v4883 = vpop.f32.mrf.mxu0
      %v4884 = vadd.f32 %v4675, %v4883
      %4885 = vmatmul.f32.gmra.mxu0 %v4774
      %v4886 = vpop.f32.mrf.mxu0
      %v4887 = vadd.f32 %v4678, %v4886
      %4888 = vmatmul.f32.gmra.mxu0 %v4777
      %v4889 = vpop.f32.mrf.mxu0
      %v4890 = vadd.f32 %v4681, %v4889
      %4891 = vmatmul.f32.gmra.mxu0 %v4780
      %v4892 = vpop.f32.mrf.mxu0
      %v4893 = vadd.f32 %v4684, %v4892
      %4894 = vmatmul.f32.gmra.mxu0 %v4783
      %v4895 = vpop.f32.mrf.mxu0
      %v4896 = vadd.f32 %v4687, %v4895
      %4897 = vmatmul.f32.gmra.mxu0 %v4786
      %v4898 = vpop.f32.mrf.mxu0
      %v4899 = vadd.f32 %v4690, %v4898
      %4900 = vmatmul.f32.gmra.mxu0 %v4789
      %v4901 = vpop.f32.mrf.mxu0
      %v4902 = vadd.f32 %v4693, %v4901
      %4903 = vmatmul.f32.gmra.mxu0 %v4792
      %v4904 = vpop.f32.mrf.mxu0
      %v4905 = vadd.f32 %v4696, %v4904
      %4906 = vmatmul.f32.gmra.mxu0 %v4795
      %v4907 = vpop.f32.mrf.mxu0
      %v4908 = vadd.f32 %v4699, %v4907
      %4909 = vmatmul.f32.gmra.mxu0 %v4798
      %v4910 = vpop.f32.mrf.mxu0
      %v4911 = vadd.f32 %v4702, %v4910
      %4912 = vmatmul.f32.gmra.mxu0 %v4801
      %v4913 = vpop.f32.mrf.mxu0
      %v4914 = vadd.f32 %v4705, %v4913
      %4915 = vmatmul.f32.gmra.mxu0 %v4804
      %v4916 = vpop.f32.mrf.mxu0
      %v4917 = vadd.f32 %v4708, %v4916
      %4918 = vmatmul.f32.gmra.mxu0 %v4807
      %v4919 = vpop.f32.mrf.mxu0
      %v4920 = vadd.f32 %v4711, %v4919
      %4921 = vmatmul.f32.gmra.mxu0 %v4810
      %v4922 = vpop.f32.mrf.mxu0
      %v4923 = vadd.f32 %v4714, %v4922
      %4924 = vmatmul.f32.gmra.mxu0 %v4813
      %v4925 = vpop.f32.mrf.mxu0
      %v4926 = vadd.f32 %v4717, %v4925
      %4927 = vmatmul.f32.gmra.mxu0 %v4816
      %v4928 = vpop.f32.mrf.mxu0
      %v4929 = vadd.f32 %v4720, %v4928
      %4930 = vmatmul.f32.gmra.mxu0 %v4819
      %v4931 = vpop.f32.mrf.mxu0
      %v4932 = vadd.f32 %v4723, %v4931
      %4933 = vmatmul.f32.gmra.mxu0 %v4822
      %v4934 = vpop.f32.mrf.mxu0
      %v4935 = vadd.f32 %v4726, %v4934
      %4936 = vmatmul.f32.gmra.mxu0 %v4825
      %v4937 = vpop.f32.mrf.mxu0
      %v4938 = vadd.f32 %v4729, %v4937
      %4939 = vmatmul.f32.gmra.mxu0 %v4828
      %v4940 = vpop.f32.mrf.mxu0
      %v4941 = vadd.f32 %v4732, %v4940
      %4942 = vmatmul.f32.gmra.mxu0 %v4831
      %v4943 = vpop.f32.mrf.mxu0
      %v4944 = vadd.f32 %v4735, %v4943
      %4945 = vmatmul.f32.gmra.mxu0 %v4834
      %v4946 = vpop.f32.mrf.mxu0
      %v4947 = vadd.f32 %v4738, %v4946
      %4948 = vmatmul.f32.gmra.mxu0 %v4837
      %v4949 = vpop.f32.mrf.mxu0
      %v4950 = vadd.f32 %v4741, %v4949
      %4951 = vdwg.mxu0
      %v4952 = vld [vmem:[%s3674 + $0x1] sm:$0xff]
      %v4953 = vld [vmem:[%s3674 + $0x9] sm:$0xff]
      %v4954 = vld [vmem:[%s3674 + $0x19] sm:$0xff]
      %v4955 = vld [vmem:[%s3674 + $0x21] sm:$0xff]
      %v4956 = vld [vmem:[%s3674 + $0x31] sm:$0xff]
      %v4957 = vld [vmem:[%s3674 + $0x39] sm:$0xff]
      %v4958 = vld [vmem:[%s3674 + $0x49] sm:$0xff]
      %v4959 = vld [vmem:[%s3674 + $0x51] sm:$0xff]
      %v4960 = vld [vmem:[%s3674 + $0x61] sm:$0xff]
      %v4961 = vld [vmem:[%s3674 + $0x69] sm:$0xff]
      %v4962 = vld [vmem:[%s3674 + $0x79] sm:$0xff]
      %v4963 = vld [vmem:[%s3674 + $0x81] sm:$0xff]
      %v4964 = vld [vmem:[%s3674 + $0x91] sm:$0xff]
      %v4965 = vld [vmem:[%s3674 + $0x99] sm:$0xff]
      %v4966 = vld [vmem:[%s3674 + $0xa9] sm:$0xff]
      %v4967 = vld [vmem:[%s3674 + $0xb1] sm:$0xff]
      %v4968 = vld [vmem:[%s3674 + $0xc1] sm:$0xff]
      %v4969 = vld [vmem:[%s3674 + $0xc9] sm:$0xff]
      %v4970 = vld [vmem:[%s3674 + $0xd9] sm:$0xff]
      %v4971 = vld [vmem:[%s3674 + $0xe1] sm:$0xff]
      %v4972 = vld [vmem:[%s3674 + $0xf1] sm:$0xff]
      %v4973 = vld [vmem:[%s3674 + $0xf9] sm:$0xff]
      %v4974 = vld [vmem:[%s3674 + $0x109] sm:$0xff]
      %v4975 = vld [vmem:[%s3674 + $0x111] sm:$0xff]
      %v4976 = vld [vmem:[%s3674 + $0x121] sm:$0xff]
      %v4977 = vld [vmem:[%s3674 + $0x129] sm:$0xff]
      %v4978 = vld [vmem:[%s3674 + $0x139] sm:$0xff]
      %v4979 = vld [vmem:[%s3674 + $0x141] sm:$0xff]
      %v4980 = vld [vmem:[%s3674 + $0x151] sm:$0xff]
      %v4981 = vld [vmem:[%s3674 + $0x159] sm:$0xff]
      %v4982 = vld [vmem:[%s3674 + $0x169] sm:$0xff]
      %v4983 = vld [vmem:[%s3674 + $0x171] sm:$0xff]
      %s4984 = scalar_lea.vmem %s3, 112
      %v4985 = vld [vmem:[%s4984] sm:$0xff]
      %v4987 = vsel %vm547, %v4952, 0
      %v4990 = vsel %vm547, %v4953, 0
      %v4993 = vsel %vm547, %v4954, 0
      %v4996 = vsel %vm547, %v4955, 0
      %v4999 = vsel %vm547, %v4956, 0
      %v5002 = vsel %vm547, %v4957, 0
      %v5005 = vsel %vm547, %v4958, 0
      %v5008 = vsel %vm547, %v4959, 0
      %v5011 = vsel %vm547, %v4960, 0
      %v5014 = vsel %vm547, %v4961, 0
      %v5017 = vsel %vm547, %v4962, 0
      %v5020 = vsel %vm547, %v4963, 0
      %v5023 = vsel %vm547, %v4964, 0
      %v5026 = vsel %vm547, %v4965, 0
      %v5029 = vsel %vm547, %v4966, 0
      %v5032 = vsel %vm547, %v4967, 0
      %v5035 = vsel %vm547, %v4968, 0
      %v5038 = vsel %vm547, %v4969, 0
      %v5041 = vsel %vm547, %v4970, 0
      %v5044 = vsel %vm547, %v4971, 0
      %v5047 = vsel %vm547, %v4972, 0
      %v5050 = vsel %vm547, %v4973, 0
      %v5053 = vsel %vm547, %v4974, 0
      %v5056 = vsel %vm547, %v4975, 0
      %v5059 = vsel %vm547, %v4976, 0
      %v5062 = vsel %vm547, %v4977, 0
      %v5065 = vsel %vm547, %v4978, 0
      %v5068 = vsel %vm547, %v4979, 0
      %v5071 = vsel %vm547, %v4980, 0
      %v5074 = vsel %vm547, %v4981, 0
      %v5077 = vsel %vm547, %v4982, 0
      %v5080 = vsel %vm547, %v4983, 0
      %5082 = vmatpush.msra.mxu0 0.0
      %5083 = vmatpush.msra.mxu0 0.0
      %5084 = vmatpush.msra.mxu0 0.0
      %5085 = vmatpush.msra.mxu0 0.0
      %5086 = vmatpush.msra.mxu0 0.0
      %5087 = vmatpush.msra.mxu0 0.0
      %5088 = vmatpush.msra.mxu0 0.0
      %5089 = vmatpush.msra.mxu0 0.0
      %5090 = vmatpush.msra.mxu0 0.0
      %5091 = vmatpush.msra.mxu0 0.0
      %5092 = vmatpush.msra.mxu0 0.0
      %5093 = vmatpush.msra.mxu0 0.0
      %5094 = vmatpush.msra.mxu0 0.0
      %5095 = vmatpush.msra.mxu0 0.0
      %5096 = vmatpush.msra.mxu0 0.0
      %5097 = vmatpush.msra.mxu0 %v4985
      %5098 = vmatmul.f32.gmra.mxu0 %v4987
      %v5099 = vpop.f32.mrf.mxu0
      %v5100 = vadd.f32 0.0, %v5099
      %5101 = vmatmul.f32.gmra.mxu0 %v4990
      %v5102 = vpop.f32.mrf.mxu0
      %v5103 = vadd.f32 0.0, %v5102
      %5104 = vmatmul.f32.gmra.mxu0 %v4993
      %v5105 = vpop.f32.mrf.mxu0
      %v5106 = vadd.f32 0.0, %v5105
      %5107 = vmatmul.f32.gmra.mxu0 %v4996
      %v5108 = vpop.f32.mrf.mxu0
      %v5109 = vadd.f32 0.0, %v5108
      %5110 = vmatmul.f32.gmra.mxu0 %v4999
      %v5111 = vpop.f32.mrf.mxu0
      %v5112 = vadd.f32 0.0, %v5111
      %5113 = vmatmul.f32.gmra.mxu0 %v5002
      %v5114 = vpop.f32.mrf.mxu0
      %v5115 = vadd.f32 0.0, %v5114
      %5116 = vmatmul.f32.gmra.mxu0 %v5005
      %v5117 = vpop.f32.mrf.mxu0
      %v5118 = vadd.f32 0.0, %v5117
      %5119 = vmatmul.f32.gmra.mxu0 %v5008
      %v5120 = vpop.f32.mrf.mxu0
      %v5121 = vadd.f32 0.0, %v5120
      %5122 = vmatmul.f32.gmra.mxu0 %v5011
      %v5123 = vpop.f32.mrf.mxu0
      %v5124 = vadd.f32 0.0, %v5123
      %5125 = vmatmul.f32.gmra.mxu0 %v5014
      %v5126 = vpop.f32.mrf.mxu0
      %v5127 = vadd.f32 0.0, %v5126
      %5128 = vmatmul.f32.gmra.mxu0 %v5017
      %v5129 = vpop.f32.mrf.mxu0
      %v5130 = vadd.f32 0.0, %v5129
      %5131 = vmatmul.f32.gmra.mxu0 %v5020
      %v5132 = vpop.f32.mrf.mxu0
      %v5133 = vadd.f32 0.0, %v5132
      %5134 = vmatmul.f32.gmra.mxu0 %v5023
      %v5135 = vpop.f32.mrf.mxu0
      %v5136 = vadd.f32 0.0, %v5135
      %5137 = vmatmul.f32.gmra.mxu0 %v5026
      %v5138 = vpop.f32.mrf.mxu0
      %v5139 = vadd.f32 0.0, %v5138
      %5140 = vmatmul.f32.gmra.mxu0 %v5029
      %v5141 = vpop.f32.mrf.mxu0
      %v5142 = vadd.f32 0.0, %v5141
      %5143 = vmatmul.f32.gmra.mxu0 %v5032
      %v5144 = vpop.f32.mrf.mxu0
      %v5145 = vadd.f32 0.0, %v5144
      %5146 = vmatmul.f32.gmra.mxu0 %v5035
      %v5147 = vpop.f32.mrf.mxu0
      %v5148 = vadd.f32 0.0, %v5147
      %5149 = vmatmul.f32.gmra.mxu0 %v5038
      %v5150 = vpop.f32.mrf.mxu0
      %v5151 = vadd.f32 0.0, %v5150
      %5152 = vmatmul.f32.gmra.mxu0 %v5041
      %v5153 = vpop.f32.mrf.mxu0
      %v5154 = vadd.f32 0.0, %v5153
      %5155 = vmatmul.f32.gmra.mxu0 %v5044
      %v5156 = vpop.f32.mrf.mxu0
      %v5157 = vadd.f32 0.0, %v5156
      %5158 = vmatmul.f32.gmra.mxu0 %v5047
      %v5159 = vpop.f32.mrf.mxu0
      %v5160 = vadd.f32 0.0, %v5159
      %5161 = vmatmul.f32.gmra.mxu0 %v5050
      %v5162 = vpop.f32.mrf.mxu0
      %v5163 = vadd.f32 0.0, %v5162
      %5164 = vmatmul.f32.gmra.mxu0 %v5053
      %v5165 = vpop.f32.mrf.mxu0
      %v5166 = vadd.f32 0.0, %v5165
      %5167 = vmatmul.f32.gmra.mxu0 %v5056
      %v5168 = vpop.f32.mrf.mxu0
      %v5169 = vadd.f32 0.0, %v5168
      %5170 = vmatmul.f32.gmra.mxu0 %v5059
      %v5171 = vpop.f32.mrf.mxu0
      %v5172 = vadd.f32 0.0, %v5171
      %5173 = vmatmul.f32.gmra.mxu0 %v5062
      %v5174 = vpop.f32.mrf.mxu0
      %v5175 = vadd.f32 0.0, %v5174
      %5176 = vmatmul.f32.gmra.mxu0 %v5065
      %v5177 = vpop.f32.mrf.mxu0
      %v5178 = vadd.f32 0.0, %v5177
      %5179 = vmatmul.f32.gmra.mxu0 %v5068
      %v5180 = vpop.f32.mrf.mxu0
      %v5181 = vadd.f32 0.0, %v5180
      %5182 = vmatmul.f32.gmra.mxu0 %v5071
      %v5183 = vpop.f32.mrf.mxu0
      %v5184 = vadd.f32 0.0, %v5183
      %5185 = vmatmul.f32.gmra.mxu0 %v5074
      %v5186 = vpop.f32.mrf.mxu0
      %v5187 = vadd.f32 0.0, %v5186
      %5188 = vmatmul.f32.gmra.mxu0 %v5077
      %v5189 = vpop.f32.mrf.mxu0
      %v5190 = vadd.f32 0.0, %v5189
      %5191 = vmatmul.f32.gmra.mxu0 %v5080
      %v5192 = vpop.f32.mrf.mxu0
      %v5193 = vadd.f32 0.0, %v5192
      %5194 = vdwg.mxu0
      %v5195 = vadd.f32 %v4857, %v5100
      %v5196 = vadd.f32 %v4860, %v5103
      %v5197 = vadd.f32 %v4863, %v5106
      %v5198 = vadd.f32 %v4866, %v5109
      %v5199 = vadd.f32 %v4869, %v5112
      %v5200 = vadd.f32 %v4872, %v5115
      %v5201 = vadd.f32 %v4875, %v5118
      %v5202 = vadd.f32 %v4878, %v5121
      %v5203 = vadd.f32 %v4881, %v5124
      %v5204 = vadd.f32 %v4884, %v5127
      %v5205 = vadd.f32 %v4887, %v5130
      %v5206 = vadd.f32 %v4890, %v5133
      %v5207 = vadd.f32 %v4893, %v5136
      %v5208 = vadd.f32 %v4896, %v5139
      %v5209 = vadd.f32 %v4899, %v5142
      %v5210 = vadd.f32 %v4902, %v5145
      %v5211 = vadd.f32 %v4905, %v5148
      %v5212 = vadd.f32 %v4908, %v5151
      %v5213 = vadd.f32 %v4911, %v5154
      %v5214 = vadd.f32 %v4914, %v5157
      %v5215 = vadd.f32 %v4917, %v5160
      %v5216 = vadd.f32 %v4920, %v5163
      %v5217 = vadd.f32 %v4923, %v5166
      %v5218 = vadd.f32 %v4926, %v5169
      %v5219 = vadd.f32 %v4929, %v5172
      %v5220 = vadd.f32 %v4932, %v5175
      %v5221 = vadd.f32 %v4935, %v5178
      %v5222 = vadd.f32 %v4938, %v5181
      %v5223 = vadd.f32 %v4941, %v5184
      %v5224 = vadd.f32 %v4944, %v5187
      %v5225 = vadd.f32 %v4947, %v5190
      %v5226 = vadd.f32 %v4950, %v5193
      %v5227 = vld [vmem:[%s3674 + $0x2] sm:$0xff]
      %v5228 = vld [vmem:[%s3674 + $0xa] sm:$0xff]
      %v5229 = vld [vmem:[%s3674 + $0x1a] sm:$0xff]
      %v5230 = vld [vmem:[%s3674 + $0x22] sm:$0xff]
      %v5231 = vld [vmem:[%s3674 + $0x32] sm:$0xff]
      %v5232 = vld [vmem:[%s3674 + $0x3a] sm:$0xff]
      %v5233 = vld [vmem:[%s3674 + $0x4a] sm:$0xff]
      %v5234 = vld [vmem:[%s3674 + $0x52] sm:$0xff]
      %v5235 = vld [vmem:[%s3674 + $0x62] sm:$0xff]
      %v5236 = vld [vmem:[%s3674 + $0x6a] sm:$0xff]
      %v5237 = vld [vmem:[%s3674 + $0x7a] sm:$0xff]
      %v5238 = vld [vmem:[%s3674 + $0x82] sm:$0xff]
      %v5239 = vld [vmem:[%s3674 + $0x92] sm:$0xff]
      %v5240 = vld [vmem:[%s3674 + $0x9a] sm:$0xff]
      %v5241 = vld [vmem:[%s3674 + $0xaa] sm:$0xff]
      %v5242 = vld [vmem:[%s3674 + $0xb2] sm:$0xff]
      %v5243 = vld [vmem:[%s3674 + $0xc2] sm:$0xff]
      %v5244 = vld [vmem:[%s3674 + $0xca] sm:$0xff]
      %v5245 = vld [vmem:[%s3674 + $0xda] sm:$0xff]
      %v5246 = vld [vmem:[%s3674 + $0xe2] sm:$0xff]
      %v5247 = vld [vmem:[%s3674 + $0xf2] sm:$0xff]
      %v5248 = vld [vmem:[%s3674 + $0xfa] sm:$0xff]
      %v5249 = vld [vmem:[%s3674 + $0x10a] sm:$0xff]
      %v5250 = vld [vmem:[%s3674 + $0x112] sm:$0xff]
      %v5251 = vld [vmem:[%s3674 + $0x122] sm:$0xff]
      %v5252 = vld [vmem:[%s3674 + $0x12a] sm:$0xff]
      %v5253 = vld [vmem:[%s3674 + $0x13a] sm:$0xff]
      %v5254 = vld [vmem:[%s3674 + $0x142] sm:$0xff]
      %v5255 = vld [vmem:[%s3674 + $0x152] sm:$0xff]
      %v5256 = vld [vmem:[%s3674 + $0x15a] sm:$0xff]
      %v5257 = vld [vmem:[%s3674 + $0x16a] sm:$0xff]
      %v5258 = vld [vmem:[%s3674 + $0x172] sm:$0xff]
      %s5259 = scalar_lea.vmem %s3, 120
      %v5260 = vld [vmem:[%s5259] sm:$0xff]
      %v5262 = vsel %vm547, %v5227, 0
      %v5265 = vsel %vm547, %v5228, 0
      %v5268 = vsel %vm547, %v5229, 0
      %v5271 = vsel %vm547, %v5230, 0
      %v5274 = vsel %vm547, %v5231, 0
      %v5277 = vsel %vm547, %v5232, 0
      %v5280 = vsel %vm547, %v5233, 0
      %v5283 = vsel %vm547, %v5234, 0
      %v5286 = vsel %vm547, %v5235, 0
      %v5289 = vsel %vm547, %v5236, 0
      %v5292 = vsel %vm547, %v5237, 0
      %v5295 = vsel %vm547, %v5238, 0
      %v5298 = vsel %vm547, %v5239, 0
      %v5301 = vsel %vm547, %v5240, 0
      %v5304 = vsel %vm547, %v5241, 0
      %v5307 = vsel %vm547, %v5242, 0
      %v5310 = vsel %vm547, %v5243, 0
      %v5313 = vsel %vm547, %v5244, 0
      %v5316 = vsel %vm547, %v5245, 0
      %v5319 = vsel %vm547, %v5246, 0
      %v5322 = vsel %vm547, %v5247, 0
      %v5325 = vsel %vm547, %v5248, 0
      %v5328 = vsel %vm547, %v5249, 0
      %v5331 = vsel %vm547, %v5250, 0
      %v5334 = vsel %vm547, %v5251, 0
      %v5337 = vsel %vm547, %v5252, 0
      %v5340 = vsel %vm547, %v5253, 0
      %v5343 = vsel %vm547, %v5254, 0
      %v5346 = vsel %vm547, %v5255, 0
      %v5349 = vsel %vm547, %v5256, 0
      %v5352 = vsel %vm547, %v5257, 0
      %v5355 = vsel %vm547, %v5258, 0
      %5357 = vmatpush.msra.mxu0 0.0
      %5358 = vmatpush.msra.mxu0 0.0
      %5359 = vmatpush.msra.mxu0 0.0
      %5360 = vmatpush.msra.mxu0 0.0
      %5361 = vmatpush.msra.mxu0 0.0
      %5362 = vmatpush.msra.mxu0 0.0
      %5363 = vmatpush.msra.mxu0 0.0
      %5364 = vmatpush.msra.mxu0 0.0
      %5365 = vmatpush.msra.mxu0 0.0
      %5366 = vmatpush.msra.mxu0 0.0
      %5367 = vmatpush.msra.mxu0 0.0
      %5368 = vmatpush.msra.mxu0 0.0
      %5369 = vmatpush.msra.mxu0 0.0
      %5370 = vmatpush.msra.mxu0 0.0
      %5371 = vmatpush.msra.mxu0 0.0
      %5372 = vmatpush.msra.mxu0 %v5260
      %5373 = vmatmul.f32.gmra.mxu0 %v5262
      %v5374 = vpop.f32.mrf.mxu0
      %v5375 = vadd.f32 0.0, %v5374
      %5376 = vmatmul.f32.gmra.mxu0 %v5265
      %v5377 = vpop.f32.mrf.mxu0
      %v5378 = vadd.f32 0.0, %v5377
      %5379 = vmatmul.f32.gmra.mxu0 %v5268
      %v5380 = vpop.f32.mrf.mxu0
      %v5381 = vadd.f32 0.0, %v5380
      %5382 = vmatmul.f32.gmra.mxu0 %v5271
      %v5383 = vpop.f32.mrf.mxu0
      %v5384 = vadd.f32 0.0, %v5383
      %5385 = vmatmul.f32.gmra.mxu0 %v5274
      %v5386 = vpop.f32.mrf.mxu0
      %v5387 = vadd.f32 0.0, %v5386
      %5388 = vmatmul.f32.gmra.mxu0 %v5277
      %v5389 = vpop.f32.mrf.mxu0
      %v5390 = vadd.f32 0.0, %v5389
      %5391 = vmatmul.f32.gmra.mxu0 %v5280
      %v5392 = vpop.f32.mrf.mxu0
      %v5393 = vadd.f32 0.0, %v5392
      %5394 = vmatmul.f32.gmra.mxu0 %v5283
      %v5395 = vpop.f32.mrf.mxu0
      %v5396 = vadd.f32 0.0, %v5395
      %5397 = vmatmul.f32.gmra.mxu0 %v5286
      %v5398 = vpop.f32.mrf.mxu0
      %v5399 = vadd.f32 0.0, %v5398
      %5400 = vmatmul.f32.gmra.mxu0 %v5289
      %v5401 = vpop.f32.mrf.mxu0
      %v5402 = vadd.f32 0.0, %v5401
      %5403 = vmatmul.f32.gmra.mxu0 %v5292
      %v5404 = vpop.f32.mrf.mxu0
      %v5405 = vadd.f32 0.0, %v5404
      %5406 = vmatmul.f32.gmra.mxu0 %v5295
      %v5407 = vpop.f32.mrf.mxu0
      %v5408 = vadd.f32 0.0, %v5407
      %5409 = vmatmul.f32.gmra.mxu0 %v5298
      %v5410 = vpop.f32.mrf.mxu0
      %v5411 = vadd.f32 0.0, %v5410
      %5412 = vmatmul.f32.gmra.mxu0 %v5301
      %v5413 = vpop.f32.mrf.mxu0
      %v5414 = vadd.f32 0.0, %v5413
      %5415 = vmatmul.f32.gmra.mxu0 %v5304
      %v5416 = vpop.f32.mrf.mxu0
      %v5417 = vadd.f32 0.0, %v5416
      %5418 = vmatmul.f32.gmra.mxu0 %v5307
      %v5419 = vpop.f32.mrf.mxu0
      %v5420 = vadd.f32 0.0, %v5419
      %5421 = vmatmul.f32.gmra.mxu0 %v5310
      %v5422 = vpop.f32.mrf.mxu0
      %v5423 = vadd.f32 0.0, %v5422
      %5424 = vmatmul.f32.gmra.mxu0 %v5313
      %v5425 = vpop.f32.mrf.mxu0
      %v5426 = vadd.f32 0.0, %v5425
      %5427 = vmatmul.f32.gmra.mxu0 %v5316
      %v5428 = vpop.f32.mrf.mxu0
      %v5429 = vadd.f32 0.0, %v5428
      %5430 = vmatmul.f32.gmra.mxu0 %v5319
      %v5431 = vpop.f32.mrf.mxu0
      %v5432 = vadd.f32 0.0, %v5431
      %5433 = vmatmul.f32.gmra.mxu0 %v5322
      %v5434 = vpop.f32.mrf.mxu0
      %v5435 = vadd.f32 0.0, %v5434
      %5436 = vmatmul.f32.gmra.mxu0 %v5325
      %v5437 = vpop.f32.mrf.mxu0
      %v5438 = vadd.f32 0.0, %v5437
      %5439 = vmatmul.f32.gmra.mxu0 %v5328
      %v5440 = vpop.f32.mrf.mxu0
      %v5441 = vadd.f32 0.0, %v5440
      %5442 = vmatmul.f32.gmra.mxu0 %v5331
      %v5443 = vpop.f32.mrf.mxu0
      %v5444 = vadd.f32 0.0, %v5443
      %5445 = vmatmul.f32.gmra.mxu0 %v5334
      %v5446 = vpop.f32.mrf.mxu0
      %v5447 = vadd.f32 0.0, %v5446
      %5448 = vmatmul.f32.gmra.mxu0 %v5337
      %v5449 = vpop.f32.mrf.mxu0
      %v5450 = vadd.f32 0.0, %v5449
      %5451 = vmatmul.f32.gmra.mxu0 %v5340
      %v5452 = vpop.f32.mrf.mxu0
      %v5453 = vadd.f32 0.0, %v5452
      %5454 = vmatmul.f32.gmra.mxu0 %v5343
      %v5455 = vpop.f32.mrf.mxu0
      %v5456 = vadd.f32 0.0, %v5455
      %5457 = vmatmul.f32.gmra.mxu0 %v5346
      %v5458 = vpop.f32.mrf.mxu0
      %v5459 = vadd.f32 0.0, %v5458
      %5460 = vmatmul.f32.gmra.mxu0 %v5349
      %v5461 = vpop.f32.mrf.mxu0
      %v5462 = vadd.f32 0.0, %v5461
      %5463 = vmatmul.f32.gmra.mxu0 %v5352
      %v5464 = vpop.f32.mrf.mxu0
      %v5465 = vadd.f32 0.0, %v5464
      %5466 = vmatmul.f32.gmra.mxu0 %v5355
      %v5467 = vpop.f32.mrf.mxu0
      %v5468 = vadd.f32 0.0, %v5467
      %5469 = vdwg.mxu0
      %v5470 = vadd.f32 %v5195, %v5375
      %v5471 = vadd.f32 %v5196, %v5378
      %v5472 = vadd.f32 %v5197, %v5381
      %v5473 = vadd.f32 %v5198, %v5384
      %v5474 = vadd.f32 %v5199, %v5387
      %v5475 = vadd.f32 %v5200, %v5390
      %v5476 = vadd.f32 %v5201, %v5393
      %v5477 = vadd.f32 %v5202, %v5396
      %v5478 = vadd.f32 %v5203, %v5399
      %v5479 = vadd.f32 %v5204, %v5402
      %v5480 = vadd.f32 %v5205, %v5405
      %v5481 = vadd.f32 %v5206, %v5408
      %v5482 = vadd.f32 %v5207, %v5411
      %v5483 = vadd.f32 %v5208, %v5414
      %v5484 = vadd.f32 %v5209, %v5417
      %v5485 = vadd.f32 %v5210, %v5420
      %v5486 = vadd.f32 %v5211, %v5423
      %v5487 = vadd.f32 %v5212, %v5426
      %v5488 = vadd.f32 %v5213, %v5429
      %v5489 = vadd.f32 %v5214, %v5432
      %v5490 = vadd.f32 %v5215, %v5435
      %v5491 = vadd.f32 %v5216, %v5438
      %v5492 = vadd.f32 %v5217, %v5441
      %v5493 = vadd.f32 %v5218, %v5444
      %v5494 = vadd.f32 %v5219, %v5447
      %v5495 = vadd.f32 %v5220, %v5450
      %v5496 = vadd.f32 %v5221, %v5453
      %v5497 = vadd.f32 %v5222, %v5456
      %v5498 = vadd.f32 %v5223, %v5459
      %v5499 = vadd.f32 %v5224, %v5462
      %v5500 = vadd.f32 %v5225, %v5465
      %v5501 = vadd.f32 %v5226, %v5468
      %v5502 = vld [vmem:[%s4] sm:$0x1]
      %v5504 = vperm.slane %v5502, 0
      %v5506 = vadd.f32 %v5470, %v5504
      %v5507 = vadd.f32 %v5471, %v5504
      %v5508 = vadd.f32 %v5472, %v5504
      %v5509 = vadd.f32 %v5473, %v5504
      %v5510 = vadd.f32 %v5474, %v5504
      %v5511 = vadd.f32 %v5475, %v5504
      %v5512 = vadd.f32 %v5476, %v5504
      %v5513 = vadd.f32 %v5477, %v5504
      %v5514 = vadd.f32 %v5478, %v5504
      %v5515 = vadd.f32 %v5479, %v5504
      %v5516 = vadd.f32 %v5480, %v5504
      %v5517 = vadd.f32 %v5481, %v5504
      %v5518 = vadd.f32 %v5482, %v5504
      %v5519 = vadd.f32 %v5483, %v5504
      %v5520 = vadd.f32 %v5484, %v5504
      %v5521 = vadd.f32 %v5485, %v5504
      %v5522 = vadd.f32 %v5486, %v5504
      %v5523 = vadd.f32 %v5487, %v5504
      %v5524 = vadd.f32 %v5488, %v5504
      %v5525 = vadd.f32 %v5489, %v5504
      %v5526 = vadd.f32 %v5490, %v5504
      %v5527 = vadd.f32 %v5491, %v5504
      %v5528 = vadd.f32 %v5492, %v5504
      %v5529 = vadd.f32 %v5493, %v5504
      %v5530 = vadd.f32 %v5494, %v5504
      %v5531 = vadd.f32 %v5495, %v5504
      %v5532 = vadd.f32 %v5496, %v5504
      %v5533 = vadd.f32 %v5497, %v5504
      %v5534 = vadd.f32 %v5498, %v5504
      %v5535 = vadd.f32 %v5499, %v5504
      %v5536 = vadd.f32 %v5500, %v5504
      %v5537 = vadd.f32 %v5501, %v5504
      %s5538 = scalar_lea.vmem %s289, 768
      %5539 = vst.msk [vmem:[%s5538] sm:$0xff] %vm547, %v5506
      %5540 = vst.msk [vmem:[%s5538 + $0x8] sm:$0xff] %vm547, %v5507
      %5541 = vst.msk [vmem:[%s5538 + $0x10] sm:$0xff] %vm547, %v5508
      %5542 = vst.msk [vmem:[%s5538 + $0x18] sm:$0xff] %vm547, %v5509
      %5543 = vst.msk [vmem:[%s5538 + $0x20] sm:$0xff] %vm547, %v5510
      %5544 = vst.msk [vmem:[%s5538 + $0x28] sm:$0xff] %vm547, %v5511
      %5545 = vst.msk [vmem:[%s5538 + $0x30] sm:$0xff] %vm547, %v5512
      %5546 = vst.msk [vmem:[%s5538 + $0x38] sm:$0xff] %vm547, %v5513
      %5547 = vst.msk [vmem:[%s5538 + $0x40] sm:$0xff] %vm547, %v5514
      %5548 = vst.msk [vmem:[%s5538 + $0x48] sm:$0xff] %vm547, %v5515
      %5549 = vst.msk [vmem:[%s5538 + $0x50] sm:$0xff] %vm547, %v5516
      %5550 = vst.msk [vmem:[%s5538 + $0x58] sm:$0xff] %vm547, %v5517
      %5551 = vst.msk [vmem:[%s5538 + $0x60] sm:$0xff] %vm547, %v5518
      %5552 = vst.msk [vmem:[%s5538 + $0x68] sm:$0xff] %vm547, %v5519
      %5553 = vst.msk [vmem:[%s5538 + $0x70] sm:$0xff] %vm547, %v5520
      %5554 = vst.msk [vmem:[%s5538 + $0x78] sm:$0xff] %vm547, %v5521
      %5555 = vst.msk [vmem:[%s5538 + $0x80] sm:$0xff] %vm547, %v5522
      %5556 = vst.msk [vmem:[%s5538 + $0x88] sm:$0xff] %vm547, %v5523
      %5557 = vst.msk [vmem:[%s5538 + $0x90] sm:$0xff] %vm547, %v5524
      %5558 = vst.msk [vmem:[%s5538 + $0x98] sm:$0xff] %vm547, %v5525
      %5559 = vst.msk [vmem:[%s5538 + $0xa0] sm:$0xff] %vm547, %v5526
      %5560 = vst.msk [vmem:[%s5538 + $0xa8] sm:$0xff] %vm547, %v5527
      %5561 = vst.msk [vmem:[%s5538 + $0xb0] sm:$0xff] %vm547, %v5528
      %5562 = vst.msk [vmem:[%s5538 + $0xb8] sm:$0xff] %vm547, %v5529
      %5563 = vst.msk [vmem:[%s5538 + $0xc0] sm:$0xff] %vm547, %v5530
      %5564 = vst.msk [vmem:[%s5538 + $0xc8] sm:$0xff] %vm547, %v5531
      %5565 = vst.msk [vmem:[%s5538 + $0xd0] sm:$0xff] %vm547, %v5532
      %5566 = vst.msk [vmem:[%s5538 + $0xd8] sm:$0xff] %vm547, %v5533
      %5567 = vst.msk [vmem:[%s5538 + $0xe0] sm:$0xff] %vm547, %v5534
      %5568 = vst.msk [vmem:[%s5538 + $0xe8] sm:$0xff] %vm547, %v5535
      %5569 = vst.msk [vmem:[%s5538 + $0xf0] sm:$0xff] %vm547, %v5536
      %5570 = vst.msk [vmem:[%s5538 + $0xf8] sm:$0xff] %vm547, %v5537
      %v5571 = vsel %vm547, %v5506, 0.0
      %v5572 = vsel %vm547, %v5507, 0.0
      %v5573 = vadd.f32 %v5571, %v5572
      %v5574 = vsel %vm547, %v5508, 0.0
      %v5575 = vadd.f32 %v5573, %v5574
      %v5576 = vsel %vm547, %v5509, 0.0
      %v5577 = vadd.f32 %v5575, %v5576
      %v5578 = vsel %vm547, %v5510, 0.0
      %v5579 = vadd.f32 %v5577, %v5578
      %v5580 = vsel %vm547, %v5511, 0.0
      %v5581 = vadd.f32 %v5579, %v5580
      %v5582 = vsel %vm547, %v5512, 0.0
      %v5583 = vadd.f32 %v5581, %v5582
      %v5584 = vsel %vm547, %v5513, 0.0
      %v5585 = vadd.f32 %v5583, %v5584
      %v5586 = vsel %vm547, %v5514, 0.0
      %v5587 = vadd.f32 %v5585, %v5586
      %v5588 = vsel %vm547, %v5515, 0.0
      %v5589 = vadd.f32 %v5587, %v5588
      %v5590 = vsel %vm547, %v5516, 0.0
      %v5591 = vadd.f32 %v5589, %v5590
      %v5592 = vsel %vm547, %v5517, 0.0
      %v5593 = vadd.f32 %v5591, %v5592
      %v5594 = vsel %vm547, %v5518, 0.0
      %v5595 = vadd.f32 %v5593, %v5594
      %v5596 = vsel %vm547, %v5519, 0.0
      %v5597 = vadd.f32 %v5595, %v5596
      %v5598 = vsel %vm547, %v5520, 0.0
      %v5599 = vadd.f32 %v5597, %v5598
      %v5600 = vsel %vm547, %v5521, 0.0
      %v5601 = vadd.f32 %v5599, %v5600
      %v5602 = vsel %vm547, %v5522, 0.0
      %v5603 = vadd.f32 %v5601, %v5602
      %v5604 = vsel %vm547, %v5523, 0.0
      %v5605 = vadd.f32 %v5603, %v5604
      %v5606 = vsel %vm547, %v5524, 0.0
      %v5607 = vadd.f32 %v5605, %v5606
      %v5608 = vsel %vm547, %v5525, 0.0
      %v5609 = vadd.f32 %v5607, %v5608
      %v5610 = vsel %vm547, %v5526, 0.0
      %v5611 = vadd.f32 %v5609, %v5610
      %v5612 = vsel %vm547, %v5527, 0.0
      %v5613 = vadd.f32 %v5611, %v5612
      %v5614 = vsel %vm547, %v5528, 0.0
      %v5615 = vadd.f32 %v5613, %v5614
      %v5616 = vsel %vm547, %v5529, 0.0
      %v5617 = vadd.f32 %v5615, %v5616
      %v5618 = vsel %vm547, %v5530, 0.0
      %v5619 = vadd.f32 %v5617, %v5618
      %v5620 = vsel %vm547, %v5531, 0.0
      %v5621 = vadd.f32 %v5619, %v5620
      %v5622 = vsel %vm547, %v5532, 0.0
      %v5623 = vadd.f32 %v5621, %v5622
      %v5624 = vsel %vm547, %v5533, 0.0
      %v5625 = vadd.f32 %v5623, %v5624
      %v5626 = vsel %vm547, %v5534, 0.0
      %v5627 = vadd.f32 %v5625, %v5626
      %v5628 = vsel %vm547, %v5535, 0.0
      %v5629 = vadd.f32 %v5627, %v5628
      %v5630 = vsel %vm547, %v5536, 0.0
      %v5631 = vadd.f32 %v5629, %v5630
      %v5632 = vsel %vm547, %v5537, 0.0
      %v5633 = vadd.f32 %v5631, %v5632
      %v5634 = vrot.slane %v5633, 4
      %v5635 = vadd.f32 %v5633, %v5634
      %v5636 = vrot.slane %v5635, 2
      %v5637 = vadd.f32 %v5635, %v5636
      %v5638 = vrot.slane %v5637, 1
      %v5639 = vadd.f32 %v5637, %v5638
      %v5640 = vadd.f32 %v4363, %v5639
      %v5641 = vmul.f32 %v5506, %v5506
      %v5642 = vmul.f32 %v5507, %v5507
      %v5643 = vmul.f32 %v5508, %v5508
      %v5644 = vmul.f32 %v5509, %v5509
      %v5645 = vmul.f32 %v5510, %v5510
      %v5646 = vmul.f32 %v5511, %v5511
      %v5647 = vmul.f32 %v5512, %v5512
      %v5648 = vmul.f32 %v5513, %v5513
      %v5649 = vmul.f32 %v5514, %v5514
      %v5650 = vmul.f32 %v5515, %v5515
      %v5651 = vmul.f32 %v5516, %v5516
      %v5652 = vmul.f32 %v5517, %v5517
      %v5653 = vmul.f32 %v5518, %v5518
      %v5654 = vmul.f32 %v5519, %v5519
      %v5655 = vmul.f32 %v5520, %v5520
      %v5656 = vmul.f32 %v5521, %v5521
      %v5657 = vmul.f32 %v5522, %v5522
      %v5658 = vmul.f32 %v5523, %v5523
      %v5659 = vmul.f32 %v5524, %v5524
      %v5660 = vmul.f32 %v5525, %v5525
      %v5661 = vmul.f32 %v5526, %v5526
      %v5662 = vmul.f32 %v5527, %v5527
      %v5663 = vmul.f32 %v5528, %v5528
      %v5664 = vmul.f32 %v5529, %v5529
      %v5665 = vmul.f32 %v5530, %v5530
      %v5666 = vmul.f32 %v5531, %v5531
      %v5667 = vmul.f32 %v5532, %v5532
      %v5668 = vmul.f32 %v5533, %v5533
      %v5669 = vmul.f32 %v5534, %v5534
      %v5670 = vmul.f32 %v5535, %v5535
      %v5671 = vmul.f32 %v5536, %v5536
      %v5672 = vmul.f32 %v5537, %v5537
      %v5673 = vsel %vm547, %v5641, 0.0
      %v5674 = vsel %vm547, %v5642, 0.0
      %v5675 = vadd.f32 %v5673, %v5674
      %v5676 = vsel %vm547, %v5643, 0.0
      %v5677 = vadd.f32 %v5675, %v5676
      %v5678 = vsel %vm547, %v5644, 0.0
      %v5679 = vadd.f32 %v5677, %v5678
      %v5680 = vsel %vm547, %v5645, 0.0
      %v5681 = vadd.f32 %v5679, %v5680
      %v5682 = vsel %vm547, %v5646, 0.0
      %v5683 = vadd.f32 %v5681, %v5682
      %v5684 = vsel %vm547, %v5647, 0.0
      %v5685 = vadd.f32 %v5683, %v5684
      %v5686 = vsel %vm547, %v5648, 0.0
      %v5687 = vadd.f32 %v5685, %v5686
      %v5688 = vsel %vm547, %v5649, 0.0
      %v5689 = vadd.f32 %v5687, %v5688
      %v5690 = vsel %vm547, %v5650, 0.0
      %v5691 = vadd.f32 %v5689, %v5690
      %v5692 = vsel %vm547, %v5651, 0.0
      %v5693 = vadd.f32 %v5691, %v5692
      %v5694 = vsel %vm547, %v5652, 0.0
      %v5695 = vadd.f32 %v5693, %v5694
      %v5696 = vsel %vm547, %v5653, 0.0
      %v5697 = vadd.f32 %v5695, %v5696
      %v5698 = vsel %vm547, %v5654, 0.0
      %v5699 = vadd.f32 %v5697, %v5698
      %v5700 = vsel %vm547, %v5655, 0.0
      %v5701 = vadd.f32 %v5699, %v5700
      %v5702 = vsel %vm547, %v5656, 0.0
      %v5703 = vadd.f32 %v5701, %v5702
      %v5704 = vsel %vm547, %v5657, 0.0
      %v5705 = vadd.f32 %v5703, %v5704
      %v5706 = vsel %vm547, %v5658, 0.0
      %v5707 = vadd.f32 %v5705, %v5706
      %v5708 = vsel %vm547, %v5659, 0.0
      %v5709 = vadd.f32 %v5707, %v5708
      %v5710 = vsel %vm547, %v5660, 0.0
      %v5711 = vadd.f32 %v5709, %v5710
      %v5712 = vsel %vm547, %v5661, 0.0
      %v5713 = vadd.f32 %v5711, %v5712
      %v5714 = vsel %vm547, %v5662, 0.0
      %v5715 = vadd.f32 %v5713, %v5714
      %v5716 = vsel %vm547, %v5663, 0.0
      %v5717 = vadd.f32 %v5715, %v5716
      %v5718 = vsel %vm547, %v5664, 0.0
      %v5719 = vadd.f32 %v5717, %v5718
      %v5720 = vsel %vm547, %v5665, 0.0
      %v5721 = vadd.f32 %v5719, %v5720
      %v5722 = vsel %vm547, %v5666, 0.0
      %v5723 = vadd.f32 %v5721, %v5722
      %v5724 = vsel %vm547, %v5667, 0.0
      %v5725 = vadd.f32 %v5723, %v5724
      %v5726 = vsel %vm547, %v5668, 0.0
      %v5727 = vadd.f32 %v5725, %v5726
      %v5728 = vsel %vm547, %v5669, 0.0
      %v5729 = vadd.f32 %v5727, %v5728
      %v5730 = vsel %vm547, %v5670, 0.0
      %v5731 = vadd.f32 %v5729, %v5730
      %v5732 = vsel %vm547, %v5671, 0.0
      %v5733 = vadd.f32 %v5731, %v5732
      %v5734 = vsel %vm547, %v5672, 0.0
      %v5735 = vadd.f32 %v5733, %v5734
      %v5736 = vrot.slane %v5735, 4
      %v5737 = vadd.f32 %v5735, %v5736
      %v5738 = vrot.slane %v5737, 2
      %v5739 = vadd.f32 %v5737, %v5738
      %v5740 = vrot.slane %v5739, 1
      %v5741 = vadd.f32 %v5739, %v5740
      %v5742 = vadd.f32 %v4465, %v5741
      %vm5743 = vcmask 57344
      %5744 = vst.msk [vmem:[%s292] sm:$0x1] %vm5743, %v5640
      %5745 = vst.msk [vmem:[%s295] sm:$0x1] %vm5743, %v5742
      %p5746 = scmp.lt.s32.totalorder %s19, 1
      %s5747 = scalar_select %p5746, %s19, 1
      %s5748 = smul.addr %s5747, 128
      %s5749 = smul.addr %s5748, 8
      %s5750 = scalar_lea.vmem %s5, %s5749
      %p5751 = scmp.lt.s32.totalorder %s19, 1
      %s5752 = scalar_select %p5751, %s19, 1
      %s5753 = scalar_lea.vmem %s6, %s5752
      %p5754 = scmp.lt.s32.totalorder %s19, 1
      %s5755 = scalar_select %p5754, %s19, 1
      %s5756 = scalar_lea.vmem %s7, %s5755
      // Predicated region
      $region41: #{up_forward.2} parent=39 // pred_check
        %p5757 = pneg %p147
      $region42: #{up_forward.2} parent=39 // pred_check_branch
        %5759 = sbr.rel (%p5757) target = $region44
      $region43: #{up_forward.2} parent=39 // pred_region
        _
      $region44: #{up_forward.2} parent=39 // pred_fallthru
        _
      // Predicated region
      $region45: #{up_forward.2} parent=39 // pred_check
        %p5760 = pneg %p173
      $region46: #{up_forward.2} parent=39 // pred_check_branch
        %5762 = sbr.rel (%p5760) target = $region48
      $region47: #{up_forward.2} parent=39 // pred_region
        _
      $region48: #{up_forward.2} parent=39 // pred_fallthru
        _
      // Predicated region
      $region49: #{up_forward.2} parent=39 // pred_check
        %p5763 = pneg %p199
      $region50: #{up_forward.2} parent=39 // pred_check_branch
        %5765 = sbr.rel (%p5763) target = $region52
      $region51: #{up_forward.2} parent=39 // pred_region
        _
      $region52: #{up_forward.2} parent=39 // pred_fallthru
        _
    $region40: #{up_forward.2} parent=5 // pred_fallthru
      _
    %p5766 = scmp.le.s32.totalorder 2, %s14
    // Predicated region
    $region53: #{up_forward.2} parent=5 // pred_check
      %p5767 = pneg %p5766
    $region54: #{up_forward.2} parent=5 // pred_check_branch
      %5769 = sbr.rel (%p5767) target = $region56
    $region55: #{up_forward.2} parent=5 // pred_region
      %s5770 = ssub.s32 %s14, 2
      // Predicated region
      $region57: #{up_forward.2} parent=55 // pred_check
        %p5771 = pneg %p153
      $region58: #{up_forward.2} parent=55 // pred_check_branch
        %5773 = sbr.rel (%p5771) target = $region60
      $region59: #{up_forward.2} parent=55 // pred_region
        %p5774 = scmp.lt.s32.totalorder %s20, 1
        %s5775 = scalar_select %p5774, %s20, 1
        %s5776 = smul.addr %s5775, 128
        %s5777 = smul.addr %s5776, 8
        %s5778 = scalar_lea.vmem %s5, %s5777
      $region60: #{up_forward.2} parent=55 // pred_fallthru
        _
      // Predicated region
      $region61: #{up_forward.2} parent=55 // pred_check
        %p5779 = pneg %p179
      $region62: #{up_forward.2} parent=55 // pred_check_branch
        %5781 = sbr.rel (%p5779) target = $region64
      $region63: #{up_forward.2} parent=55 // pred_region
        %p5782 = scmp.lt.s32.totalorder %s20, 1
        %s5783 = scalar_select %p5782, %s20, 1
        %s5784 = scalar_lea.vmem %s6, %s5783
      $region64: #{up_forward.2} parent=55 // pred_fallthru
        _
      // Predicated region
      $region65: #{up_forward.2} parent=55 // pred_check
        %p5785 = pneg %p205
      $region66: #{up_forward.2} parent=55 // pred_check_branch
        %5787 = sbr.rel (%p5785) target = $region68
      $region67: #{up_forward.2} parent=55 // pred_region
        %p5788 = scmp.lt.s32.totalorder %s20, 1
        %s5789 = scalar_select %p5788, %s20, 1
        %s5790 = scalar_lea.vmem %s7, %s5789
      $region68: #{up_forward.2} parent=55 // pred_fallthru
        _
    $region56: #{up_forward.2} parent=5 // pred_fallthru
      _
  $region6: #{up_forward.2} parent=0 // loop_footer
    %s18 = sadd.s32 1, %s14
  $region7: #{up_forward.2} parent=0 // loop_footer_branch
    %13 = sbr.rel target = $region3
  $region8: #{up_forward.2} parent=0 // loop_exit
    _

</llo_original>
